<compile_context>
chip_gen: v6e
topology: v6e:2x2x1
jax: 0.10.0
libtpu: 0.0.40
codegen_flags: <defaults>
</compile_context>

<pallas_src>
import functools

import jax
import jax.numpy as jnp
from jax import lax
from jax.experimental import pallas as pl
from jax.experimental.pallas import tpu as pltpu

NEGATIVE_SLOPE = 0.01
_INV_SQRT2 = 0.7071067811865476


def _round_up(n, m):
    return ((n + m - 1) // m) * m


def _erf_approx(x):
    # Abramowitz & Stegun 7.1.26, |err| <= 1.5e-7.  Uses only exp/mul/add/where
    # so it is guaranteed to lower in Mosaic.
    ax = jnp.abs(x)
    t = 1.0 / (1.0 + 0.3275911 * ax)
    poly = t * (0.254829592 + t * (-0.284496736 + t * (1.421413741
               + t * (-1.453152027 + t * 1.061405429))))
    e = 1.0 - poly * jnp.exp(-ax * ax)
    return jnp.where(x >= 0.0, e, -e)


def _gelu_exact_kernel(x):
    # GELU(x) = 0.5 * x * (1 + erf(x / sqrt(2)))  (exact erf form, as CUDA ref)
    return 0.5 * x * (1.0 + _erf_approx(x * _INV_SQRT2))


def fused_kernel(x_ref, w_ref, b_ref, o_ref, acc_ref):
    # x_ref : (tb, tk) f32   batch-major tile of x (cast to bf16 in-kernel)
    # w_ref : (N, tk)  bf16  weight K-chunk (streams along the K grid axis)
    # b_ref : (N, 1)   f32   bias (resident, constant index map)
    # o_ref : (1, tb)  f32   lane-dense per-batch-element result
    # acc_ref:(N, tb)  f32   VMEM accumulator, persists across the K axis
    k = pl.program_id(1)
    nk = pl.num_programs(1)
    N, tb = acc_ref.shape

    @pl.when(k == 0)
    def _():
        # Fold the bias into the accumulator init (broadcast over lanes/batch).
        acc_ref[...] = jnp.broadcast_to(b_ref[...], (N, tb))

    # Partial product for this K chunk: (N, tk) . (tb, tk)^T -> (N, tb).
    # Contracting the last dim of BOTH operands lets Mosaic handle the NT
    # layout in-kernel -- no wrapper transpose of x.
    acc_ref[...] += lax.dot_general(
        w_ref[...],
        x_ref[...].astype(jnp.bfloat16),
        dimension_numbers=(((1,), (1,)), ((), ())),
        preferred_element_type=jnp.float32,
    )

    @pl.when(k == nk - 1)
    def _():
        # Per-batch-element (per-lane) numerically stable logsumexp over the
        # N features sitting along sublanes.  128-row slabs keep the live set
        # to <=32 vregs even at tb=256.
        slab = 128 if N % 128 == 0 else N
        nsl = N // slab

        m = jnp.max(acc_ref[pl.ds(0, slab), :], axis=0, keepdims=True)
        for s in range(1, nsl):
            z = acc_ref[pl.ds(s * slab, slab), :]
            m = jnp.maximum(m, jnp.max(z, axis=0, keepdims=True))

        ssum = jnp.zeros((1, tb), dtype=jnp.float32)
        for s in range(nsl):
            z = acc_ref[pl.ds(s * slab, slab), :]
            ssum = ssum + jnp.sum(jnp.exp(z - m), axis=0, keepdims=True)

        lse = m + jnp.log(ssum)

        # Two LeakyReLU(0.01) passes folded into one with slope^2 (CUDA ref).
        ns2 = jnp.float32(NEGATIVE_SLOPE * NEGATIVE_SLOPE)
        y = jnp.where(lse >= 0.0, lse, ns2 * lse)

        # Two exact-form GELU passes.
        y = _gelu_exact_kernel(y)
        y = _gelu_exact_kernel(y)

        o_ref[...] = y.astype(o_ref.dtype)


@functools.partial(jax.jit, static_argnames=("tb", "tk"))
def fused_linear_logsumexp(x, w, b, *, tb=256, tk=256):
    """x: (B, K) f32; w: (N, K) f32/bf16 (nn.Linear layout); b: (N,) f32.

    Returns (B, 1) f32 == GELU(GELU(LeakyReLU(logsumexp(x @ w.T + b, 1), 0.01**2))).
    """
    B, K = x.shape
    N, Kw = w.shape
    assert K == Kw and b.shape == (N,)
    assert N % 8 == 0

    # Tile selection: tb=256 fills the 256-wide MXU result on v6e/v7x and makes
    # the (1, tb) output store a 2-vreg unmasked lane-dense store; don't
    # over-pad tiny batches.  tk splits K so the weight stream overlaps compute.
    tb = max(128, min(tb, _round_up(B, 128)))
    if K % tk != 0:
        tk = K  # fall back to a single K step for awkward K

    nb = pl.cdiv(B, tb)
    b_pad = nb * tb
    nk = K // tk

    if b_pad != B:
        # Only for ragged batches; padded columns produce finite per-lane
        # garbage that is sliced off below.
        x = jnp.pad(x, ((0, b_pad - B), (0, 0)))

    w_bf = w.astype(jnp.bfloat16)          # no-op when parameters are pre-cast
    b2d = b.reshape(N, 1).astype(jnp.float32)

    cost = pl.CostEstimate(
        flops=2 * b_pad * K * N,
        transcendentals=b_pad * N + 5 * b_pad,          # exp + log + 2x erf
        bytes_accessed=b_pad * K * 4 + nb * N * K * 2 + N * 4 + b_pad * 4,
    )

    out = pl.pallas_call(
        fused_kernel,
        out_shape=jax.ShapeDtypeStruct((1, b_pad), jnp.float32),
        grid_spec=pltpu.PrefetchScalarGridSpec(
            num_scalar_prefetch=0,
            grid=(nb, nk),                                  # K innermost
            in_specs=[
                pl.BlockSpec((tb, tk), lambda i, k: (i, k)),   # x tile (f32)
                pl.BlockSpec((N, tk), lambda i, k: (0, k)),    # weight chunk
                pl.BlockSpec((N, 1), lambda i, k: (0, 0)),     # bias (resident)
            ],
            out_specs=pl.BlockSpec((1, tb), lambda i, k: (0, i)),  # lane-dense
            scratch_shapes=[pltpu.VMEM((N, tb), jnp.float32)],
        ),
        compiler_params=pltpu.CompilerParams(
            dimension_semantics=("parallel", "arbitrary"),
            vmem_limit_bytes=32 * 1024 * 1024,
        ),
        cost_estimate=cost,
    )(x, w_bf, b2d)

    return out[0, :B].reshape(B, 1)


def reference(x, w, b):
    z = jnp.dot(x, w.T, precision=lax.Precision.HIGHEST) + b[None, :]
    m = jnp.max(z, axis=1, keepdims=True)
    lse = m + jnp.log(jnp.sum(jnp.exp(z - m), axis=1, keepdims=True))
    ns2 = NEGATIVE_SLOPE * NEGATIVE_SLOPE
    y = jnp.where(lse >= 0.0, lse, ns2 * lse)
    g = lambda v: 0.5 * v * (1.0 + lax.erf(v * _INV_SQRT2))
    return g(g(y))


if __name__ == "__main__":
    # Module constants (in_features=1024, out_features=512); B=256 gives one
    # full 256-lane batch tile and a 4-step pipelined K axis.
    B, in_features, out_features = 256, 1024, 512

    key = jax.random.PRNGKey(0)
    kx, kw, kb = jax.random.split(key, 3)

    x = jax.random.normal(kx, (B, in_features), dtype=jnp.float32)

    # Deterministic synthetic nn.Linear-style parameters.
    bound = 1.0 / (in_features ** 0.5)
    w = jax.random.uniform(kw, (out_features, in_features),
                           minval=-bound, maxval=bound, dtype=jnp.float32)
    b = jax.random.uniform(kb, (out_features,),
                           minval=-bound, maxval=bound, dtype=jnp.float32)

    # One-time parameter prep: weights live in bf16 for the MXU fast path.
    w_bf = w.astype(jnp.bfloat16)

    out = jax.block_until_ready(fused_linear_logsumexp(x, w_bf, b))

    # Reference on bf16-rounded operands (the MXU consumes bf16 operands with
    # f32 accumulation), so tolerances stay tight.
    x_r = x.astype(jnp.bfloat16).astype(jnp.float32)
    w_r = w_bf.astype(jnp.float32)
    ref = jax.block_until_ready(reference(x_r, w_r, b))

    assert out.shape == (B, 1)
    max_err = float(jnp.max(jnp.abs(out - ref)))
    assert jnp.allclose(out, ref, atol=5e-3, rtol=5e-3), ("max_abs_err", max_err)

    print("KERNEL_OK")
</pallas_src>

<mosaic_0001>
module attributes {stable_mosaic.version = 11 : i64} {
  func.func @fused_kernel(%arg0: i32, %arg1: i32, %arg2: memref<256x256xf32, #tpu.memory_space<vmem>>, %arg3: memref<512x256xbf16, #tpu.memory_space<vmem>>, %arg4: memref<512x1xf32, #tpu.memory_space<vmem>>, %arg5: memref<1x256xf32, #tpu.memory_space<vmem>>, %arg6: memref<512x256xf32, #tpu.memory_space<vmem>>) attributes {dimension_semantics = [#tpu.dimension_semantics<parallel>, #tpu.dimension_semantics<arbitrary>], iteration_bounds = array<i64: 1, 4>, scalar_prefetch = 0 : i64, scratch_operands = 1 : i64, tpu.core_type = #tpu.core_type<tc>, window_params = [{transform_indices = @transform_0, window_bounds = array<i64: 256, 256>}, {transform_indices = @transform_1, window_bounds = array<i64: 512, 256>}, {pipeline_mode = #tpu.pipeline_mode<synchronous>, transform_indices = @transform_2, window_bounds = array<i64: 512, 1>}, {transform_indices = @transform_3, window_bounds = array<i64: 1, 256>}]} {
    %c0_i32 = arith.constant 0 : i32
    %0 = arith.cmpi eq, %arg1, %c0_i32 : i32
    %1 = arith.extui %0 : i1 to i32
    %c0_i32_0 = arith.constant 0 : i32
    %2 = arith.cmpi ne, %1, %c0_i32_0 : i32
    scf.if %2 {
      %c0_9 = arith.constant 0 : index
      %c0_10 = arith.constant 0 : index
      %13 = vector.load %arg4[%c0_9, %c0_10] : memref<512x1xf32, #tpu.memory_space<vmem>>, vector<512x1xf32>
      %14 = vector.shape_cast %13 : vector<512x1xf32> to vector<512x1xf32>
      %15 = vector.broadcast %14 : vector<512x1xf32> to vector<512x256xf32>
      %c0_11 = arith.constant 0 : index
      %c0_12 = arith.constant 0 : index
      %16 = vector.load %arg6[%c0_11, %c0_12] : memref<512x256xf32, #tpu.memory_space<vmem>>, vector<512x256xf32>
      tpu.vector_store %arg6[%c0_11, %c0_12], %15 {strides = array<i32>} : memref<512x256xf32, #tpu.memory_space<vmem>>, vector<512x256xf32>,
    } else {
    }
    %c0 = arith.constant 0 : index
    %c0_1 = arith.constant 0 : index
    %3 = vector.load %arg6[%c0, %c0_1] : memref<512x256xf32, #tpu.memory_space<vmem>>, vector<512x256xf32>
    %c0_2 = arith.constant 0 : index
    %c0_3 = arith.constant 0 : index
    %4 = vector.load %arg3[%c0_2, %c0_3] : memref<512x256xbf16, #tpu.memory_space<vmem>>, vector<512x256xbf16>
    %c0_4 = arith.constant 0 : index
    %c0_5 = arith.constant 0 : index
    %5 = vector.load %arg2[%c0_4, %c0_5] : memref<256x256xf32, #tpu.memory_space<vmem>>, vector<256x256xf32>
    %6 = arith.truncf %5 : vector<256x256xf32> to vector<256x256xbf16>
    %cst = arith.constant dense<0.000000e+00> : vector<512x256xf32>
    %7 = tpu.matmul %4, %6, %cst {dimension_numbers = #tpu.dot_dimension_numbers<[1], [1], [0], [0], [0, 0, 1, 0], [], []>} : vector<512x256xbf16>, vector<256x256xbf16>, vector<512x256xf32> -> vector<512x256xf32>
    %8 = arith.addf %3, %7 : vector<512x256xf32>
    %c0_6 = arith.constant 0 : index
    %c0_7 = arith.constant 0 : index
    %9 = vector.load %arg6[%c0_6, %c0_7] : memref<512x256xf32, #tpu.memory_space<vmem>>, vector<512x256xf32>
    tpu.vector_store %arg6[%c0_6, %c0_7], %8 {strides = array<i32>} : memref<512x256xf32, #tpu.memory_space<vmem>>, vector<512x256xf32>,
    %c3_i32 = arith.constant 3 : i32
    %10 = arith.cmpi eq, %arg1, %c3_i32 : i32
    %11 = arith.extui %10 : i1 to i32
    %c0_i32_8 = arith.constant 0 : i32
    %12 = arith.cmpi ne, %11, %c0_i32_8 : i32
    scf.if %12 {
      %c0_9 = arith.constant 0 : index
      %c0_10 = arith.constant 0 : index
      %13 = vector.load %arg6[%c0_9, %c0_10] : memref<512x256xf32, #tpu.memory_space<vmem>>, vector<128x256xf32>
      %cst_11 = arith.constant dense<0xFF800000> : vector<256xf32>
      %14 = vector.multi_reduction <maximumf>, %13, %cst_11 [0] : vector<128x256xf32> to vector<256xf32>
      %15 = vector.shape_cast %14 : vector<256xf32> to vector<1x256xf32>
      %c128 = arith.constant 128 : index
      %c0_12 = arith.constant 0 : index
      %16 = vector.load %arg6[%c128, %c0_12] : memref<512x256xf32, #tpu.memory_space<vmem>>, vector<128x256xf32>
      %cst_13 = arith.constant dense<0xFF800000> : vector<256xf32>
      %17 = vector.multi_reduction <maximumf>, %16, %cst_13 [0] : vector<128x256xf32> to vector<256xf32>
      %18 = vector.shape_cast %17 : vector<256xf32> to vector<1x256xf32>
      %19 = arith.maximumf %15, %18 : vector<1x256xf32>
      %c256 = arith.constant 256 : index
      %c0_14 = arith.constant 0 : index
      %20 = vector.load %arg6[%c256, %c0_14] : memref<512x256xf32, #tpu.memory_space<vmem>>, vector<128x256xf32>
      %cst_15 = arith.constant dense<0xFF800000> : vector<256xf32>
      %21 = vector.multi_reduction <maximumf>, %20, %cst_15 [0] : vector<128x256xf32> to vector<256xf32>
      %22 = vector.shape_cast %21 : vector<256xf32> to vector<1x256xf32>
      %23 = arith.maximumf %19, %22 : vector<1x256xf32>
      %c384 = arith.constant 384 : index
      %c0_16 = arith.constant 0 : index
      %24 = vector.load %arg6[%c384, %c0_16] : memref<512x256xf32, #tpu.memory_space<vmem>>, vector<128x256xf32>
      %cst_17 = arith.constant dense<0xFF800000> : vector<256xf32>
      %25 = vector.multi_reduction <maximumf>, %24, %cst_17 [0] : vector<128x256xf32> to vector<256xf32>
      %26 = vector.shape_cast %25 : vector<256xf32> to vector<1x256xf32>
      %27 = arith.maximumf %23, %26 : vector<1x256xf32>
      %cst_18 = arith.constant 0.000000e+00 : f32
      %28 = vector.broadcast %cst_18 : f32 to vector<1x256xf32>
      %c0_19 = arith.constant 0 : index
      %c0_20 = arith.constant 0 : index
      %29 = vector.load %arg6[%c0_19, %c0_20] : memref<512x256xf32, #tpu.memory_space<vmem>>, vector<128x256xf32>
      %30 = vector.broadcast %27 : vector<1x256xf32> to vector<128x256xf32>
      %31 = arith.subf %29, %30 : vector<128x256xf32>
      %32 = math.exp %31 : vector<128x256xf32>
      %cst_21 = arith.constant dense<0.000000e+00> : vector<256xf32>
      %33 = vector.multi_reduction <add>, %32, %cst_21 [0] : vector<128x256xf32> to vector<256xf32>
      %34 = vector.shape_cast %33 : vector<256xf32> to vector<1x256xf32>
      %35 = arith.addf %28, %34 : vector<1x256xf32>
      %c128_22 = arith.constant 128 : index
      %c0_23 = arith.constant 0 : index
      %36 = vector.load %arg6[%c128_22, %c0_23] : memref<512x256xf32, #tpu.memory_space<vmem>>, vector<128x256xf32>
      %37 = vector.broadcast %27 : vector<1x256xf32> to vector<128x256xf32>
      %38 = arith.subf %36, %37 : vector<128x256xf32>
      %39 = math.exp %38 : vector<128x256xf32>
      %cst_24 = arith.constant dense<0.000000e+00> : vector<256xf32>
      %40 = vector.multi_reduction <add>, %39, %cst_24 [0] : vector<128x256xf32> to vector<256xf32>
      %41 = vector.shape_cast %40 : vector<256xf32> to vector<1x256xf32>
      %42 = arith.addf %35, %41 : vector<1x256xf32>
      %c256_25 = arith.constant 256 : index
      %c0_26 = arith.constant 0 : index
      %43 = vector.load %arg6[%c256_25, %c0_26] : memref<512x256xf32, #tpu.memory_space<vmem>>, vector<128x256xf32>
      %44 = vector.broadcast %27 : vector<1x256xf32> to vector<128x256xf32>
      %45 = arith.subf %43, %44 : vector<128x256xf32>
      %46 = math.exp %45 : vector<128x256xf32>
      %cst_27 = arith.constant dense<0.000000e+00> : vector<256xf32>
      %47 = vector.multi_reduction <add>, %46, %cst_27 [0] : vector<128x256xf32> to vector<256xf32>
      %48 = vector.shape_cast %47 : vector<256xf32> to vector<1x256xf32>
      %49 = arith.addf %42, %48 : vector<1x256xf32>
      %c384_28 = arith.constant 384 : index
      %c0_29 = arith.constant 0 : index
      %50 = vector.load %arg6[%c384_28, %c0_29] : memref<512x256xf32, #tpu.memory_space<vmem>>, vector<128x256xf32>
      %51 = vector.broadcast %27 : vector<1x256xf32> to vector<128x256xf32>
      %52 = arith.subf %50, %51 : vector<128x256xf32>
      %53 = math.exp %52 : vector<128x256xf32>
      %cst_30 = arith.constant dense<0.000000e+00> : vector<256xf32>
      %54 = vector.multi_reduction <add>, %53, %cst_30 [0] : vector<128x256xf32> to vector<256xf32>
      %55 = vector.shape_cast %54 : vector<256xf32> to vector<1x256xf32>
      %56 = arith.addf %49, %55 : vector<1x256xf32>
      %57 = math.log %56 : vector<1x256xf32>
      %58 = arith.addf %27, %57 : vector<1x256xf32>
      %cst_31 = arith.constant 0.000000e+00 : f32
      %59 = vector.broadcast %cst_31 : f32 to vector<1x256xf32>
      %60 = arith.cmpf oge, %58, %59 : vector<1x256xf32>
      %cst_32 = arith.constant 9.99999974E-5 : f32
      %61 = vector.broadcast %cst_32 : f32 to vector<1x256xf32>
      %62 = arith.mulf %61, %58 : vector<1x256xf32>
      %63 = arith.select %60, %58, %62 : vector<1x256xi1>, vector<1x256xf32>
      %cst_33 = arith.constant 5.000000e-01 : f32
      %64 = vector.broadcast %cst_33 : f32 to vector<1x256xf32>
      %65 = arith.mulf %64, %63 : vector<1x256xf32>
      %cst_34 = arith.constant 0.707106769 : f32
      %66 = vector.broadcast %cst_34 : f32 to vector<1x256xf32>
      %67 = arith.mulf %63, %66 : vector<1x256xf32>
      %68 = math.absf %67 : vector<1x256xf32>
      %cst_35 = arith.constant 0.327591091 : f32
      %69 = vector.broadcast %cst_35 : f32 to vector<1x256xf32>
      %70 = arith.mulf %69, %68 : vector<1x256xf32>
      %cst_36 = arith.constant 1.000000e+00 : f32
      %71 = vector.broadcast %cst_36 : f32 to vector<1x256xf32>
      %72 = arith.addf %71, %70 : vector<1x256xf32>
      %cst_37 = arith.constant 1.000000e+00 : f32
      %73 = vector.broadcast %cst_37 : f32 to vector<1x256xf32>
      %74 = arith.divf %73, %72 : vector<1x256xf32>
      %cst_38 = arith.constant 1.06140542 : f32
      %75 = vector.broadcast %cst_38 : f32 to vector<1x256xf32>
      %76 = arith.mulf %74, %75 : vector<1x256xf32>
      %cst_39 = arith.constant -1.45315206 : f32
      %77 = vector.broadcast %cst_39 : f32 to vector<1x256xf32>
      %78 = arith.addf %77, %76 : vector<1x256xf32>
      %79 = arith.mulf %74, %78 : vector<1x256xf32>
      %cst_40 = arith.constant 1.42141378 : f32
      %80 = vector.broadcast %cst_40 : f32 to vector<1x256xf32>
      %81 = arith.addf %80, %79 : vector<1x256xf32>
      %82 = arith.mulf %74, %81 : vector<1x256xf32>
      %cst_41 = arith.constant -0.284496725 : f32
      %83 = vector.broadcast %cst_41 : f32 to vector<1x256xf32>
      %84 = arith.addf %83, %82 : vector<1x256xf32>
      %85 = arith.mulf %74, %84 : vector<1x256xf32>
      %cst_42 = arith.constant 0.254829586 : f32
      %86 = vector.broadcast %cst_42 : f32 to vector<1x256xf32>
      %87 = arith.addf %86, %85 : vector<1x256xf32>
      %88 = arith.mulf %74, %87 : vector<1x256xf32>
      %cst_43 = arith.constant 0.000000e+00 : f32
      %89 = vector.broadcast %cst_43 : f32 to vector<1x256xf32>
      %90 = arith.subf %89, %68 : vector<1x256xf32>
      %91 = arith.mulf %90, %68 : vector<1x256xf32>
      %92 = math.exp %91 : vector<1x256xf32>
      %93 = arith.mulf %88, %92 : vector<1x256xf32>
      %cst_44 = arith.constant 1.000000e+00 : f32
      %94 = vector.broadcast %cst_44 : f32 to vector<1x256xf32>
      %95 = arith.subf %94, %93 : vector<1x256xf32>
      %cst_45 = arith.constant 0.000000e+00 : f32
      %96 = vector.broadcast %cst_45 : f32 to vector<1x256xf32>
      %97 = arith.cmpf oge, %67, %96 : vector<1x256xf32>
      %cst_46 = arith.constant 0.000000e+00 : f32
      %98 = vector.broadcast %cst_46 : f32 to vector<1x256xf32>
      %99 = arith.subf %98, %95 : vector<1x256xf32>
      %100 = arith.select %97, %95, %99 : vector<1x256xi1>, vector<1x256xf32>
      %cst_47 = arith.constant 1.000000e+00 : f32
      %101 = vector.broadcast %cst_47 : f32 to vector<1x256xf32>
      %102 = arith.addf %101, %100 : vector<1x256xf32>
      %103 = arith.mulf %65, %102 : vector<1x256xf32>
      %cst_48 = arith.constant 5.000000e-01 : f32
      %104 = vector.broadcast %cst_48 : f32 to vector<1x256xf32>
      %105 = arith.mulf %104, %103 : vector<1x256xf32>
      %cst_49 = arith.constant 0.707106769 : f32
      %106 = vector.broadcast %cst_49 : f32 to vector<1x256xf32>
      %107 = arith.mulf %103, %106 : vector<1x256xf32>
      %108 = math.absf %107 : vector<1x256xf32>
      %cst_50 = arith.constant 0.327591091 : f32
      %109 = vector.broadcast %cst_50 : f32 to vector<1x256xf32>
      %110 = arith.mulf %109, %108 : vector<1x256xf32>
      %cst_51 = arith.constant 1.000000e+00 : f32
      %111 = vector.broadcast %cst_51 : f32 to vector<1x256xf32>
      %112 = arith.addf %111, %110 : vector<1x256xf32>
      %cst_52 = arith.constant 1.000000e+00 : f32
      %113 = vector.broadcast %cst_52 : f32 to vector<1x256xf32>
      %114 = arith.divf %113, %112 : vector<1x256xf32>
      %cst_53 = arith.constant 1.06140542 : f32
      %115 = vector.broadcast %cst_53 : f32 to vector<1x256xf32>
      %116 = arith.mulf %114, %115 : vector<1x256xf32>
      %cst_54 = arith.constant -1.45315206 : f32
      %117 = vector.broadcast %cst_54 : f32 to vector<1x256xf32>
      %118 = arith.addf %117, %116 : vector<1x256xf32>
      %119 = arith.mulf %114, %118 : vector<1x256xf32>
      %cst_55 = arith.constant 1.42141378 : f32
      %120 = vector.broadcast %cst_55 : f32 to vector<1x256xf32>
      %121 = arith.addf %120, %119 : vector<1x256xf32>
      %122 = arith.mulf %114, %121 : vector<1x256xf32>
      %cst_56 = arith.constant -0.284496725 : f32
      %123 = vector.broadcast %cst_56 : f32 to vector<1x256xf32>
      %124 = arith.addf %123, %122 : vector<1x256xf32>
      %125 = arith.mulf %114, %124 : vector<1x256xf32>
      %cst_57 = arith.constant 0.254829586 : f32
      %126 = vector.broadcast %cst_57 : f32 to vector<1x256xf32>
      %127 = arith.addf %126, %125 : vector<1x256xf32>
      %128 = arith.mulf %114, %127 : vector<1x256xf32>
      %cst_58 = arith.constant 0.000000e+00 : f32
      %129 = vector.broadcast %cst_58 : f32 to vector<1x256xf32>
      %130 = arith.subf %129, %108 : vector<1x256xf32>
      %131 = arith.mulf %130, %108 : vector<1x256xf32>
      %132 = math.exp %131 : vector<1x256xf32>
      %133 = arith.mulf %128, %132 : vector<1x256xf32>
      %cst_59 = arith.constant 1.000000e+00 : f32
      %134 = vector.broadcast %cst_59 : f32 to vector<1x256xf32>
      %135 = arith.subf %134, %133 : vector<1x256xf32>
      %cst_60 = arith.constant 0.000000e+00 : f32
      %136 = vector.broadcast %cst_60 : f32 to vector<1x256xf32>
      %137 = arith.cmpf oge, %107, %136 : vector<1x256xf32>
      %cst_61 = arith.constant 0.000000e+00 : f32
      %138 = vector.broadcast %cst_61 : f32 to vector<1x256xf32>
      %139 = arith.subf %138, %135 : vector<1x256xf32>
      %140 = arith.select %137, %135, %139 : vector<1x256xi1>, vector<1x256xf32>
      %cst_62 = arith.constant 1.000000e+00 : f32
      %141 = vector.broadcast %cst_62 : f32 to vector<1x256xf32>
      %142 = arith.addf %141, %140 : vector<1x256xf32>
      %143 = arith.mulf %105, %142 : vector<1x256xf32>
      %c0_63 = arith.constant 0 : index
      %c0_64 = arith.constant 0 : index
      %144 = vector.load %arg5[%c0_63, %c0_64] : memref<1x256xf32, #tpu.memory_space<vmem>>, vector<1x256xf32>
      tpu.vector_store %arg5[%c0_63, %c0_64], %143 {strides = array<i32>} : memref<1x256xf32, #tpu.memory_space<vmem>>, vector<1x256xf32>,
    } else {
    }
    return
  }
  func.func @transform_0(%arg0: i32, %arg1: i32) -> (i32, i32) {
    %c0_i32 = arith.constant 0 : i32
    return %arg0, %arg1 : i32, i32
  }
  func.func @transform_1(%arg0: i32, %arg1: i32) -> (i32, i32) {
    %c0_i32 = arith.constant 0 : i32
    %c0_i32_0 = arith.constant 0 : i32
    return %c0_i32, %arg1 : i32, i32
  }
  func.func @transform_2(%arg0: i32, %arg1: i32) -> (i32, i32) {
    %c0_i32 = arith.constant 0 : i32
    %c0_i32_0 = arith.constant 0 : i32
    %c0_i32_1 = arith.constant 0 : i32
    return %c0_i32, %c0_i32_0 : i32, i32
  }
  func.func @transform_3(%arg0: i32, %arg1: i32) -> (i32, i32) {
    %c0_i32 = arith.constant 0 : i32
    %c0_i32_0 = arith.constant 0 : i32
    return %c0_i32, %arg0 : i32, i32
  }
}

</mosaic_0001>

<llo_original>
// kernel: fused_linear_logsumexp.1
$region0: #{fused_linear_logsumexp.1}
  #allocation0 [shape = 'u32[]', space=smem, size = 0x4, offset = 0x4, fixed_abs, tag = 'smem constant byte address 0x4 - core index']
  #allocation1 [shape = 'u32[144,128]{1,0:T(1,128)}', space=vmem, size = 0x12000, scoped, tag = 'internal scratch']
  #allocation2 [shape = 'f32[512,256]{1,0:T(8,128)}', space=vmem, size = 0x80000, scoped, tag = 'scratch operand']
  %s0 = inlined_call_operand.hbm [shape: f32[256,1024], index: 0, kind: input, shape index: {}]
  %s1 = inlined_call_operand.hbm [shape: bf16[512,1024], index: 1, kind: input, shape index: {}]
  %s2 = inlined_call_operand.vmem [shape: f32[512,1], index: 2, kind: input, shape index: {}]
  %s3 = inlined_call_operand.hbm [shape: f32[1,256], index: 3, kind: output, shape index: {}]
  %s4 = sld [smem:[#allocation0]]
  $region61: #{fused_linear_logsumexp.1} parent=0
    _
  %s6 = ssub.s32 1, %s4
  %s7 = scalar_select 0, %s6, %s4
  $region1: #{fused_linear_logsumexp.1} parent=0
    #allocation3 [shape = 'u8[524288]{0}', space=vmem, size = 0x80000, scoped, tag = 'input window, operand 0']
    #allocation4 [shape = 's32[2]{0}', space=sflag, size = 0x8, scoped, tag = 'scoped memory for fused_linear_logsumexp.1']
    #allocation5 [shape = 's32[2]{0}', space=sflag, size = 0x8, scoped, tag = 'scoped memory for fused_linear_logsumexp.1']
    #allocation6 [shape = 'u8[524288]{0}', space=vmem, size = 0x80000, scoped, tag = 'input window, operand 1']
    #allocation7 [shape = 's32[2]{0}', space=sflag, size = 0x8, scoped, tag = 'scoped memory for fused_linear_logsumexp.1']
    #allocation8 [shape = 'u8[1024]{0}', space=vmem, size = 0x400, scoped, tag = 'output window, operand 0, single buffered']
    %8 = vsyncpa [#allocation4], 0
    %s9 = scalar_lea.sflag [#allocation4], 1
    %10 = vsyncpa %s9, 0
    %11 = vsyncpa [#allocation7], 0
    %s12 = scalar_lea.sflag [#allocation7], 1
    %13 = vsyncpa %s12, 0
    %14 = vsyncpa [#allocation5], 0
    loop: start=0, step=1, limit=6
    $region2: #{fused_linear_logsumexp.1} parent=1 // loop_pre_header
      _
    $region3: #{fused_linear_logsumexp.1} parent=1 // loop_header
      %s16 = sphi 0, %s20
      %p17 = scmp.ge.s32.totalorder %s16, 6
      %s23 = sphi 0, %s35
      %s24 = sphi 0, %s31
      %s25 = sphi 0, %s23
      %s26 = sphi 0, %s24
      %s27 = sphi 0, %s25
      %s28 = sphi 0, %s26
      %s40 = sphi 0, %s42
      %s43 = sphi 0, %s40
      %s44 = sphi 0, %s43
      %s60 = sphi 0, %s44
      %s66 = sphi 0, %s68
      %s69 = sphi 0, %s66
      %s70 = sphi 0, %s69
      %s86 = sphi 0, %s70
      %s90 = sphi 0, %s90
      %s92 = sphi 0, %s90
      %s93 = sphi 0, %s92
      %s107 = sphi 0, %s93
      %s113 = sphi 0, %s115
      %s116 = sphi 0, %s113
      %s117 = sphi 0, %s116
      %s133 = sphi 0, %s117
    $region4: #{fused_linear_logsumexp.1} parent=1 // loop_header_branch
      %19 = sbr.rel (%p17) target = $region8
    $region5: #{fused_linear_logsumexp.1} parent=1 // loop_body
      %s21 = ssub.s32 %s16, 1
      %s22 = ssub.s32 %s16, 2
      %s29 = sadd.s32 1, %s24
      %p30 = scmp.ge.s32.totalorder %s29, 4
      %s31 = scalar_select %p30, 0, %s29
      %s32 = sadd.s32 1, %s23
      %s33 = scalar_select %p30, %s32, %s23
      %p34 = scmp.ge.s32.totalorder %s33, 1
      %s35 = scalar_select %p34, 0, %s33
      %s36 = ssub.s32 %s23, %s35
      %s37 = ssub.s32 %s24, %s31
      %s38 = sor.u32 %s36, %s37
      %p39 = scmp.eq.s32.totalorder %s38, 0
      %s41 = sadd.s32 %s40, 1
      %s42 = scalar_select %p39, %s40, %s41
      %p45 = pneg %p39
      %p46 = scmp.eq.s32.totalorder %s16, 3
      %p47 = por %p45, %p46
      %p48 = scmp.ne.s32.totalorder %s40, %s43
      %p49 = scmp.eq.s32.totalorder %s16, 0
      %p50 = por %p48, %p49
      %p51 = scmp.ne.s32.totalorder %s40, %s43
      %p52 = scmp.eq.s32.totalorder %s21, 3
      %p53 = por %p51, %p52
      %p54 = scmp.ne.s32.totalorder %s43, %s44
      %p55 = scmp.eq.s32.totalorder %s21, 0
      %p56 = por %p54, %p55
      %p57 = scmp.ne.s32.totalorder %s43, %s44
      %p58 = scmp.eq.s32.totalorder %s22, 3
      %p59 = por %p57, %p58
      %p61 = scmp.ne.s32.totalorder %s44, %s60
      %p62 = scmp.eq.s32.totalorder %s22, 0
      %p63 = por %p61, %p62
      %s64 = ssub.s32 %s24, %s31
      %p65 = scmp.eq.s32.totalorder %s64, 0
      %s67 = sadd.s32 %s66, 1
      %s68 = scalar_select %p65, %s66, %s67
      %p71 = pneg %p65
      %p72 = scmp.eq.s32.totalorder %s16, 3
      %p73 = por %p71, %p72
      %p74 = scmp.ne.s32.totalorder %s66, %s69
      %p75 = scmp.eq.s32.totalorder %s16, 0
      %p76 = por %p74, %p75
      %p77 = scmp.ne.s32.totalorder %s66, %s69
      %p78 = scmp.eq.s32.totalorder %s21, 3
      %p79 = por %p77, %p78
      %p80 = scmp.ne.s32.totalorder %s69, %s70
      %p81 = scmp.eq.s32.totalorder %s21, 0
      %p82 = por %p80, %p81
      %p83 = scmp.ne.s32.totalorder %s69, %s70
      %p84 = scmp.eq.s32.totalorder %s22, 3
      %p85 = por %p83, %p84
      %p87 = scmp.ne.s32.totalorder %s70, %s86
      %p88 = scmp.eq.s32.totalorder %s22, 0
      %p89 = por %p87, %p88
      %s91 = sadd.s32 %s90, 1
      %p94 = scmp.eq.s32.totalorder %s16, 3
      %p95 = scmp.ne.s32.totalorder %s90, %s92
      %p96 = scmp.eq.s32.totalorder %s16, 0
      %p97 = por %p95, %p96
      %p98 = scmp.ne.s32.totalorder %s90, %s92
      %p99 = scmp.eq.s32.totalorder %s21, 3
      %p100 = por %p98, %p99
      %p101 = scmp.ne.s32.totalorder %s92, %s93
      %p102 = scmp.eq.s32.totalorder %s21, 0
      %p103 = por %p101, %p102
      %p104 = scmp.ne.s32.totalorder %s92, %s93
      %p105 = scmp.eq.s32.totalorder %s22, 3
      %p106 = por %p104, %p105
      %p108 = scmp.ne.s32.totalorder %s93, %s107
      %p109 = scmp.eq.s32.totalorder %s22, 0
      %p110 = por %p108, %p109
      %s111 = ssub.s32 %s23, %s35
      %p112 = scmp.eq.s32.totalorder %s111, 0
      %s114 = sadd.s32 %s113, 1
      %s115 = scalar_select %p112, %s113, %s114
      %p118 = pneg %p112
      %p119 = scmp.eq.s32.totalorder %s16, 3
      %p120 = por %p118, %p119
      %p121 = scmp.ne.s32.totalorder %s113, %s116
      %p122 = scmp.eq.s32.totalorder %s16, 0
      %p123 = por %p121, %p122
      %p124 = scmp.ne.s32.totalorder %s113, %s116
      %p125 = scmp.eq.s32.totalorder %s21, 3
      %p126 = por %p124, %p125
      %p127 = scmp.ne.s32.totalorder %s116, %s117
      %p128 = scmp.eq.s32.totalorder %s21, 0
      %p129 = por %p127, %p128
      %p130 = scmp.ne.s32.totalorder %s116, %s117
      %p131 = scmp.eq.s32.totalorder %s22, 3
      %p132 = por %p130, %p131
      %p134 = scmp.ne.s32.totalorder %s117, %s133
      %p135 = scmp.eq.s32.totalorder %s22, 0
      %p136 = por %p134, %p135
      %p137 = scmp.le.s32.totalorder 1, %s16
      %p138 = scmp.lt.s32.totalorder %s16, 5
      %p139 = pnand %p137, %p138
      %p140 = pneg %p139
      // Predicated region
      $region9: #{fused_linear_logsumexp.1} parent=5 // pred_check
        _
      $region10: #{fused_linear_logsumexp.1} parent=5 // pred_check_branch
        %142 = sbr.rel (%p139) target = $region12
      $region11: #{fused_linear_logsumexp.1} parent=5 // pred_region
        %s143 = ssub.s32 %s16, 1
        // Predicated region
        $region13: #{fused_linear_logsumexp.1} parent=11 // pred_check
          %p144 = pneg %p103
        $region14: #{fused_linear_logsumexp.1} parent=11 // pred_check_branch
          %146 = sbr.rel (%p144) target = $region16
        $region15: #{fused_linear_logsumexp.1} parent=11 // pred_region
          _
        $region16: #{fused_linear_logsumexp.1} parent=11 // pred_fallthru
          _
      $region12: #{fused_linear_logsumexp.1} parent=5 // pred_fallthru
        _
      %p147 = scmp.lt.s32.totalorder %s16, 4
      // Predicated region
      $region17: #{fused_linear_logsumexp.1} parent=5 // pred_check
        %p148 = pneg %p147
      $region18: #{fused_linear_logsumexp.1} parent=5 // pred_check_branch
        %150 = sbr.rel (%p148) target = $region20
      $region19: #{fused_linear_logsumexp.1} parent=5 // pred_region
        // Predicated region
        $region21: #{fused_linear_logsumexp.1} parent=19 // pred_check
          %p151 = pneg %p50
        $region22: #{fused_linear_logsumexp.1} parent=19 // pred_check_branch
          %153 = sbr.rel (%p151) target = $region24
        $region23: #{fused_linear_logsumexp.1} parent=19 // pred_region
          %s154 = sand.u32 %s40, 1
          %s155 = scalar_lea.sflag [#allocation4], %s154
          %s156 = sand.u32 %s40, 1
          %s157 = smul.addr %s156, 512
          %s158 = scalar_lea.vmem [#allocation3], %s157
          %s159 = smul.u32 32, %s23
          %s160 = smul.u32 2, %s24
          %s162 = ssub.s32 8192, 8192
          %163 = vsyncadd %s155, %s162
          %s164 = smul.addr %s159, 8
          %s165 = sadd.s32 %s160, %s164
          %s166 = smul.addr %s165, 128
          %s167 = scalar_lea.hbm %s0, %s166
          %s168 = sshll.u32 %s158, 4
          %s169 = int_to_ptr.vmem [resolvable:$true] %s168
          %174 = dma.hbm_to_vmem [thread:$0]  %s167, 8192, %s169, %s155, 1024, 256, 16
        $region24: #{fused_linear_logsumexp.1} parent=19 // pred_fallthru
          _
        // Predicated region
        $region25: #{fused_linear_logsumexp.1} parent=19 // pred_check
          %p175 = pneg %p76
        $region26: #{fused_linear_logsumexp.1} parent=19 // pred_check_branch
          %177 = sbr.rel (%p175) target = $region28
        $region27: #{fused_linear_logsumexp.1} parent=19 // pred_region
          %s178 = sand.u32 %s66, 1
          %s179 = scalar_lea.sflag [#allocation7], %s178
          %s180 = sand.u32 %s66, 1
          %s181 = smul.addr %s180, 512
          %s182 = scalar_lea.vmem [#allocation6], %s181
          %s183 = smul.u32 2, %s24
          %s185 = ssub.s32 8192, 8192
          %186 = vsyncadd %s179, %s185
          %s187 = smul.addr %s183, 64
          %s188 = scalar_lea.hbm %s1, %s187
          %s189 = sshll.u32 %s182, 4
          %s190 = int_to_ptr.vmem [resolvable:$true] %s189
          %195 = dma.hbm_to_vmem [thread:$0]  %s188, 8192, %s190, %s179, 512, 128, 8
        $region28: #{fused_linear_logsumexp.1} parent=19 // pred_fallthru
          _
      $region20: #{fused_linear_logsumexp.1} parent=5 // pred_fallthru
        _
      %p196 = scmp.le.s32.totalorder 1, %s16
      %p197 = scmp.lt.s32.totalorder %s16, 5
      %p198 = pnand %p196, %p197
      %p199 = pneg %p198
      // Predicated region
      $region29: #{fused_linear_logsumexp.1} parent=5 // pred_check
        _
      $region30: #{fused_linear_logsumexp.1} parent=5 // pred_check_branch
        %201 = sbr.rel (%p198) target = $region32
      $region31: #{fused_linear_logsumexp.1} parent=5 // pred_region
        %s202 = ssub.s32 %s16, 1
        %s203 = sand.u32 %s43, 1
        %s204 = scalar_lea.sflag [#allocation4], %s203
        %s205 = sand.u32 %s43, 1
        %s206 = smul.addr %s205, 512
        %s207 = scalar_lea.vmem [#allocation3], %s206
        // Predicated region
        $region33: #{fused_linear_logsumexp.1} parent=31 // pred_check
          %p208 = pneg %p56
        $region34: #{fused_linear_logsumexp.1} parent=31 // pred_check_branch
          %210 = sbr.rel (%p208) target = $region36
        $region35: #{fused_linear_logsumexp.1} parent=31 // pred_region
          %211 = dma.done %s204, 8192
        $region36: #{fused_linear_logsumexp.1} parent=31 // pred_fallthru
          _
        %s212 = sand.u32 %s69, 1
        %s213 = scalar_lea.sflag [#allocation7], %s212
        %s214 = sand.u32 %s69, 1
        %s215 = smul.addr %s214, 512
        %s216 = scalar_lea.vmem [#allocation6], %s215
        // Predicated region
        $region37: #{fused_linear_logsumexp.1} parent=31 // pred_check
          %p217 = pneg %p82
        $region38: #{fused_linear_logsumexp.1} parent=31 // pred_check_branch
          %219 = sbr.rel (%p217) target = $region40
        $region39: #{fused_linear_logsumexp.1} parent=31 // pred_region
          %220 = dma.done %s213, 8192
        $region40: #{fused_linear_logsumexp.1} parent=31 // pred_fallthru
          _
        %s221 = sand.u32 %s43, 1
        %s222 = scalar_lea.sflag [#allocation4], %s221
        %s223 = sand.u32 %s43, 1
        %s224 = smul.addr %s223, 512
        %s225 = scalar_lea.vmem [#allocation3], %s224
        %p226 = pneg %p56
        %p227 = pneg %p53
        %s228 = sand.u32 %s69, 1
        %s229 = scalar_lea.sflag [#allocation7], %s228
        %s230 = sand.u32 %s69, 1
        %s231 = smul.addr %s230, 512
        %s232 = scalar_lea.vmem [#allocation6], %s231
        %p233 = pneg %p82
        %p234 = pneg %p79
        %p235 = pneg %p103
        %p236 = pneg %p100
        %p237 = pneg %p129
        %p238 = pneg %p126
        %s239 = smul.u32 32, %s25
        %s240 = smul.u32 2, %s26
        %s241 = smul.u32 2, %s26
        %s242 = smul.u32 2, %s25
        %p243 = scmp.eq.s32.totalorder %s26, 0
        // Predicated region
        $region41: #{fused_linear_logsumexp.1} parent=31 // pred_check
          %p244 = pneg %p243
        $region42: #{fused_linear_logsumexp.1} parent=31 // pred_check_branch
          %246 = sbr.rel (%p244) target = $region44
        $region43: #{fused_linear_logsumexp.1} parent=31 // pred_region
          %v247 = vld [vmem:[%s2] sm:$0xff]
          %v248 = vld [vmem:[%s2 + $0x8] sm:$0xff]
          %v249 = vld [vmem:[%s2 + $0x10] sm:$0xff]
          %v250 = vld [vmem:[%s2 + $0x18] sm:$0xff]
          %v251 = vld [vmem:[%s2 + $0x20] sm:$0xff]
          %v252 = vld [vmem:[%s2 + $0x28] sm:$0xff]
          %v253 = vld [vmem:[%s2 + $0x30] sm:$0xff]
          %v254 = vld [vmem:[%s2 + $0x38] sm:$0xff]
          %v255 = vld [vmem:[%s2 + $0x40] sm:$0xff]
          %v256 = vld [vmem:[%s2 + $0x48] sm:$0xff]
          %v257 = vld [vmem:[%s2 + $0x50] sm:$0xff]
          %v258 = vld [vmem:[%s2 + $0x58] sm:$0xff]
          %v259 = vld [vmem:[%s2 + $0x60] sm:$0xff]
          %v260 = vld [vmem:[%s2 + $0x68] sm:$0xff]
          %v261 = vld [vmem:[%s2 + $0x70] sm:$0xff]
          %v262 = vld [vmem:[%s2 + $0x78] sm:$0xff]
          %v263 = vld [vmem:[%s2 + $0x80] sm:$0xff]
          %v264 = vld [vmem:[%s2 + $0x88] sm:$0xff]
          %v265 = vld [vmem:[%s2 + $0x90] sm:$0xff]
          %v266 = vld [vmem:[%s2 + $0x98] sm:$0xff]
          %v267 = vld [vmem:[%s2 + $0xa0] sm:$0xff]
          %v268 = vld [vmem:[%s2 + $0xa8] sm:$0xff]
          %v269 = vld [vmem:[%s2 + $0xb0] sm:$0xff]
          %v270 = vld [vmem:[%s2 + $0xb8] sm:$0xff]
          %v271 = vld [vmem:[%s2 + $0xc0] sm:$0xff]
          %v272 = vld [vmem:[%s2 + $0xc8] sm:$0xff]
          %v273 = vld [vmem:[%s2 + $0xd0] sm:$0xff]
          %v274 = vld [vmem:[%s2 + $0xd8] sm:$0xff]
          %v275 = vld [vmem:[%s2 + $0xe0] sm:$0xff]
          %v276 = vld [vmem:[%s2 + $0xe8] sm:$0xff]
          %v277 = vld [vmem:[%s2 + $0xf0] sm:$0xff]
          %v278 = vld [vmem:[%s2 + $0xf8] sm:$0xff]
          %v279 = vld [vmem:[%s2 + $0x100] sm:$0xff]
          %v280 = vld [vmem:[%s2 + $0x108] sm:$0xff]
          %v281 = vld [vmem:[%s2 + $0x110] sm:$0xff]
          %v282 = vld [vmem:[%s2 + $0x118] sm:$0xff]
          %v283 = vld [vmem:[%s2 + $0x120] sm:$0xff]
          %v284 = vld [vmem:[%s2 + $0x128] sm:$0xff]
          %v285 = vld [vmem:[%s2 + $0x130] sm:$0xff]
          %v286 = vld [vmem:[%s2 + $0x138] sm:$0xff]
          %v287 = vld [vmem:[%s2 + $0x140] sm:$0xff]
          %v288 = vld [vmem:[%s2 + $0x148] sm:$0xff]
          %v289 = vld [vmem:[%s2 + $0x150] sm:$0xff]
          %v290 = vld [vmem:[%s2 + $0x158] sm:$0xff]
          %v291 = vld [vmem:[%s2 + $0x160] sm:$0xff]
          %v292 = vld [vmem:[%s2 + $0x168] sm:$0xff]
          %v293 = vld [vmem:[%s2 + $0x170] sm:$0xff]
          %v294 = vld [vmem:[%s2 + $0x178] sm:$0xff]
          %v295 = vld [vmem:[%s2 + $0x180] sm:$0xff]
          %v296 = vld [vmem:[%s2 + $0x188] sm:$0xff]
          %v297 = vld [vmem:[%s2 + $0x190] sm:$0xff]
          %v298 = vld [vmem:[%s2 + $0x198] sm:$0xff]
          %v299 = vld [vmem:[%s2 + $0x1a0] sm:$0xff]
          %v300 = vld [vmem:[%s2 + $0x1a8] sm:$0xff]
          %v301 = vld [vmem:[%s2 + $0x1b0] sm:$0xff]
          %v302 = vld [vmem:[%s2 + $0x1b8] sm:$0xff]
          %v303 = vld [vmem:[%s2 + $0x1c0] sm:$0xff]
          %v304 = vld [vmem:[%s2 + $0x1c8] sm:$0xff]
          %v305 = vld [vmem:[%s2 + $0x1d0] sm:$0xff]
          %v306 = vld [vmem:[%s2 + $0x1d8] sm:$0xff]
          %v307 = vld [vmem:[%s2 + $0x1e0] sm:$0xff]
          %v308 = vld [vmem:[%s2 + $0x1e8] sm:$0xff]
          %v309 = vld [vmem:[%s2 + $0x1f0] sm:$0xff]
          %v310 = vld [vmem:[%s2 + $0x1f8] sm:$0xff]
          %312 = vset.pattern.permute.xlu0 0
          %313 = vperm.xlu0 %312, %v247
          %v314 = vpop.permute.xlu0 %313
          %317 = vset.pattern.permute.xlu0 0
          %318 = vperm.xlu0 %317, %v248
          %v319 = vpop.permute.xlu0 %318
          %322 = vset.pattern.permute.xlu0 0
          %323 = vperm.xlu0 %322, %v249
          %v324 = vpop.permute.xlu0 %323
          %327 = vset.pattern.permute.xlu0 0
          %328 = vperm.xlu0 %327, %v250
          %v329 = vpop.permute.xlu0 %328
          %332 = vset.pattern.permute.xlu0 0
          %333 = vperm.xlu0 %332, %v251
          %v334 = vpop.permute.xlu0 %333
          %337 = vset.pattern.permute.xlu0 0
          %338 = vperm.xlu0 %337, %v252
          %v339 = vpop.permute.xlu0 %338
          %342 = vset.pattern.permute.xlu0 0
          %343 = vperm.xlu0 %342, %v253
          %v344 = vpop.permute.xlu0 %343
          %347 = vset.pattern.permute.xlu0 0
          %348 = vperm.xlu0 %347, %v254
          %v349 = vpop.permute.xlu0 %348
          %352 = vset.pattern.permute.xlu0 0
          %353 = vperm.xlu0 %352, %v255
          %v354 = vpop.permute.xlu0 %353
          %357 = vset.pattern.permute.xlu0 0
          %358 = vperm.xlu0 %357, %v256
          %v359 = vpop.permute.xlu0 %358
          %362 = vset.pattern.permute.xlu0 0
          %363 = vperm.xlu0 %362, %v257
          %v364 = vpop.permute.xlu0 %363
          %367 = vset.pattern.permute.xlu0 0
          %368 = vperm.xlu0 %367, %v258
          %v369 = vpop.permute.xlu0 %368
          %372 = vset.pattern.permute.xlu0 0
          %373 = vperm.xlu0 %372, %v259
          %v374 = vpop.permute.xlu0 %373
          %377 = vset.pattern.permute.xlu0 0
          %378 = vperm.xlu0 %377, %v260
          %v379 = vpop.permute.xlu0 %378
          %382 = vset.pattern.permute.xlu0 0
          %383 = vperm.xlu0 %382, %v261
          %v384 = vpop.permute.xlu0 %383
          %387 = vset.pattern.permute.xlu0 0
          %388 = vperm.xlu0 %387, %v262
          %v389 = vpop.permute.xlu0 %388
          %392 = vset.pattern.permute.xlu0 0
          %393 = vperm.xlu0 %392, %v263
          %v394 = vpop.permute.xlu0 %393
          %397 = vset.pattern.permute.xlu0 0
          %398 = vperm.xlu0 %397, %v264
          %v399 = vpop.permute.xlu0 %398
          %402 = vset.pattern.permute.xlu0 0
          %403 = vperm.xlu0 %402, %v265
          %v404 = vpop.permute.xlu0 %403
          %407 = vset.pattern.permute.xlu0 0
          %408 = vperm.xlu0 %407, %v266
          %v409 = vpop.permute.xlu0 %408
          %412 = vset.pattern.permute.xlu0 0
          %413 = vperm.xlu0 %412, %v267
          %v414 = vpop.permute.xlu0 %413
          %417 = vset.pattern.permute.xlu0 0
          %418 = vperm.xlu0 %417, %v268
          %v419 = vpop.permute.xlu0 %418
          %422 = vset.pattern.permute.xlu0 0
          %423 = vperm.xlu0 %422, %v269
          %v424 = vpop.permute.xlu0 %423
          %427 = vset.pattern.permute.xlu0 0
          %428 = vperm.xlu0 %427, %v270
          %v429 = vpop.permute.xlu0 %428
          %432 = vset.pattern.permute.xlu0 0
          %433 = vperm.xlu0 %432, %v271
          %v434 = vpop.permute.xlu0 %433
          %437 = vset.pattern.permute.xlu0 0
          %438 = vperm.xlu0 %437, %v272
          %v439 = vpop.permute.xlu0 %438
          %442 = vset.pattern.permute.xlu0 0
          %443 = vperm.xlu0 %442, %v273
          %v444 = vpop.permute.xlu0 %443
          %447 = vset.pattern.permute.xlu0 0
          %448 = vperm.xlu0 %447, %v274
          %v449 = vpop.permute.xlu0 %448
          %452 = vset.pattern.permute.xlu0 0
          %453 = vperm.xlu0 %452, %v275
          %v454 = vpop.permute.xlu0 %453
          %457 = vset.pattern.permute.xlu0 0
          %458 = vperm.xlu0 %457, %v276
          %v459 = vpop.permute.xlu0 %458
          %462 = vset.pattern.permute.xlu0 0
          %463 = vperm.xlu0 %462, %v277
          %v464 = vpop.permute.xlu0 %463
          %467 = vset.pattern.permute.xlu0 0
          %468 = vperm.xlu0 %467, %v278
          %v469 = vpop.permute.xlu0 %468
          %472 = vset.pattern.permute.xlu0 0
          %473 = vperm.xlu0 %472, %v279
          %v474 = vpop.permute.xlu0 %473
          %477 = vset.pattern.permute.xlu0 0
          %478 = vperm.xlu0 %477, %v280
          %v479 = vpop.permute.xlu0 %478
          %482 = vset.pattern.permute.xlu0 0
          %483 = vperm.xlu0 %482, %v281
          %v484 = vpop.permute.xlu0 %483
          %487 = vset.pattern.permute.xlu0 0
          %488 = vperm.xlu0 %487, %v282
          %v489 = vpop.permute.xlu0 %488
          %492 = vset.pattern.permute.xlu0 0
          %493 = vperm.xlu0 %492, %v283
          %v494 = vpop.permute.xlu0 %493
          %497 = vset.pattern.permute.xlu0 0
          %498 = vperm.xlu0 %497, %v284
          %v499 = vpop.permute.xlu0 %498
          %502 = vset.pattern.permute.xlu0 0
          %503 = vperm.xlu0 %502, %v285
          %v504 = vpop.permute.xlu0 %503
          %507 = vset.pattern.permute.xlu0 0
          %508 = vperm.xlu0 %507, %v286
          %v509 = vpop.permute.xlu0 %508
          %512 = vset.pattern.permute.xlu0 0
          %513 = vperm.xlu0 %512, %v287
          %v514 = vpop.permute.xlu0 %513
          %517 = vset.pattern.permute.xlu0 0
          %518 = vperm.xlu0 %517, %v288
          %v519 = vpop.permute.xlu0 %518
          %522 = vset.pattern.permute.xlu0 0
          %523 = vperm.xlu0 %522, %v289
          %v524 = vpop.permute.xlu0 %523
          %527 = vset.pattern.permute.xlu0 0
          %528 = vperm.xlu0 %527, %v290
          %v529 = vpop.permute.xlu0 %528
          %532 = vset.pattern.permute.xlu0 0
          %533 = vperm.xlu0 %532, %v291
          %v534 = vpop.permute.xlu0 %533
          %537 = vset.pattern.permute.xlu0 0
          %538 = vperm.xlu0 %537, %v292
          %v539 = vpop.permute.xlu0 %538
          %542 = vset.pattern.permute.xlu0 0
          %543 = vperm.xlu0 %542, %v293
          %v544 = vpop.permute.xlu0 %543
          %547 = vset.pattern.permute.xlu0 0
          %548 = vperm.xlu0 %547, %v294
          %v549 = vpop.permute.xlu0 %548
          %552 = vset.pattern.permute.xlu0 0
          %553 = vperm.xlu0 %552, %v295
          %v554 = vpop.permute.xlu0 %553
          %557 = vset.pattern.permute.xlu0 0
          %558 = vperm.xlu0 %557, %v296
          %v559 = vpop.permute.xlu0 %558
          %562 = vset.pattern.permute.xlu0 0
          %563 = vperm.xlu0 %562, %v297
          %v564 = vpop.permute.xlu0 %563
          %567 = vset.pattern.permute.xlu0 0
          %568 = vperm.xlu0 %567, %v298
          %v569 = vpop.permute.xlu0 %568
          %572 = vset.pattern.permute.xlu0 0
          %573 = vperm.xlu0 %572, %v299
          %v574 = vpop.permute.xlu0 %573
          %577 = vset.pattern.permute.xlu0 0
          %578 = vperm.xlu0 %577, %v300
          %v579 = vpop.permute.xlu0 %578
          %582 = vset.pattern.permute.xlu0 0
          %583 = vperm.xlu0 %582, %v301
          %v584 = vpop.permute.xlu0 %583
          %587 = vset.pattern.permute.xlu0 0
          %588 = vperm.xlu0 %587, %v302
          %v589 = vpop.permute.xlu0 %588
          %592 = vset.pattern.permute.xlu0 0
          %593 = vperm.xlu0 %592, %v303
          %v594 = vpop.permute.xlu0 %593
          %597 = vset.pattern.permute.xlu0 0
          %598 = vperm.xlu0 %597, %v304
          %v599 = vpop.permute.xlu0 %598
          %602 = vset.pattern.permute.xlu0 0
          %603 = vperm.xlu0 %602, %v305
          %v604 = vpop.permute.xlu0 %603
          %607 = vset.pattern.permute.xlu0 0
          %608 = vperm.xlu0 %607, %v306
          %v609 = vpop.permute.xlu0 %608
          %612 = vset.pattern.permute.xlu0 0
          %613 = vperm.xlu0 %612, %v307
          %v614 = vpop.permute.xlu0 %613
          %617 = vset.pattern.permute.xlu0 0
          %618 = vperm.xlu0 %617, %v308
          %v619 = vpop.permute.xlu0 %618
          %622 = vset.pattern.permute.xlu0 0
          %623 = vperm.xlu0 %622, %v309
          %v624 = vpop.permute.xlu0 %623
          %627 = vset.pattern.permute.xlu0 0
          %628 = vperm.xlu0 %627, %v310
          %v629 = vpop.permute.xlu0 %628
          %631 = vst [vmem:[#allocation2] sm:$0xff] %v314
          %632 = vst [vmem:[#allocation2 + $0x8] sm:$0xff] %v314
          %633 = vst [vmem:[#allocation2 + $0x10] sm:$0xff] %v319
          %634 = vst [vmem:[#allocation2 + $0x18] sm:$0xff] %v319
          %635 = vst [vmem:[#allocation2 + $0x20] sm:$0xff] %v324
          %636 = vst [vmem:[#allocation2 + $0x28] sm:$0xff] %v324
          %637 = vst [vmem:[#allocation2 + $0x30] sm:$0xff] %v329
          %638 = vst [vmem:[#allocation2 + $0x38] sm:$0xff] %v329
          %639 = vst [vmem:[#allocation2 + $0x40] sm:$0xff] %v334
          %640 = vst [vmem:[#allocation2 + $0x48] sm:$0xff] %v334
          %641 = vst [vmem:[#allocation2 + $0x50] sm:$0xff] %v339
          %642 = vst [vmem:[#allocation2 + $0x58] sm:$0xff] %v339
          %643 = vst [vmem:[#allocation2 + $0x60] sm:$0xff] %v344
          %644 = vst [vmem:[#allocation2 + $0x68] sm:$0xff] %v344
          %645 = vst [vmem:[#allocation2 + $0x70] sm:$0xff] %v349
          %646 = vst [vmem:[#allocation2 + $0x78] sm:$0xff] %v349
          %647 = vst [vmem:[#allocation2 + $0x80] sm:$0xff] %v354
          %648 = vst [vmem:[#allocation2 + $0x88] sm:$0xff] %v354
          %649 = vst [vmem:[#allocation2 + $0x90] sm:$0xff] %v359
          %650 = vst [vmem:[#allocation2 + $0x98] sm:$0xff] %v359
          %651 = vst [vmem:[#allocation2 + $0xa0] sm:$0xff] %v364
          %652 = vst [vmem:[#allocation2 + $0xa8] sm:$0xff] %v364
          %653 = vst [vmem:[#allocation2 + $0xb0] sm:$0xff] %v369
          %654 = vst [vmem:[#allocation2 + $0xb8] sm:$0xff] %v369
          %655 = vst [vmem:[#allocation2 + $0xc0] sm:$0xff] %v374
          %656 = vst [vmem:[#allocation2 + $0xc8] sm:$0xff] %v374
          %657 = vst [vmem:[#allocation2 + $0xd0] sm:$0xff] %v379
          %658 = vst [vmem:[#allocation2 + $0xd8] sm:$0xff] %v379
          %659 = vst [vmem:[#allocation2 + $0xe0] sm:$0xff] %v384
          %660 = vst [vmem:[#allocation2 + $0xe8] sm:$0xff] %v384
          %661 = vst [vmem:[#allocation2 + $0xf0] sm:$0xff] %v389
          %662 = vst [vmem:[#allocation2 + $0xf8] sm:$0xff] %v389
          %663 = vst [vmem:[#allocation2 + $0x100] sm:$0xff] %v394
          %664 = vst [vmem:[#allocation2 + $0x108] sm:$0xff] %v394
          %665 = vst [vmem:[#allocation2 + $0x110] sm:$0xff] %v399
          %666 = vst [vmem:[#allocation2 + $0x118] sm:$0xff] %v399
          %667 = vst [vmem:[#allocation2 + $0x120] sm:$0xff] %v404
          %668 = vst [vmem:[#allocation2 + $0x128] sm:$0xff] %v404
          %669 = vst [vmem:[#allocation2 + $0x130] sm:$0xff] %v409
          %670 = vst [vmem:[#allocation2 + $0x138] sm:$0xff] %v409
          %671 = vst [vmem:[#allocation2 + $0x140] sm:$0xff] %v414
          %672 = vst [vmem:[#allocation2 + $0x148] sm:$0xff] %v414
          %673 = vst [vmem:[#allocation2 + $0x150] sm:$0xff] %v419
          %674 = vst [vmem:[#allocation2 + $0x158] sm:$0xff] %v419
          %675 = vst [vmem:[#allocation2 + $0x160] sm:$0xff] %v424
          %676 = vst [vmem:[#allocation2 + $0x168] sm:$0xff] %v424
          %677 = vst [vmem:[#allocation2 + $0x170] sm:$0xff] %v429
          %678 = vst [vmem:[#allocation2 + $0x178] sm:$0xff] %v429
          %679 = vst [vmem:[#allocation2 + $0x180] sm:$0xff] %v434
          %680 = vst [vmem:[#allocation2 + $0x188] sm:$0xff] %v434
          %681 = vst [vmem:[#allocation2 + $0x190] sm:$0xff] %v439
          %682 = vst [vmem:[#allocation2 + $0x198] sm:$0xff] %v439
          %683 = vst [vmem:[#allocation2 + $0x1a0] sm:$0xff] %v444
          %684 = vst [vmem:[#allocation2 + $0x1a8] sm:$0xff] %v444
          %685 = vst [vmem:[#allocation2 + $0x1b0] sm:$0xff] %v449
          %686 = vst [vmem:[#allocation2 + $0x1b8] sm:$0xff] %v449
          %687 = vst [vmem:[#allocation2 + $0x1c0] sm:$0xff] %v454
          %688 = vst [vmem:[#allocation2 + $0x1c8] sm:$0xff] %v454
          %689 = vst [vmem:[#allocation2 + $0x1d0] sm:$0xff] %v459
          %690 = vst [vmem:[#allocation2 + $0x1d8] sm:$0xff] %v459
          %691 = vst [vmem:[#allocation2 + $0x1e0] sm:$0xff] %v464
          %692 = vst [vmem:[#allocation2 + $0x1e8] sm:$0xff] %v464
          %693 = vst [vmem:[#allocation2 + $0x1f0] sm:$0xff] %v469
          %694 = vst [vmem:[#allocation2 + $0x1f8] sm:$0xff] %v469
          %695 = vst [vmem:[#allocation2 + $0x200] sm:$0xff] %v474
          %696 = vst [vmem:[#allocation2 + $0x208] sm:$0xff] %v474
          %697 = vst [vmem:[#allocation2 + $0x210] sm:$0xff] %v479
          %698 = vst [vmem:[#allocation2 + $0x218] sm:$0xff] %v479
          %699 = vst [vmem:[#allocation2 + $0x220] sm:$0xff] %v484
          %700 = vst [vmem:[#allocation2 + $0x228] sm:$0xff] %v484
          %701 = vst [vmem:[#allocation2 + $0x230] sm:$0xff] %v489
          %702 = vst [vmem:[#allocation2 + $0x238] sm:$0xff] %v489
          %703 = vst [vmem:[#allocation2 + $0x240] sm:$0xff] %v494
          %704 = vst [vmem:[#allocation2 + $0x248] sm:$0xff] %v494
          %705 = vst [vmem:[#allocation2 + $0x250] sm:$0xff] %v499
          %706 = vst [vmem:[#allocation2 + $0x258] sm:$0xff] %v499
          %707 = vst [vmem:[#allocation2 + $0x260] sm:$0xff] %v504
          %708 = vst [vmem:[#allocation2 + $0x268] sm:$0xff] %v504
          %709 = vst [vmem:[#allocation2 + $0x270] sm:$0xff] %v509
          %710 = vst [vmem:[#allocation2 + $0x278] sm:$0xff] %v509
          %711 = vst [vmem:[#allocation2 + $0x280] sm:$0xff] %v514
          %712 = vst [vmem:[#allocation2 + $0x288] sm:$0xff] %v514
          %713 = vst [vmem:[#allocation2 + $0x290] sm:$0xff] %v519
          %714 = vst [vmem:[#allocation2 + $0x298] sm:$0xff] %v519
          %715 = vst [vmem:[#allocation2 + $0x2a0] sm:$0xff] %v524
          %716 = vst [vmem:[#allocation2 + $0x2a8] sm:$0xff] %v524
          %717 = vst [vmem:[#allocation2 + $0x2b0] sm:$0xff] %v529
          %718 = vst [vmem:[#allocation2 + $0x2b8] sm:$0xff] %v529
          %719 = vst [vmem:[#allocation2 + $0x2c0] sm:$0xff] %v534
          %720 = vst [vmem:[#allocation2 + $0x2c8] sm:$0xff] %v534
          %721 = vst [vmem:[#allocation2 + $0x2d0] sm:$0xff] %v539
          %722 = vst [vmem:[#allocation2 + $0x2d8] sm:$0xff] %v539
          %723 = vst [vmem:[#allocation2 + $0x2e0] sm:$0xff] %v544
          %724 = vst [vmem:[#allocation2 + $0x2e8] sm:$0xff] %v544
          %725 = vst [vmem:[#allocation2 + $0x2f0] sm:$0xff] %v549
          %726 = vst [vmem:[#allocation2 + $0x2f8] sm:$0xff] %v549
          %727 = vst [vmem:[#allocation2 + $0x300] sm:$0xff] %v554
          %728 = vst [vmem:[#allocation2 + $0x308] sm:$0xff] %v554
          %729 = vst [vmem:[#allocation2 + $0x310] sm:$0xff] %v559
          %730 = vst [vmem:[#allocation2 + $0x318] sm:$0xff] %v559
          %731 = vst [vmem:[#allocation2 + $0x320] sm:$0xff] %v564
          %732 = vst [vmem:[#allocation2 + $0x328] sm:$0xff] %v564
          %733 = vst [vmem:[#allocation2 + $0x330] sm:$0xff] %v569
          %734 = vst [vmem:[#allocation2 + $0x338] sm:$0xff] %v569
          %735 = vst [vmem:[#allocation2 + $0x340] sm:$0xff] %v574
          %736 = vst [vmem:[#allocation2 + $0x348] sm:$0xff] %v574
          %737 = vst [vmem:[#allocation2 + $0x350] sm:$0xff] %v579
          %738 = vst [vmem:[#allocation2 + $0x358] sm:$0xff] %v579
          %739 = vst [vmem:[#allocation2 + $0x360] sm:$0xff] %v584
          %740 = vst [vmem:[#allocation2 + $0x368] sm:$0xff] %v584
          %741 = vst [vmem:[#allocation2 + $0x370] sm:$0xff] %v589
          %742 = vst [vmem:[#allocation2 + $0x378] sm:$0xff] %v589
          %743 = vst [vmem:[#allocation2 + $0x380] sm:$0xff] %v594
          %744 = vst [vmem:[#allocation2 + $0x388] sm:$0xff] %v594
          %745 = vst [vmem:[#allocation2 + $0x390] sm:$0xff] %v599
          %746 = vst [vmem:[#allocation2 + $0x398] sm:$0xff] %v599
          %747 = vst [vmem:[#allocation2 + $0x3a0] sm:$0xff] %v604
          %748 = vst [vmem:[#allocation2 + $0x3a8] sm:$0xff] %v604
          %749 = vst [vmem:[#allocation2 + $0x3b0] sm:$0xff] %v609
          %750 = vst [vmem:[#allocation2 + $0x3b8] sm:$0xff] %v609
          %751 = vst [vmem:[#allocation2 + $0x3c0] sm:$0xff] %v614
          %752 = vst [vmem:[#allocation2 + $0x3c8] sm:$0xff] %v614
          %753 = vst [vmem:[#allocation2 + $0x3d0] sm:$0xff] %v619
          %754 = vst [vmem:[#allocation2 + $0x3d8] sm:$0xff] %v619
          %755 = vst [vmem:[#allocation2 + $0x3e0] sm:$0xff] %v624
          %756 = vst [vmem:[#allocation2 + $0x3e8] sm:$0xff] %v624
          %757 = vst [vmem:[#allocation2 + $0x3f0] sm:$0xff] %v629
          %758 = vst [vmem:[#allocation2 + $0x3f8] sm:$0xff] %v629
        $region44: #{fused_linear_logsumexp.1} parent=31 // pred_fallthru
          _
        %v759 = vld [vmem:[#allocation2] sm:$0xff]
        %v760 = vld [vmem:[#allocation2 + $0x8] sm:$0xff]
        %v761 = vld [vmem:[#allocation2 + $0x10] sm:$0xff]
        %v762 = vld [vmem:[#allocation2 + $0x18] sm:$0xff]
        %v763 = vld [vmem:[#allocation2 + $0x20] sm:$0xff]
        %v764 = vld [vmem:[#allocation2 + $0x28] sm:$0xff]
        %v765 = vld [vmem:[#allocation2 + $0x30] sm:$0xff]
        %v766 = vld [vmem:[#allocation2 + $0x38] sm:$0xff]
        %v767 = vld [vmem:[#allocation2 + $0x40] sm:$0xff]
        %v768 = vld [vmem:[#allocation2 + $0x48] sm:$0xff]
        %v769 = vld [vmem:[#allocation2 + $0x50] sm:$0xff]
        %v770 = vld [vmem:[#allocation2 + $0x58] sm:$0xff]
        %v771 = vld [vmem:[#allocation2 + $0x60] sm:$0xff]
        %v772 = vld [vmem:[#allocation2 + $0x68] sm:$0xff]
        %v773 = vld [vmem:[#allocation2 + $0x70] sm:$0xff]
        %v774 = vld [vmem:[#allocation2 + $0x78] sm:$0xff]
        %v775 = vld [vmem:[#allocation2 + $0x80] sm:$0xff]
        %v776 = vld [vmem:[#allocation2 + $0x88] sm:$0xff]
        %v777 = vld [vmem:[#allocation2 + $0x90] sm:$0xff]
        %v778 = vld [vmem:[#allocation2 + $0x98] sm:$0xff]
        %v779 = vld [vmem:[#allocation2 + $0xa0] sm:$0xff]
        %v780 = vld [vmem:[#allocation2 + $0xa8] sm:$0xff]
        %v781 = vld [vmem:[#allocation2 + $0xb0] sm:$0xff]
        %v782 = vld [vmem:[#allocation2 + $0xb8] sm:$0xff]
        %v783 = vld [vmem:[#allocation2 + $0xc0] sm:$0xff]
        %v784 = vld [vmem:[#allocation2 + $0xc8] sm:$0xff]
        %v785 = vld [vmem:[#allocation2 + $0xd0] sm:$0xff]
        %v786 = vld [vmem:[#allocation2 + $0xd8] sm:$0xff]
        %v787 = vld [vmem:[#allocation2 + $0xe0] sm:$0xff]
        %v788 = vld [vmem:[#allocation2 + $0xe8] sm:$0xff]
        %v789 = vld [vmem:[#allocation2 + $0xf0] sm:$0xff]
        %v790 = vld [vmem:[#allocation2 + $0xf8] sm:$0xff]
        %v791 = vld [vmem:[#allocation2 + $0x100] sm:$0xff]
        %v792 = vld [vmem:[#allocation2 + $0x108] sm:$0xff]
        %v793 = vld [vmem:[#allocation2 + $0x110] sm:$0xff]
        %v794 = vld [vmem:[#allocation2 + $0x118] sm:$0xff]
        %v795 = vld [vmem:[#allocation2 + $0x120] sm:$0xff]
        %v796 = vld [vmem:[#allocation2 + $0x128] sm:$0xff]
        %v797 = vld [vmem:[#allocation2 + $0x130] sm:$0xff]
        %v798 = vld [vmem:[#allocation2 + $0x138] sm:$0xff]
        %v799 = vld [vmem:[#allocation2 + $0x140] sm:$0xff]
        %v800 = vld [vmem:[#allocation2 + $0x148] sm:$0xff]
        %v801 = vld [vmem:[#allocation2 + $0x150] sm:$0xff]
        %v802 = vld [vmem:[#allocation2 + $0x158] sm:$0xff]
        %v803 = vld [vmem:[#allocation2 + $0x160] sm:$0xff]
        %v804 = vld [vmem:[#allocation2 + $0x168] sm:$0xff]
        %v805 = vld [vmem:[#allocation2 + $0x170] sm:$0xff]
        %v806 = vld [vmem:[#allocation2 + $0x178] sm:$0xff]
        %v807 = vld [vmem:[#allocation2 + $0x180] sm:$0xff]
        %v808 = vld [vmem:[#allocation2 + $0x188] sm:$0xff]
        %v809 = vld [vmem:[#allocation2 + $0x190] sm:$0xff]
        %v810 = vld [vmem:[#allocation2 + $0x198] sm:$0xff]
        %v811 = vld [vmem:[#allocation2 + $0x1a0] sm:$0xff]
        %v812 = vld [vmem:[#allocation2 + $0x1a8] sm:$0xff]
        %v813 = vld [vmem:[#allocation2 + $0x1b0] sm:$0xff]
        %v814 = vld [vmem:[#allocation2 + $0x1b8] sm:$0xff]
        %v815 = vld [vmem:[#allocation2 + $0x1c0] sm:$0xff]
        %v816 = vld [vmem:[#allocation2 + $0x1c8] sm:$0xff]
        %v817 = vld [vmem:[#allocation2 + $0x1d0] sm:$0xff]
        %v818 = vld [vmem:[#allocation2 + $0x1d8] sm:$0xff]
        %v819 = vld [vmem:[#allocation2 + $0x1e0] sm:$0xff]
        %v820 = vld [vmem:[#allocation2 + $0x1e8] sm:$0xff]
        %v821 = vld [vmem:[#allocation2 + $0x1f0] sm:$0xff]
        %v822 = vld [vmem:[#allocation2 + $0x1f8] sm:$0xff]
        %v823 = vld [vmem:[#allocation2 + $0x200] sm:$0xff]
        %v824 = vld [vmem:[#allocation2 + $0x208] sm:$0xff]
        %v825 = vld [vmem:[#allocation2 + $0x210] sm:$0xff]
        %v826 = vld [vmem:[#allocation2 + $0x218] sm:$0xff]
        %v827 = vld [vmem:[#allocation2 + $0x220] sm:$0xff]
        %v828 = vld [vmem:[#allocation2 + $0x228] sm:$0xff]
        %v829 = vld [vmem:[#allocation2 + $0x230] sm:$0xff]
        %v830 = vld [vmem:[#allocation2 + $0x238] sm:$0xff]
        %v831 = vld [vmem:[#allocation2 + $0x240] sm:$0xff]
        %v832 = vld [vmem:[#allocation2 + $0x248] sm:$0xff]
        %v833 = vld [vmem:[#allocation2 + $0x250] sm:$0xff]
        %v834 = vld [vmem:[#allocation2 + $0x258] sm:$0xff]
        %v835 = vld [vmem:[#allocation2 + $0x260] sm:$0xff]
        %v836 = vld [vmem:[#allocation2 + $0x268] sm:$0xff]
        %v837 = vld [vmem:[#allocation2 + $0x270] sm:$0xff]
        %v838 = vld [vmem:[#allocation2 + $0x278] sm:$0xff]
        %v839 = vld [vmem:[#allocation2 + $0x280] sm:$0xff]
        %v840 = vld [vmem:[#allocation2 + $0x288] sm:$0xff]
        %v841 = vld [vmem:[#allocation2 + $0x290] sm:$0xff]
        %v842 = vld [vmem:[#allocation2 + $0x298] sm:$0xff]
        %v843 = vld [vmem:[#allocation2 + $0x2a0] sm:$0xff]
        %v844 = vld [vmem:[#allocation2 + $0x2a8] sm:$0xff]
        %v845 = vld [vmem:[#allocation2 + $0x2b0] sm:$0xff]
        %v846 = vld [vmem:[#allocation2 + $0x2b8] sm:$0xff]
        %v847 = vld [vmem:[#allocation2 + $0x2c0] sm:$0xff]
        %v848 = vld [vmem:[#allocation2 + $0x2c8] sm:$0xff]
        %v849 = vld [vmem:[#allocation2 + $0x2d0] sm:$0xff]
        %v850 = vld [vmem:[#allocation2 + $0x2d8] sm:$0xff]
        %v851 = vld [vmem:[#allocation2 + $0x2e0] sm:$0xff]
        %v852 = vld [vmem:[#allocation2 + $0x2e8] sm:$0xff]
        %v853 = vld [vmem:[#allocation2 + $0x2f0] sm:$0xff]
        %v854 = vld [vmem:[#allocation2 + $0x2f8] sm:$0xff]
        %v855 = vld [vmem:[#allocation2 + $0x300] sm:$0xff]
        %v856 = vld [vmem:[#allocation2 + $0x308] sm:$0xff]
        %v857 = vld [vmem:[#allocation2 + $0x310] sm:$0xff]
        %v858 = vld [vmem:[#allocation2 + $0x318] sm:$0xff]
        %v859 = vld [vmem:[#allocation2 + $0x320] sm:$0xff]
        %v860 = vld [vmem:[#allocation2 + $0x328] sm:$0xff]
        %v861 = vld [vmem:[#allocation2 + $0x330] sm:$0xff]
        %v862 = vld [vmem:[#allocation2 + $0x338] sm:$0xff]
        %v863 = vld [vmem:[#allocation2 + $0x340] sm:$0xff]
        %v864 = vld [vmem:[#allocation2 + $0x348] sm:$0xff]
        %v865 = vld [vmem:[#allocation2 + $0x350] sm:$0xff]
        %v866 = vld [vmem:[#allocation2 + $0x358] sm:$0xff]
        %v867 = vld [vmem:[#allocation2 + $0x360] sm:$0xff]
        %v868 = vld [vmem:[#allocation2 + $0x368] sm:$0xff]
        %v869 = vld [vmem:[#allocation2 + $0x370] sm:$0xff]
        %v870 = vld [vmem:[#allocation2 + $0x378] sm:$0xff]
        %v871 = vld [vmem:[#allocation2 + $0x380] sm:$0xff]
        %v872 = vld [vmem:[#allocation2 + $0x388] sm:$0xff]
        %v873 = vld [vmem:[#allocation2 + $0x390] sm:$0xff]
        %v874 = vld [vmem:[#allocation2 + $0x398] sm:$0xff]
        %v875 = vld [vmem:[#allocation2 + $0x3a0] sm:$0xff]
        %v876 = vld [vmem:[#allocation2 + $0x3a8] sm:$0xff]
        %v877 = vld [vmem:[#allocation2 + $0x3b0] sm:$0xff]
        %v878 = vld [vmem:[#allocation2 + $0x3b8] sm:$0xff]
        %v879 = vld [vmem:[#allocation2 + $0x3c0] sm:$0xff]
        %v880 = vld [vmem:[#allocation2 + $0x3c8] sm:$0xff]
        %v881 = vld [vmem:[#allocation2 + $0x3d0] sm:$0xff]
        %v882 = vld [vmem:[#allocation2 + $0x3d8] sm:$0xff]
        %v883 = vld [vmem:[#allocation2 + $0x3e0] sm:$0xff]
        %v884 = vld [vmem:[#allocation2 + $0x3e8] sm:$0xff]
        %v885 = vld [vmem:[#allocation2 + $0x3f0] sm:$0xff]
        %v886 = vld [vmem:[#allocation2 + $0x3f8] sm:$0xff]
        %v887 = vld [vmem:[%s216] sm:$0xff]
        %v888 = vld [vmem:[%s216 + $0x8] sm:$0xff]
        %v889 = vld [vmem:[%s216 + $0x10] sm:$0xff]
        %v890 = vld [vmem:[%s216 + $0x18] sm:$0xff]
        %v891 = vld [vmem:[%s216 + $0x20] sm:$0xff]
        %v892 = vld [vmem:[%s216 + $0x28] sm:$0xff]
        %v893 = vld [vmem:[%s216 + $0x30] sm:$0xff]
        %v894 = vld [vmem:[%s216 + $0x38] sm:$0xff]
        %v895 = vld [vmem:[%s216 + $0x40] sm:$0xff]
        %v896 = vld [vmem:[%s216 + $0x48] sm:$0xff]
        %v897 = vld [vmem:[%s216 + $0x50] sm:$0xff]
        %v898 = vld [vmem:[%s216 + $0x58] sm:$0xff]
        %v899 = vld [vmem:[%s216 + $0x60] sm:$0xff]
        %v900 = vld [vmem:[%s216 + $0x68] sm:$0xff]
        %v901 = vld [vmem:[%s216 + $0x70] sm:$0xff]
        %v902 = vld [vmem:[%s216 + $0x78] sm:$0xff]
        %v903 = vld [vmem:[%s216 + $0x80] sm:$0xff]
        %v904 = vld [vmem:[%s216 + $0x88] sm:$0xff]
        %v905 = vld [vmem:[%s216 + $0x90] sm:$0xff]
        %v906 = vld [vmem:[%s216 + $0x98] sm:$0xff]
        %v907 = vld [vmem:[%s216 + $0xa0] sm:$0xff]
        %v908 = vld [vmem:[%s216 + $0xa8] sm:$0xff]
        %v909 = vld [vmem:[%s216 + $0xb0] sm:$0xff]
        %v910 = vld [vmem:[%s216 + $0xb8] sm:$0xff]
        %v911 = vld [vmem:[%s216 + $0xc0] sm:$0xff]
        %v912 = vld [vmem:[%s216 + $0xc8] sm:$0xff]
        %v913 = vld [vmem:[%s216 + $0xd0] sm:$0xff]
        %v914 = vld [vmem:[%s216 + $0xd8] sm:$0xff]
        %v915 = vld [vmem:[%s216 + $0xe0] sm:$0xff]
        %v916 = vld [vmem:[%s216 + $0xe8] sm:$0xff]
        %v917 = vld [vmem:[%s216 + $0xf0] sm:$0xff]
        %v918 = vld [vmem:[%s216 + $0xf8] sm:$0xff]
        %v919 = vld [vmem:[%s216 + $0x100] sm:$0xff]
        %v920 = vld [vmem:[%s216 + $0x108] sm:$0xff]
        %v921 = vld [vmem:[%s216 + $0x110] sm:$0xff]
        %v922 = vld [vmem:[%s216 + $0x118] sm:$0xff]
        %v923 = vld [vmem:[%s216 + $0x120] sm:$0xff]
        %v924 = vld [vmem:[%s216 + $0x128] sm:$0xff]
        %v925 = vld [vmem:[%s216 + $0x130] sm:$0xff]
        %v926 = vld [vmem:[%s216 + $0x138] sm:$0xff]
        %v927 = vld [vmem:[%s216 + $0x140] sm:$0xff]
        %v928 = vld [vmem:[%s216 + $0x148] sm:$0xff]
        %v929 = vld [vmem:[%s216 + $0x150] sm:$0xff]
        %v930 = vld [vmem:[%s216 + $0x158] sm:$0xff]
        %v931 = vld [vmem:[%s216 + $0x160] sm:$0xff]
        %v932 = vld [vmem:[%s216 + $0x168] sm:$0xff]
        %v933 = vld [vmem:[%s216 + $0x170] sm:$0xff]
        %v934 = vld [vmem:[%s216 + $0x178] sm:$0xff]
        %v935 = vld [vmem:[%s216 + $0x180] sm:$0xff]
        %v936 = vld [vmem:[%s216 + $0x188] sm:$0xff]
        %v937 = vld [vmem:[%s216 + $0x190] sm:$0xff]
        %v938 = vld [vmem:[%s216 + $0x198] sm:$0xff]
        %v939 = vld [vmem:[%s216 + $0x1a0] sm:$0xff]
        %v940 = vld [vmem:[%s216 + $0x1a8] sm:$0xff]
        %v941 = vld [vmem:[%s216 + $0x1b0] sm:$0xff]
        %v942 = vld [vmem:[%s216 + $0x1b8] sm:$0xff]
        %v943 = vld [vmem:[%s216 + $0x1c0] sm:$0xff]
        %v944 = vld [vmem:[%s216 + $0x1c8] sm:$0xff]
        %v945 = vld [vmem:[%s216 + $0x1d0] sm:$0xff]
        %v946 = vld [vmem:[%s216 + $0x1d8] sm:$0xff]
        %v947 = vld [vmem:[%s216 + $0x1e0] sm:$0xff]
        %v948 = vld [vmem:[%s216 + $0x1e8] sm:$0xff]
        %v949 = vld [vmem:[%s216 + $0x1f0] sm:$0xff]
        %v950 = vld [vmem:[%s216 + $0x1f8] sm:$0xff]
        %v951 = vld [vmem:[%s207] sm:$0xff]
        %v952 = vld [vmem:[%s207 + $0x8] sm:$0xff]
        %v953 = vld [vmem:[%s207 + $0x10] sm:$0xff]
        %v954 = vld [vmem:[%s207 + $0x18] sm:$0xff]
        %v955 = vld [vmem:[%s207 + $0x20] sm:$0xff]
        %v956 = vld [vmem:[%s207 + $0x28] sm:$0xff]
        %v957 = vld [vmem:[%s207 + $0x30] sm:$0xff]
        %v958 = vld [vmem:[%s207 + $0x38] sm:$0xff]
        %v959 = vld [vmem:[%s207 + $0x40] sm:$0xff]
        %v960 = vld [vmem:[%s207 + $0x48] sm:$0xff]
        %v961 = vld [vmem:[%s207 + $0x50] sm:$0xff]
        %v962 = vld [vmem:[%s207 + $0x58] sm:$0xff]
        %v963 = vld [vmem:[%s207 + $0x60] sm:$0xff]
        %v964 = vld [vmem:[%s207 + $0x68] sm:$0xff]
        %v965 = vld [vmem:[%s207 + $0x70] sm:$0xff]
        %v966 = vld [vmem:[%s207 + $0x78] sm:$0xff]
        %v967 = vld [vmem:[%s207 + $0x80] sm:$0xff]
        %v968 = vld [vmem:[%s207 + $0x88] sm:$0xff]
        %v969 = vld [vmem:[%s207 + $0x90] sm:$0xff]
        %v970 = vld [vmem:[%s207 + $0x98] sm:$0xff]
        %v971 = vld [vmem:[%s207 + $0xa0] sm:$0xff]
        %v972 = vld [vmem:[%s207 + $0xa8] sm:$0xff]
        %v973 = vld [vmem:[%s207 + $0xb0] sm:$0xff]
        %v974 = vld [vmem:[%s207 + $0xb8] sm:$0xff]
        %v975 = vld [vmem:[%s207 + $0xc0] sm:$0xff]
        %v976 = vld [vmem:[%s207 + $0xc8] sm:$0xff]
        %v977 = vld [vmem:[%s207 + $0xd0] sm:$0xff]
        %v978 = vld [vmem:[%s207 + $0xd8] sm:$0xff]
        %v979 = vld [vmem:[%s207 + $0xe0] sm:$0xff]
        %v980 = vld [vmem:[%s207 + $0xe8] sm:$0xff]
        %v981 = vld [vmem:[%s207 + $0xf0] sm:$0xff]
        %v982 = vld [vmem:[%s207 + $0xf8] sm:$0xff]
        %v983 = vld [vmem:[%s207 + $0x100] sm:$0xff]
        %v984 = vld [vmem:[%s207 + $0x108] sm:$0xff]
        %v985 = vld [vmem:[%s207 + $0x110] sm:$0xff]
        %v986 = vld [vmem:[%s207 + $0x118] sm:$0xff]
        %v987 = vld [vmem:[%s207 + $0x120] sm:$0xff]
        %v988 = vld [vmem:[%s207 + $0x128] sm:$0xff]
        %v989 = vld [vmem:[%s207 + $0x130] sm:$0xff]
        %v990 = vld [vmem:[%s207 + $0x138] sm:$0xff]
        %v991 = vld [vmem:[%s207 + $0x140] sm:$0xff]
        %v992 = vld [vmem:[%s207 + $0x148] sm:$0xff]
        %v993 = vld [vmem:[%s207 + $0x150] sm:$0xff]
        %v994 = vld [vmem:[%s207 + $0x158] sm:$0xff]
        %v995 = vld [vmem:[%s207 + $0x160] sm:$0xff]
        %v996 = vld [vmem:[%s207 + $0x168] sm:$0xff]
        %v997 = vld [vmem:[%s207 + $0x170] sm:$0xff]
        %v998 = vld [vmem:[%s207 + $0x178] sm:$0xff]
        %v999 = vld [vmem:[%s207 + $0x180] sm:$0xff]
        %v1000 = vld [vmem:[%s207 + $0x188] sm:$0xff]
        %v1001 = vld [vmem:[%s207 + $0x190] sm:$0xff]
        %v1002 = vld [vmem:[%s207 + $0x198] sm:$0xff]
        %v1003 = vld [vmem:[%s207 + $0x1a0] sm:$0xff]
        %v1004 = vld [vmem:[%s207 + $0x1a8] sm:$0xff]
        %v1005 = vld [vmem:[%s207 + $0x1b0] sm:$0xff]
        %v1006 = vld [vmem:[%s207 + $0x1b8] sm:$0xff]
        %v1007 = vld [vmem:[%s207 + $0x1c0] sm:$0xff]
        %v1008 = vld [vmem:[%s207 + $0x1c8] sm:$0xff]
        %v1009 = vld [vmem:[%s207 + $0x1d0] sm:$0xff]
        %v1010 = vld [vmem:[%s207 + $0x1d8] sm:$0xff]
        %v1011 = vld [vmem:[%s207 + $0x1e0] sm:$0xff]
        %v1012 = vld [vmem:[%s207 + $0x1e8] sm:$0xff]
        %v1013 = vld [vmem:[%s207 + $0x1f0] sm:$0xff]
        %v1014 = vld [vmem:[%s207 + $0x1f8] sm:$0xff]
        %v1015 = vpack.c.bf16 %v953, %v951
        %v1016 = vpack.c.bf16 %v954, %v952
        %v1017 = vpack.c.bf16 %v957, %v955
        %v1018 = vpack.c.bf16 %v958, %v956
        %v1019 = vpack.c.bf16 %v961, %v959
        %v1020 = vpack.c.bf16 %v962, %v960
        %v1021 = vpack.c.bf16 %v965, %v963
        %v1022 = vpack.c.bf16 %v966, %v964
        %v1023 = vpack.c.bf16 %v969, %v967
        %v1024 = vpack.c.bf16 %v970, %v968
        %v1025 = vpack.c.bf16 %v973, %v971
        %v1026 = vpack.c.bf16 %v974, %v972
        %v1027 = vpack.c.bf16 %v977, %v975
        %v1028 = vpack.c.bf16 %v978, %v976
        %v1029 = vpack.c.bf16 %v981, %v979
        %v1030 = vpack.c.bf16 %v982, %v980
        %v1031 = vpack.c.bf16 %v985, %v983
        %v1032 = vpack.c.bf16 %v986, %v984
        %v1033 = vpack.c.bf16 %v989, %v987
        %v1034 = vpack.c.bf16 %v990, %v988
        %v1035 = vpack.c.bf16 %v993, %v991
        %v1036 = vpack.c.bf16 %v994, %v992
        %v1037 = vpack.c.bf16 %v997, %v995
        %v1038 = vpack.c.bf16 %v998, %v996
        %v1039 = vpack.c.bf16 %v1001, %v999
        %v1040 = vpack.c.bf16 %v1002, %v1000
        %v1041 = vpack.c.bf16 %v1005, %v1003
        %v1042 = vpack.c.bf16 %v1006, %v1004
        %v1043 = vpack.c.bf16 %v1009, %v1007
        %v1044 = vpack.c.bf16 %v1010, %v1008
        %v1045 = vpack.c.bf16 %v1013, %v1011
        %v1046 = vpack.c.bf16 %v1014, %v1012
        %v1111 = vunpack.c.l.b16 %v887
        %v1112 = vunpack.c.h.b16 %v887
        %v1113 = vunpack.c.l.b16 %v888
        %v1114 = vunpack.c.h.b16 %v888
        %v1115 = vunpack.c.l.b16 %v889
        %v1116 = vunpack.c.h.b16 %v889
        %v1117 = vunpack.c.l.b16 %v890
        %v1118 = vunpack.c.h.b16 %v890
        %v1119 = vunpack.c.l.b16 %v891
        %v1120 = vunpack.c.h.b16 %v891
        %v1121 = vunpack.c.l.b16 %v892
        %v1122 = vunpack.c.h.b16 %v892
        %v1123 = vunpack.c.l.b16 %v893
        %v1124 = vunpack.c.h.b16 %v893
        %v1125 = vunpack.c.l.b16 %v894
        %v1126 = vunpack.c.h.b16 %v894
        %v1127 = vunpack.c.l.b16 %v895
        %v1128 = vunpack.c.h.b16 %v895
        %v1129 = vunpack.c.l.b16 %v896
        %v1130 = vunpack.c.h.b16 %v896
        %v1131 = vunpack.c.l.b16 %v897
        %v1132 = vunpack.c.h.b16 %v897
        %v1133 = vunpack.c.l.b16 %v898
        %v1134 = vunpack.c.h.b16 %v898
        %v1135 = vunpack.c.l.b16 %v899
        %v1136 = vunpack.c.h.b16 %v899
        %v1137 = vunpack.c.l.b16 %v900
        %v1138 = vunpack.c.h.b16 %v900
        %v1139 = vunpack.c.l.b16 %v901
        %v1140 = vunpack.c.h.b16 %v901
        %v1141 = vunpack.c.l.b16 %v902
        %v1142 = vunpack.c.h.b16 %v902
        %v1143 = vunpack.c.l.b16 %v903
        %v1144 = vunpack.c.h.b16 %v903
        %v1145 = vunpack.c.l.b16 %v904
        %v1146 = vunpack.c.h.b16 %v904
        %v1147 = vunpack.c.l.b16 %v905
        %v1148 = vunpack.c.h.b16 %v905
        %v1149 = vunpack.c.l.b16 %v906
        %v1150 = vunpack.c.h.b16 %v906
        %v1151 = vunpack.c.l.b16 %v907
        %v1152 = vunpack.c.h.b16 %v907
        %v1153 = vunpack.c.l.b16 %v908
        %v1154 = vunpack.c.h.b16 %v908
        %v1155 = vunpack.c.l.b16 %v909
        %v1156 = vunpack.c.h.b16 %v909
        %v1157 = vunpack.c.l.b16 %v910
        %v1158 = vunpack.c.h.b16 %v910
        %v1159 = vunpack.c.l.b16 %v911
        %v1160 = vunpack.c.h.b16 %v911
        %v1161 = vunpack.c.l.b16 %v912
        %v1162 = vunpack.c.h.b16 %v912
        %v1163 = vunpack.c.l.b16 %v913
        %v1164 = vunpack.c.h.b16 %v913
        %v1165 = vunpack.c.l.b16 %v914
        %v1166 = vunpack.c.h.b16 %v914
        %v1167 = vunpack.c.l.b16 %v915
        %v1168 = vunpack.c.h.b16 %v915
        %v1169 = vunpack.c.l.b16 %v916
        %v1170 = vunpack.c.h.b16 %v916
        %v1171 = vunpack.c.l.b16 %v917
        %v1172 = vunpack.c.h.b16 %v917
        %v1173 = vunpack.c.l.b16 %v918
        %v1174 = vunpack.c.h.b16 %v918
        %v1175 = vunpack.c.l.b16 %v919
        %v1176 = vunpack.c.h.b16 %v919
        %v1177 = vunpack.c.l.b16 %v920
        %v1178 = vunpack.c.h.b16 %v920
        %v1179 = vunpack.c.l.b16 %v921
        %v1180 = vunpack.c.h.b16 %v921
        %v1181 = vunpack.c.l.b16 %v922
        %v1182 = vunpack.c.h.b16 %v922
        %v1183 = vunpack.c.l.b16 %v923
        %v1184 = vunpack.c.h.b16 %v923
        %v1185 = vunpack.c.l.b16 %v924
        %v1186 = vunpack.c.h.b16 %v924
        %v1187 = vunpack.c.l.b16 %v925
        %v1188 = vunpack.c.h.b16 %v925
        %v1189 = vunpack.c.l.b16 %v926
        %v1190 = vunpack.c.h.b16 %v926
        %v1191 = vunpack.c.l.b16 %v927
        %v1192 = vunpack.c.h.b16 %v927
        %v1193 = vunpack.c.l.b16 %v928
        %v1194 = vunpack.c.h.b16 %v928
        %v1195 = vunpack.c.l.b16 %v929
        %v1196 = vunpack.c.h.b16 %v929
        %v1197 = vunpack.c.l.b16 %v930
        %v1198 = vunpack.c.h.b16 %v930
        %v1199 = vunpack.c.l.b16 %v931
        %v1200 = vunpack.c.h.b16 %v931
        %v1201 = vunpack.c.l.b16 %v932
        %v1202 = vunpack.c.h.b16 %v932
        %v1203 = vunpack.c.l.b16 %v933
        %v1204 = vunpack.c.h.b16 %v933
        %v1205 = vunpack.c.l.b16 %v934
        %v1206 = vunpack.c.h.b16 %v934
        %v1207 = vunpack.c.l.b16 %v935
        %v1208 = vunpack.c.h.b16 %v935
        %v1209 = vunpack.c.l.b16 %v936
        %v1210 = vunpack.c.h.b16 %v936
        %v1211 = vunpack.c.l.b16 %v937
        %v1212 = vunpack.c.h.b16 %v937
        %v1213 = vunpack.c.l.b16 %v938
        %v1214 = vunpack.c.h.b16 %v938
        %v1215 = vunpack.c.l.b16 %v939
        %v1216 = vunpack.c.h.b16 %v939
        %v1217 = vunpack.c.l.b16 %v940
        %v1218 = vunpack.c.h.b16 %v940
        %v1219 = vunpack.c.l.b16 %v941
        %v1220 = vunpack.c.h.b16 %v941
        %v1221 = vunpack.c.l.b16 %v942
        %v1222 = vunpack.c.h.b16 %v942
        %v1223 = vunpack.c.l.b16 %v943
        %v1224 = vunpack.c.h.b16 %v943
        %v1225 = vunpack.c.l.b16 %v944
        %v1226 = vunpack.c.h.b16 %v944
        %v1227 = vunpack.c.l.b16 %v945
        %v1228 = vunpack.c.h.b16 %v945
        %v1229 = vunpack.c.l.b16 %v946
        %v1230 = vunpack.c.h.b16 %v946
        %v1231 = vunpack.c.l.b16 %v947
        %v1232 = vunpack.c.h.b16 %v947
        %v1233 = vunpack.c.l.b16 %v948
        %v1234 = vunpack.c.h.b16 %v948
        %v1235 = vunpack.c.l.b16 %v949
        %v1236 = vunpack.c.h.b16 %v949
        %v1237 = vunpack.c.l.b16 %v950
        %v1238 = vunpack.c.h.b16 %v950
        %v1239 = vpack.c.b16 %v1113, %v1111
        %v1240 = vpack.c.b16 %v1114, %v1112
        %v1241 = vpack.c.b16 %v1117, %v1115
        %v1242 = vpack.c.b16 %v1118, %v1116
        %v1243 = vpack.c.b16 %v1121, %v1119
        %v1244 = vpack.c.b16 %v1122, %v1120
        %v1245 = vpack.c.b16 %v1125, %v1123
        %v1246 = vpack.c.b16 %v1126, %v1124
        %v1247 = vpack.c.b16 %v1129, %v1127
        %v1248 = vpack.c.b16 %v1130, %v1128
        %v1249 = vpack.c.b16 %v1133, %v1131
        %v1250 = vpack.c.b16 %v1134, %v1132
        %v1251 = vpack.c.b16 %v1137, %v1135
        %v1252 = vpack.c.b16 %v1138, %v1136
        %v1253 = vpack.c.b16 %v1141, %v1139
        %v1254 = vpack.c.b16 %v1142, %v1140
        %v1255 = vpack.c.b16 %v1145, %v1143
        %v1256 = vpack.c.b16 %v1146, %v1144
        %v1257 = vpack.c.b16 %v1149, %v1147
        %v1258 = vpack.c.b16 %v1150, %v1148
        %v1259 = vpack.c.b16 %v1153, %v1151
        %v1260 = vpack.c.b16 %v1154, %v1152
        %v1261 = vpack.c.b16 %v1157, %v1155
        %v1262 = vpack.c.b16 %v1158, %v1156
        %v1263 = vpack.c.b16 %v1161, %v1159
        %v1264 = vpack.c.b16 %v1162, %v1160
        %v1265 = vpack.c.b16 %v1165, %v1163
        %v1266 = vpack.c.b16 %v1166, %v1164
        %v1267 = vpack.c.b16 %v1169, %v1167
        %v1268 = vpack.c.b16 %v1170, %v1168
        %v1269 = vpack.c.b16 %v1173, %v1171
        %v1270 = vpack.c.b16 %v1174, %v1172
        %v1271 = vpack.c.b16 %v1177, %v1175
        %v1272 = vpack.c.b16 %v1178, %v1176
        %v1273 = vpack.c.b16 %v1181, %v1179
        %v1274 = vpack.c.b16 %v1182, %v1180
        %v1275 = vpack.c.b16 %v1185, %v1183
        %v1276 = vpack.c.b16 %v1186, %v1184
        %v1277 = vpack.c.b16 %v1189, %v1187
        %v1278 = vpack.c.b16 %v1190, %v1188
        %v1279 = vpack.c.b16 %v1193, %v1191
        %v1280 = vpack.c.b16 %v1194, %v1192
        %v1281 = vpack.c.b16 %v1197, %v1195
        %v1282 = vpack.c.b16 %v1198, %v1196
        %v1283 = vpack.c.b16 %v1201, %v1199
        %v1284 = vpack.c.b16 %v1202, %v1200
        %v1285 = vpack.c.b16 %v1205, %v1203
        %v1286 = vpack.c.b16 %v1206, %v1204
        %v1287 = vpack.c.b16 %v1209, %v1207
        %v1288 = vpack.c.b16 %v1210, %v1208
        %v1289 = vpack.c.b16 %v1213, %v1211
        %v1290 = vpack.c.b16 %v1214, %v1212
        %v1291 = vpack.c.b16 %v1217, %v1215
        %v1292 = vpack.c.b16 %v1218, %v1216
        %v1293 = vpack.c.b16 %v1221, %v1219
        %v1294 = vpack.c.b16 %v1222, %v1220
        %v1295 = vpack.c.b16 %v1225, %v1223
        %v1296 = vpack.c.b16 %v1226, %v1224
        %v1297 = vpack.c.b16 %v1229, %v1227
        %v1298 = vpack.c.b16 %v1230, %v1228
        %v1299 = vpack.c.b16 %v1233, %v1231
        %v1300 = vpack.c.b16 %v1234, %v1232
        %v1301 = vpack.c.b16 %v1237, %v1235
        %v1302 = vpack.c.b16 %v1238, %v1236
        %1367 = vmatprep.subr.bf16.mxu0 %v1030
        %1368 = vmatpush1.bf16.xpose.msra.mxu0 %v1029
        %1369 = vmatprep.subr.bf16.mxu0 %v1028
        %1370 = vmatpush1.bf16.xpose.msra.mxu0 %v1027
        %1371 = vmatprep.subr.bf16.mxu0 %v1026
        %1372 = vmatpush1.bf16.xpose.msra.mxu0 %v1025
        %1373 = vmatprep.subr.bf16.mxu0 %v1024
        %1374 = vmatpush1.bf16.xpose.msra.mxu0 %v1023
        %1375 = vmatprep.subr.bf16.mxu0 %v1022
        %1376 = vmatpush1.bf16.xpose.msra.mxu0 %v1021
        %1377 = vmatprep.subr.bf16.mxu0 %v1020
        %1378 = vmatpush1.bf16.xpose.msra.mxu0 %v1019
        %1379 = vmatprep.subr.bf16.mxu0 %v1018
        %1380 = vmatpush1.bf16.xpose.msra.mxu0 %v1017
        %1381 = vmatprep.subr.bf16.mxu0 %v1016
        %1382 = vmatpush1.bf16.xpose.msra.mxu0 %v1015
        %1383 = vmatprep.subr.bf16.mxu0 %v1046
        %1384 = vmatpush2.bf16.xpose.msra.mxu0 %v1045
        %1385 = vmatprep.subr.bf16.mxu0 %v1044
        %1386 = vmatpush2.bf16.xpose.msra.mxu0 %v1043
        %1387 = vmatprep.subr.bf16.mxu0 %v1042
        %1388 = vmatpush2.bf16.xpose.msra.mxu0 %v1041
        %1389 = vmatprep.subr.bf16.mxu0 %v1040
        %1390 = vmatpush2.bf16.xpose.msra.mxu0 %v1039
        %1391 = vmatprep.subr.bf16.mxu0 %v1038
        %1392 = vmatpush2.bf16.xpose.msra.mxu0 %v1037
        %1393 = vmatprep.subr.bf16.mxu0 %v1036
        %1394 = vmatpush2.bf16.xpose.msra.mxu0 %v1035
        %1395 = vmatprep.subr.bf16.mxu0 %v1034
        %1396 = vmatpush2.bf16.xpose.msra.mxu0 %v1033
        %1397 = vmatprep.subr.bf16.mxu0 %v1032
        %1398 = vmatpush2.bf16.xpose.msra.mxu0 %v1031
        %1399 = vmatprep.mubr.bf16.mxu0 %v1240
        %1400 = vmatmul.mubr.bf16.gmra.mxu0 %v1239
        %v1401 = vpop.f32.mrf.mxu0
        %v1402 = vadd.f32 0.0, %v1401
        %v1403 = vpop.f32.mrf.mxu0
        %v1404 = vadd.f32 0.0, %v1403
        %v1405 = vpop.f32.mrf.mxu0
        %v1406 = vadd.f32 0.0, %v1405
        %v1407 = vpop.f32.mrf.mxu0
        %v1408 = vadd.f32 0.0, %v1407
        %1409 = vmatprep.mubr.bf16.mxu0 %v1242
        %1410 = vmatmul.mubr.bf16.gmra.mxu0 %v1241
        %v1411 = vpop.f32.mrf.mxu0
        %v1412 = vadd.f32 0.0, %v1411
        %v1413 = vpop.f32.mrf.mxu0
        %v1414 = vadd.f32 0.0, %v1413
        %v1415 = vpop.f32.mrf.mxu0
        %v1416 = vadd.f32 0.0, %v1415
        %v1417 = vpop.f32.mrf.mxu0
        %v1418 = vadd.f32 0.0, %v1417
        %1419 = vmatprep.mubr.bf16.mxu0 %v1244
        %1420 = vmatmul.mubr.bf16.gmra.mxu0 %v1243
        %v1421 = vpop.f32.mrf.mxu0
        %v1422 = vadd.f32 0.0, %v1421
        %v1423 = vpop.f32.mrf.mxu0
        %v1424 = vadd.f32 0.0, %v1423
        %v1425 = vpop.f32.mrf.mxu0
        %v1426 = vadd.f32 0.0, %v1425
        %v1427 = vpop.f32.mrf.mxu0
        %v1428 = vadd.f32 0.0, %v1427
        %1429 = vmatprep.mubr.bf16.mxu0 %v1246
        %1430 = vmatmul.mubr.bf16.gmra.mxu0 %v1245
        %v1431 = vpop.f32.mrf.mxu0
        %v1432 = vadd.f32 0.0, %v1431
        %v1433 = vpop.f32.mrf.mxu0
        %v1434 = vadd.f32 0.0, %v1433
        %v1435 = vpop.f32.mrf.mxu0
        %v1436 = vadd.f32 0.0, %v1435
        %v1437 = vpop.f32.mrf.mxu0
        %v1438 = vadd.f32 0.0, %v1437
        %1439 = vmatprep.mubr.bf16.mxu0 %v1248
        %1440 = vmatmul.mubr.bf16.gmra.mxu0 %v1247
        %v1441 = vpop.f32.mrf.mxu0
        %v1442 = vadd.f32 0.0, %v1441
        %v1443 = vpop.f32.mrf.mxu0
        %v1444 = vadd.f32 0.0, %v1443
        %v1445 = vpop.f32.mrf.mxu0
        %v1446 = vadd.f32 0.0, %v1445
        %v1447 = vpop.f32.mrf.mxu0
        %v1448 = vadd.f32 0.0, %v1447
        %1449 = vmatprep.mubr.bf16.mxu0 %v1250
        %1450 = vmatmul.mubr.bf16.gmra.mxu0 %v1249
        %v1451 = vpop.f32.mrf.mxu0
        %v1452 = vadd.f32 0.0, %v1451
        %v1453 = vpop.f32.mrf.mxu0
        %v1454 = vadd.f32 0.0, %v1453
        %v1455 = vpop.f32.mrf.mxu0
        %v1456 = vadd.f32 0.0, %v1455
        %v1457 = vpop.f32.mrf.mxu0
        %v1458 = vadd.f32 0.0, %v1457
        %1459 = vmatprep.mubr.bf16.mxu0 %v1252
        %1460 = vmatmul.mubr.bf16.gmra.mxu0 %v1251
        %v1461 = vpop.f32.mrf.mxu0
        %v1462 = vadd.f32 0.0, %v1461
        %v1463 = vpop.f32.mrf.mxu0
        %v1464 = vadd.f32 0.0, %v1463
        %v1465 = vpop.f32.mrf.mxu0
        %v1466 = vadd.f32 0.0, %v1465
        %v1467 = vpop.f32.mrf.mxu0
        %v1468 = vadd.f32 0.0, %v1467
        %1469 = vmatprep.mubr.bf16.mxu0 %v1254
        %1470 = vmatmul.mubr.bf16.gmra.mxu0 %v1253
        %v1471 = vpop.f32.mrf.mxu0
        %v1472 = vadd.f32 0.0, %v1471
        %v1473 = vpop.f32.mrf.mxu0
        %v1474 = vadd.f32 0.0, %v1473
        %v1475 = vpop.f32.mrf.mxu0
        %v1476 = vadd.f32 0.0, %v1475
        %v1477 = vpop.f32.mrf.mxu0
        %v1478 = vadd.f32 0.0, %v1477
        %1479 = vmatprep.mubr.bf16.mxu0 %v1256
        %1480 = vmatmul.mubr.bf16.gmra.mxu0 %v1255
        %v1481 = vpop.f32.mrf.mxu0
        %v1482 = vadd.f32 0.0, %v1481
        %v1483 = vpop.f32.mrf.mxu0
        %v1484 = vadd.f32 0.0, %v1483
        %v1485 = vpop.f32.mrf.mxu0
        %v1486 = vadd.f32 0.0, %v1485
        %v1487 = vpop.f32.mrf.mxu0
        %v1488 = vadd.f32 0.0, %v1487
        %1489 = vmatprep.mubr.bf16.mxu0 %v1258
        %1490 = vmatmul.mubr.bf16.gmra.mxu0 %v1257
        %v1491 = vpop.f32.mrf.mxu0
        %v1492 = vadd.f32 0.0, %v1491
        %v1493 = vpop.f32.mrf.mxu0
        %v1494 = vadd.f32 0.0, %v1493
        %v1495 = vpop.f32.mrf.mxu0
        %v1496 = vadd.f32 0.0, %v1495
        %v1497 = vpop.f32.mrf.mxu0
        %v1498 = vadd.f32 0.0, %v1497
        %1499 = vmatprep.mubr.bf16.mxu0 %v1260
        %1500 = vmatmul.mubr.bf16.gmra.mxu0 %v1259
        %v1501 = vpop.f32.mrf.mxu0
        %v1502 = vadd.f32 0.0, %v1501
        %v1503 = vpop.f32.mrf.mxu0
        %v1504 = vadd.f32 0.0, %v1503
        %v1505 = vpop.f32.mrf.mxu0
        %v1506 = vadd.f32 0.0, %v1505
        %v1507 = vpop.f32.mrf.mxu0
        %v1508 = vadd.f32 0.0, %v1507
        %1509 = vmatprep.mubr.bf16.mxu0 %v1262
        %1510 = vmatmul.mubr.bf16.gmra.mxu0 %v1261
        %v1511 = vpop.f32.mrf.mxu0
        %v1512 = vadd.f32 0.0, %v1511
        %v1513 = vpop.f32.mrf.mxu0
        %v1514 = vadd.f32 0.0, %v1513
        %v1515 = vpop.f32.mrf.mxu0
        %v1516 = vadd.f32 0.0, %v1515
        %v1517 = vpop.f32.mrf.mxu0
        %v1518 = vadd.f32 0.0, %v1517
        %1519 = vmatprep.mubr.bf16.mxu0 %v1264
        %1520 = vmatmul.mubr.bf16.gmra.mxu0 %v1263
        %v1521 = vpop.f32.mrf.mxu0
        %v1522 = vadd.f32 0.0, %v1521
        %v1523 = vpop.f32.mrf.mxu0
        %v1524 = vadd.f32 0.0, %v1523
        %v1525 = vpop.f32.mrf.mxu0
        %v1526 = vadd.f32 0.0, %v1525
        %v1527 = vpop.f32.mrf.mxu0
        %v1528 = vadd.f32 0.0, %v1527
        %1529 = vmatprep.mubr.bf16.mxu0 %v1266
        %1530 = vmatmul.mubr.bf16.gmra.mxu0 %v1265
        %v1531 = vpop.f32.mrf.mxu0
        %v1532 = vadd.f32 0.0, %v1531
        %v1533 = vpop.f32.mrf.mxu0
        %v1534 = vadd.f32 0.0, %v1533
        %v1535 = vpop.f32.mrf.mxu0
        %v1536 = vadd.f32 0.0, %v1535
        %v1537 = vpop.f32.mrf.mxu0
        %v1538 = vadd.f32 0.0, %v1537
        %1539 = vmatprep.mubr.bf16.mxu0 %v1268
        %1540 = vmatmul.mubr.bf16.gmra.mxu0 %v1267
        %v1541 = vpop.f32.mrf.mxu0
        %v1542 = vadd.f32 0.0, %v1541
        %v1543 = vpop.f32.mrf.mxu0
        %v1544 = vadd.f32 0.0, %v1543
        %v1545 = vpop.f32.mrf.mxu0
        %v1546 = vadd.f32 0.0, %v1545
        %v1547 = vpop.f32.mrf.mxu0
        %v1548 = vadd.f32 0.0, %v1547
        %1549 = vmatprep.mubr.bf16.mxu0 %v1270
        %1550 = vmatmul.mubr.bf16.gmra.mxu0 %v1269
        %v1551 = vpop.f32.mrf.mxu0
        %v1552 = vadd.f32 0.0, %v1551
        %v1553 = vpop.f32.mrf.mxu0
        %v1554 = vadd.f32 0.0, %v1553
        %v1555 = vpop.f32.mrf.mxu0
        %v1556 = vadd.f32 0.0, %v1555
        %v1557 = vpop.f32.mrf.mxu0
        %v1558 = vadd.f32 0.0, %v1557
        %1559 = vmatprep.mubr.bf16.mxu0 %v1272
        %1560 = vmatmul.mubr.bf16.gmra.mxu0 %v1271
        %v1561 = vpop.f32.mrf.mxu0
        %v1562 = vadd.f32 0.0, %v1561
        %v1563 = vpop.f32.mrf.mxu0
        %v1564 = vadd.f32 0.0, %v1563
        %v1565 = vpop.f32.mrf.mxu0
        %v1566 = vadd.f32 0.0, %v1565
        %v1567 = vpop.f32.mrf.mxu0
        %v1568 = vadd.f32 0.0, %v1567
        %1569 = vmatprep.mubr.bf16.mxu0 %v1274
        %1570 = vmatmul.mubr.bf16.gmra.mxu0 %v1273
        %v1571 = vpop.f32.mrf.mxu0
        %v1572 = vadd.f32 0.0, %v1571
        %v1573 = vpop.f32.mrf.mxu0
        %v1574 = vadd.f32 0.0, %v1573
        %v1575 = vpop.f32.mrf.mxu0
        %v1576 = vadd.f32 0.0, %v1575
        %v1577 = vpop.f32.mrf.mxu0
        %v1578 = vadd.f32 0.0, %v1577
        %1579 = vmatprep.mubr.bf16.mxu0 %v1276
        %1580 = vmatmul.mubr.bf16.gmra.mxu0 %v1275
        %v1581 = vpop.f32.mrf.mxu0
        %v1582 = vadd.f32 0.0, %v1581
        %v1583 = vpop.f32.mrf.mxu0
        %v1584 = vadd.f32 0.0, %v1583
        %v1585 = vpop.f32.mrf.mxu0
        %v1586 = vadd.f32 0.0, %v1585
        %v1587 = vpop.f32.mrf.mxu0
        %v1588 = vadd.f32 0.0, %v1587
        %1589 = vmatprep.mubr.bf16.mxu0 %v1278
        %1590 = vmatmul.mubr.bf16.gmra.mxu0 %v1277
        %v1591 = vpop.f32.mrf.mxu0
        %v1592 = vadd.f32 0.0, %v1591
        %v1593 = vpop.f32.mrf.mxu0
        %v1594 = vadd.f32 0.0, %v1593
        %v1595 = vpop.f32.mrf.mxu0
        %v1596 = vadd.f32 0.0, %v1595
        %v1597 = vpop.f32.mrf.mxu0
        %v1598 = vadd.f32 0.0, %v1597
        %1599 = vmatprep.mubr.bf16.mxu0 %v1280
        %1600 = vmatmul.mubr.bf16.gmra.mxu0 %v1279
        %v1601 = vpop.f32.mrf.mxu0
        %v1602 = vadd.f32 0.0, %v1601
        %v1603 = vpop.f32.mrf.mxu0
        %v1604 = vadd.f32 0.0, %v1603
        %v1605 = vpop.f32.mrf.mxu0
        %v1606 = vadd.f32 0.0, %v1605
        %v1607 = vpop.f32.mrf.mxu0
        %v1608 = vadd.f32 0.0, %v1607
        %1609 = vmatprep.mubr.bf16.mxu0 %v1282
        %1610 = vmatmul.mubr.bf16.gmra.mxu0 %v1281
        %v1611 = vpop.f32.mrf.mxu0
        %v1612 = vadd.f32 0.0, %v1611
        %v1613 = vpop.f32.mrf.mxu0
        %v1614 = vadd.f32 0.0, %v1613
        %v1615 = vpop.f32.mrf.mxu0
        %v1616 = vadd.f32 0.0, %v1615
        %v1617 = vpop.f32.mrf.mxu0
        %v1618 = vadd.f32 0.0, %v1617
        %1619 = vmatprep.mubr.bf16.mxu0 %v1284
        %1620 = vmatmul.mubr.bf16.gmra.mxu0 %v1283
        %v1621 = vpop.f32.mrf.mxu0
        %v1622 = vadd.f32 0.0, %v1621
        %v1623 = vpop.f32.mrf.mxu0
        %v1624 = vadd.f32 0.0, %v1623
        %v1625 = vpop.f32.mrf.mxu0
        %v1626 = vadd.f32 0.0, %v1625
        %v1627 = vpop.f32.mrf.mxu0
        %v1628 = vadd.f32 0.0, %v1627
        %1629 = vmatprep.mubr.bf16.mxu0 %v1286
        %1630 = vmatmul.mubr.bf16.gmra.mxu0 %v1285
        %v1631 = vpop.f32.mrf.mxu0
        %v1632 = vadd.f32 0.0, %v1631
        %v1633 = vpop.f32.mrf.mxu0
        %v1634 = vadd.f32 0.0, %v1633
        %v1635 = vpop.f32.mrf.mxu0
        %v1636 = vadd.f32 0.0, %v1635
        %v1637 = vpop.f32.mrf.mxu0
        %v1638 = vadd.f32 0.0, %v1637
        %1639 = vmatprep.mubr.bf16.mxu0 %v1288
        %1640 = vmatmul.mubr.bf16.gmra.mxu0 %v1287
        %v1641 = vpop.f32.mrf.mxu0
        %v1642 = vadd.f32 0.0, %v1641
        %v1643 = vpop.f32.mrf.mxu0
        %v1644 = vadd.f32 0.0, %v1643
        %v1645 = vpop.f32.mrf.mxu0
        %v1646 = vadd.f32 0.0, %v1645
        %v1647 = vpop.f32.mrf.mxu0
        %v1648 = vadd.f32 0.0, %v1647
        %1649 = vmatprep.mubr.bf16.mxu0 %v1290
        %1650 = vmatmul.mubr.bf16.gmra.mxu0 %v1289
        %v1651 = vpop.f32.mrf.mxu0
        %v1652 = vadd.f32 0.0, %v1651
        %v1653 = vpop.f32.mrf.mxu0
        %v1654 = vadd.f32 0.0, %v1653
        %v1655 = vpop.f32.mrf.mxu0
        %v1656 = vadd.f32 0.0, %v1655
        %v1657 = vpop.f32.mrf.mxu0
        %v1658 = vadd.f32 0.0, %v1657
        %1659 = vmatprep.mubr.bf16.mxu0 %v1292
        %1660 = vmatmul.mubr.bf16.gmra.mxu0 %v1291
        %v1661 = vpop.f32.mrf.mxu0
        %v1662 = vadd.f32 0.0, %v1661
        %v1663 = vpop.f32.mrf.mxu0
        %v1664 = vadd.f32 0.0, %v1663
        %v1665 = vpop.f32.mrf.mxu0
        %v1666 = vadd.f32 0.0, %v1665
        %v1667 = vpop.f32.mrf.mxu0
        %v1668 = vadd.f32 0.0, %v1667
        %1669 = vmatprep.mubr.bf16.mxu0 %v1294
        %1670 = vmatmul.mubr.bf16.gmra.mxu0 %v1293
        %v1671 = vpop.f32.mrf.mxu0
        %v1672 = vadd.f32 0.0, %v1671
        %v1673 = vpop.f32.mrf.mxu0
        %v1674 = vadd.f32 0.0, %v1673
        %v1675 = vpop.f32.mrf.mxu0
        %v1676 = vadd.f32 0.0, %v1675
        %v1677 = vpop.f32.mrf.mxu0
        %v1678 = vadd.f32 0.0, %v1677
        %1679 = vmatprep.mubr.bf16.mxu0 %v1296
        %1680 = vmatmul.mubr.bf16.gmra.mxu0 %v1295
        %v1681 = vpop.f32.mrf.mxu0
        %v1682 = vadd.f32 0.0, %v1681
        %v1683 = vpop.f32.mrf.mxu0
        %v1684 = vadd.f32 0.0, %v1683
        %v1685 = vpop.f32.mrf.mxu0
        %v1686 = vadd.f32 0.0, %v1685
        %v1687 = vpop.f32.mrf.mxu0
        %v1688 = vadd.f32 0.0, %v1687
        %1689 = vmatprep.mubr.bf16.mxu0 %v1298
        %1690 = vmatmul.mubr.bf16.gmra.mxu0 %v1297
        %v1691 = vpop.f32.mrf.mxu0
        %v1692 = vadd.f32 0.0, %v1691
        %v1693 = vpop.f32.mrf.mxu0
        %v1694 = vadd.f32 0.0, %v1693
        %v1695 = vpop.f32.mrf.mxu0
        %v1696 = vadd.f32 0.0, %v1695
        %v1697 = vpop.f32.mrf.mxu0
        %v1698 = vadd.f32 0.0, %v1697
        %1699 = vmatprep.mubr.bf16.mxu0 %v1300
        %1700 = vmatmul.mubr.bf16.gmra.mxu0 %v1299
        %v1701 = vpop.f32.mrf.mxu0
        %v1702 = vadd.f32 0.0, %v1701
        %v1703 = vpop.f32.mrf.mxu0
        %v1704 = vadd.f32 0.0, %v1703
        %v1705 = vpop.f32.mrf.mxu0
        %v1706 = vadd.f32 0.0, %v1705
        %v1707 = vpop.f32.mrf.mxu0
        %v1708 = vadd.f32 0.0, %v1707
        %1709 = vmatprep.mubr.bf16.mxu0 %v1302
        %1710 = vmatmul.mubr.bf16.gmra.mxu0 %v1301
        %v1711 = vpop.f32.mrf.mxu0
        %v1712 = vadd.f32 0.0, %v1711
        %v1713 = vpop.f32.mrf.mxu0
        %v1714 = vadd.f32 0.0, %v1713
        %v1715 = vpop.f32.mrf.mxu0
        %v1716 = vadd.f32 0.0, %v1715
        %v1717 = vpop.f32.mrf.mxu0
        %v1718 = vadd.f32 0.0, %v1717
        %1719 = vdwg.mxu0
        %v1720 = vadd.f32 %v759, %v1402
        %v1721 = vadd.f32 %v760, %v1404
        %v1722 = vadd.f32 %v761, %v1406
        %v1723 = vadd.f32 %v762, %v1408
        %v1724 = vadd.f32 %v763, %v1412
        %v1725 = vadd.f32 %v764, %v1414
        %v1726 = vadd.f32 %v765, %v1416
        %v1727 = vadd.f32 %v766, %v1418
        %v1728 = vadd.f32 %v767, %v1422
        %v1729 = vadd.f32 %v768, %v1424
        %v1730 = vadd.f32 %v769, %v1426
        %v1731 = vadd.f32 %v770, %v1428
        %v1732 = vadd.f32 %v771, %v1432
        %v1733 = vadd.f32 %v772, %v1434
        %v1734 = vadd.f32 %v773, %v1436
        %v1735 = vadd.f32 %v774, %v1438
        %v1736 = vadd.f32 %v775, %v1442
        %v1737 = vadd.f32 %v776, %v1444
        %v1738 = vadd.f32 %v777, %v1446
        %v1739 = vadd.f32 %v778, %v1448
        %v1740 = vadd.f32 %v779, %v1452
        %v1741 = vadd.f32 %v780, %v1454
        %v1742 = vadd.f32 %v781, %v1456
        %v1743 = vadd.f32 %v782, %v1458
        %v1744 = vadd.f32 %v783, %v1462
        %v1745 = vadd.f32 %v784, %v1464
        %v1746 = vadd.f32 %v785, %v1466
        %v1747 = vadd.f32 %v786, %v1468
        %v1748 = vadd.f32 %v787, %v1472
        %v1749 = vadd.f32 %v788, %v1474
        %v1750 = vadd.f32 %v789, %v1476
        %v1751 = vadd.f32 %v790, %v1478
        %v1752 = vadd.f32 %v791, %v1482
        %v1753 = vadd.f32 %v792, %v1484
        %v1754 = vadd.f32 %v793, %v1486
        %v1755 = vadd.f32 %v794, %v1488
        %v1756 = vadd.f32 %v795, %v1492
        %v1757 = vadd.f32 %v796, %v1494
        %v1758 = vadd.f32 %v797, %v1496
        %v1759 = vadd.f32 %v798, %v1498
        %v1760 = vadd.f32 %v799, %v1502
        %v1761 = vadd.f32 %v800, %v1504
        %v1762 = vadd.f32 %v801, %v1506
        %v1763 = vadd.f32 %v802, %v1508
        %v1764 = vadd.f32 %v803, %v1512
        %v1765 = vadd.f32 %v804, %v1514
        %v1766 = vadd.f32 %v805, %v1516
        %v1767 = vadd.f32 %v806, %v1518
        %v1768 = vadd.f32 %v807, %v1522
        %v1769 = vadd.f32 %v808, %v1524
        %v1770 = vadd.f32 %v809, %v1526
        %v1771 = vadd.f32 %v810, %v1528
        %v1772 = vadd.f32 %v811, %v1532
        %v1773 = vadd.f32 %v812, %v1534
        %v1774 = vadd.f32 %v813, %v1536
        %v1775 = vadd.f32 %v814, %v1538
        %v1776 = vadd.f32 %v815, %v1542
        %v1777 = vadd.f32 %v816, %v1544
        %v1778 = vadd.f32 %v817, %v1546
        %v1779 = vadd.f32 %v818, %v1548
        %v1780 = vadd.f32 %v819, %v1552
        %v1781 = vadd.f32 %v820, %v1554
        %v1782 = vadd.f32 %v821, %v1556
        %v1783 = vadd.f32 %v822, %v1558
        %v1784 = vadd.f32 %v823, %v1562
        %v1785 = vadd.f32 %v824, %v1564
        %v1786 = vadd.f32 %v825, %v1566
        %v1787 = vadd.f32 %v826, %v1568
        %v1788 = vadd.f32 %v827, %v1572
        %v1789 = vadd.f32 %v828, %v1574
        %v1790 = vadd.f32 %v829, %v1576
        %v1791 = vadd.f32 %v830, %v1578
        %v1792 = vadd.f32 %v831, %v1582
        %v1793 = vadd.f32 %v832, %v1584
        %v1794 = vadd.f32 %v833, %v1586
        %v1795 = vadd.f32 %v834, %v1588
        %v1796 = vadd.f32 %v835, %v1592
        %v1797 = vadd.f32 %v836, %v1594
        %v1798 = vadd.f32 %v837, %v1596
        %v1799 = vadd.f32 %v838, %v1598
        %v1800 = vadd.f32 %v839, %v1602
        %v1801 = vadd.f32 %v840, %v1604
        %v1802 = vadd.f32 %v841, %v1606
        %v1803 = vadd.f32 %v842, %v1608
        %v1804 = vadd.f32 %v843, %v1612
        %v1805 = vadd.f32 %v844, %v1614
        %v1806 = vadd.f32 %v845, %v1616
        %v1807 = vadd.f32 %v846, %v1618
        %v1808 = vadd.f32 %v847, %v1622
        %v1809 = vadd.f32 %v848, %v1624
        %v1810 = vadd.f32 %v849, %v1626
        %v1811 = vadd.f32 %v850, %v1628
        %v1812 = vadd.f32 %v851, %v1632
        %v1813 = vadd.f32 %v852, %v1634
        %v1814 = vadd.f32 %v853, %v1636
        %v1815 = vadd.f32 %v854, %v1638
        %v1816 = vadd.f32 %v855, %v1642
        %v1817 = vadd.f32 %v856, %v1644
        %v1818 = vadd.f32 %v857, %v1646
        %v1819 = vadd.f32 %v858, %v1648
        %v1820 = vadd.f32 %v859, %v1652
        %v1821 = vadd.f32 %v860, %v1654
        %v1822 = vadd.f32 %v861, %v1656
        %v1823 = vadd.f32 %v862, %v1658
        %v1824 = vadd.f32 %v863, %v1662
        %v1825 = vadd.f32 %v864, %v1664
        %v1826 = vadd.f32 %v865, %v1666
        %v1827 = vadd.f32 %v866, %v1668
        %v1828 = vadd.f32 %v867, %v1672
        %v1829 = vadd.f32 %v868, %v1674
        %v1830 = vadd.f32 %v869, %v1676
        %v1831 = vadd.f32 %v870, %v1678
        %v1832 = vadd.f32 %v871, %v1682
        %v1833 = vadd.f32 %v872, %v1684
        %v1834 = vadd.f32 %v873, %v1686
        %v1835 = vadd.f32 %v874, %v1688
        %v1836 = vadd.f32 %v875, %v1692
        %v1837 = vadd.f32 %v876, %v1694
        %v1838 = vadd.f32 %v877, %v1696
        %v1839 = vadd.f32 %v878, %v1698
        %v1840 = vadd.f32 %v879, %v1702
        %v1841 = vadd.f32 %v880, %v1704
        %v1842 = vadd.f32 %v881, %v1706
        %v1843 = vadd.f32 %v882, %v1708
        %v1844 = vadd.f32 %v883, %v1712
        %v1845 = vadd.f32 %v884, %v1714
        %v1846 = vadd.f32 %v885, %v1716
        %v1847 = vadd.f32 %v886, %v1718
        %1848 = vst [vmem:[#allocation2] sm:$0xff] %v1720
        %1849 = vst [vmem:[#allocation2 + $0x8] sm:$0xff] %v1721
        %1850 = vst [vmem:[#allocation2 + $0x10] sm:$0xff] %v1722
        %1851 = vst [vmem:[#allocation2 + $0x18] sm:$0xff] %v1723
        %1852 = vst [vmem:[#allocation2 + $0x20] sm:$0xff] %v1724
        %1853 = vst [vmem:[#allocation2 + $0x28] sm:$0xff] %v1725
        %1854 = vst [vmem:[#allocation2 + $0x30] sm:$0xff] %v1726
        %1855 = vst [vmem:[#allocation2 + $0x38] sm:$0xff] %v1727
        %1856 = vst [vmem:[#allocation2 + $0x40] sm:$0xff] %v1728
        %1857 = vst [vmem:[#allocation2 + $0x48] sm:$0xff] %v1729
        %1858 = vst [vmem:[#allocation2 + $0x50] sm:$0xff] %v1730
        %1859 = vst [vmem:[#allocation2 + $0x58] sm:$0xff] %v1731
        %1860 = vst [vmem:[#allocation2 + $0x60] sm:$0xff] %v1732
        %1861 = vst [vmem:[#allocation2 + $0x68] sm:$0xff] %v1733
        %1862 = vst [vmem:[#allocation2 + $0x70] sm:$0xff] %v1734
        %1863 = vst [vmem:[#allocation2 + $0x78] sm:$0xff] %v1735
        %1864 = vst [vmem:[#allocation2 + $0x80] sm:$0xff] %v1736
        %1865 = vst [vmem:[#allocation2 + $0x88] sm:$0xff] %v1737
        %1866 = vst [vmem:[#allocation2 + $0x90] sm:$0xff] %v1738
        %1867 = vst [vmem:[#allocation2 + $0x98] sm:$0xff] %v1739
        %1868 = vst [vmem:[#allocation2 + $0xa0] sm:$0xff] %v1740
        %1869 = vst [vmem:[#allocation2 + $0xa8] sm:$0xff] %v1741
        %1870 = vst [vmem:[#allocation2 + $0xb0] sm:$0xff] %v1742
        %1871 = vst [vmem:[#allocation2 + $0xb8] sm:$0xff] %v1743
        %1872 = vst [vmem:[#allocation2 + $0xc0] sm:$0xff] %v1744
        %1873 = vst [vmem:[#allocation2 + $0xc8] sm:$0xff] %v1745
        %1874 = vst [vmem:[#allocation2 + $0xd0] sm:$0xff] %v1746
        %1875 = vst [vmem:[#allocation2 + $0xd8] sm:$0xff] %v1747
        %1876 = vst [vmem:[#allocation2 + $0xe0] sm:$0xff] %v1748
        %1877 = vst [vmem:[#allocation2 + $0xe8] sm:$0xff] %v1749
        %1878 = vst [vmem:[#allocation2 + $0xf0] sm:$0xff] %v1750
        %1879 = vst [vmem:[#allocation2 + $0xf8] sm:$0xff] %v1751
        %1880 = vst [vmem:[#allocation2 + $0x100] sm:$0xff] %v1752
        %1881 = vst [vmem:[#allocation2 + $0x108] sm:$0xff] %v1753
        %1882 = vst [vmem:[#allocation2 + $0x110] sm:$0xff] %v1754
        %1883 = vst [vmem:[#allocation2 + $0x118] sm:$0xff] %v1755
        %1884 = vst [vmem:[#allocation2 + $0x120] sm:$0xff] %v1756
        %1885 = vst [vmem:[#allocation2 + $0x128] sm:$0xff] %v1757
        %1886 = vst [vmem:[#allocation2 + $0x130] sm:$0xff] %v1758
        %1887 = vst [vmem:[#allocation2 + $0x138] sm:$0xff] %v1759
        %1888 = vst [vmem:[#allocation2 + $0x140] sm:$0xff] %v1760
        %1889 = vst [vmem:[#allocation2 + $0x148] sm:$0xff] %v1761
        %1890 = vst [vmem:[#allocation2 + $0x150] sm:$0xff] %v1762
        %1891 = vst [vmem:[#allocation2 + $0x158] sm:$0xff] %v1763
        %1892 = vst [vmem:[#allocation2 + $0x160] sm:$0xff] %v1764
        %1893 = vst [vmem:[#allocation2 + $0x168] sm:$0xff] %v1765
        %1894 = vst [vmem:[#allocation2 + $0x170] sm:$0xff] %v1766
        %1895 = vst [vmem:[#allocation2 + $0x178] sm:$0xff] %v1767
        %1896 = vst [vmem:[#allocation2 + $0x180] sm:$0xff] %v1768
        %1897 = vst [vmem:[#allocation2 + $0x188] sm:$0xff] %v1769
        %1898 = vst [vmem:[#allocation2 + $0x190] sm:$0xff] %v1770
        %1899 = vst [vmem:[#allocation2 + $0x198] sm:$0xff] %v1771
        %1900 = vst [vmem:[#allocation2 + $0x1a0] sm:$0xff] %v1772
        %1901 = vst [vmem:[#allocation2 + $0x1a8] sm:$0xff] %v1773
        %1902 = vst [vmem:[#allocation2 + $0x1b0] sm:$0xff] %v1774
        %1903 = vst [vmem:[#allocation2 + $0x1b8] sm:$0xff] %v1775
        %1904 = vst [vmem:[#allocation2 + $0x1c0] sm:$0xff] %v1776
        %1905 = vst [vmem:[#allocation2 + $0x1c8] sm:$0xff] %v1777
        %1906 = vst [vmem:[#allocation2 + $0x1d0] sm:$0xff] %v1778
        %1907 = vst [vmem:[#allocation2 + $0x1d8] sm:$0xff] %v1779
        %1908 = vst [vmem:[#allocation2 + $0x1e0] sm:$0xff] %v1780
        %1909 = vst [vmem:[#allocation2 + $0x1e8] sm:$0xff] %v1781
        %1910 = vst [vmem:[#allocation2 + $0x1f0] sm:$0xff] %v1782
        %1911 = vst [vmem:[#allocation2 + $0x1f8] sm:$0xff] %v1783
        %1912 = vst [vmem:[#allocation2 + $0x200] sm:$0xff] %v1784
        %1913 = vst [vmem:[#allocation2 + $0x208] sm:$0xff] %v1785
        %1914 = vst [vmem:[#allocation2 + $0x210] sm:$0xff] %v1786
        %1915 = vst [vmem:[#allocation2 + $0x218] sm:$0xff] %v1787
        %1916 = vst [vmem:[#allocation2 + $0x220] sm:$0xff] %v1788
        %1917 = vst [vmem:[#allocation2 + $0x228] sm:$0xff] %v1789
        %1918 = vst [vmem:[#allocation2 + $0x230] sm:$0xff] %v1790
        %1919 = vst [vmem:[#allocation2 + $0x238] sm:$0xff] %v1791
        %1920 = vst [vmem:[#allocation2 + $0x240] sm:$0xff] %v1792
        %1921 = vst [vmem:[#allocation2 + $0x248] sm:$0xff] %v1793
        %1922 = vst [vmem:[#allocation2 + $0x250] sm:$0xff] %v1794
        %1923 = vst [vmem:[#allocation2 + $0x258] sm:$0xff] %v1795
        %1924 = vst [vmem:[#allocation2 + $0x260] sm:$0xff] %v1796
        %1925 = vst [vmem:[#allocation2 + $0x268] sm:$0xff] %v1797
        %1926 = vst [vmem:[#allocation2 + $0x270] sm:$0xff] %v1798
        %1927 = vst [vmem:[#allocation2 + $0x278] sm:$0xff] %v1799
        %1928 = vst [vmem:[#allocation2 + $0x280] sm:$0xff] %v1800
        %1929 = vst [vmem:[#allocation2 + $0x288] sm:$0xff] %v1801
        %1930 = vst [vmem:[#allocation2 + $0x290] sm:$0xff] %v1802
        %1931 = vst [vmem:[#allocation2 + $0x298] sm:$0xff] %v1803
        %1932 = vst [vmem:[#allocation2 + $0x2a0] sm:$0xff] %v1804
        %1933 = vst [vmem:[#allocation2 + $0x2a8] sm:$0xff] %v1805
        %1934 = vst [vmem:[#allocation2 + $0x2b0] sm:$0xff] %v1806
        %1935 = vst [vmem:[#allocation2 + $0x2b8] sm:$0xff] %v1807
        %1936 = vst [vmem:[#allocation2 + $0x2c0] sm:$0xff] %v1808
        %1937 = vst [vmem:[#allocation2 + $0x2c8] sm:$0xff] %v1809
        %1938 = vst [vmem:[#allocation2 + $0x2d0] sm:$0xff] %v1810
        %1939 = vst [vmem:[#allocation2 + $0x2d8] sm:$0xff] %v1811
        %1940 = vst [vmem:[#allocation2 + $0x2e0] sm:$0xff] %v1812
        %1941 = vst [vmem:[#allocation2 + $0x2e8] sm:$0xff] %v1813
        %1942 = vst [vmem:[#allocation2 + $0x2f0] sm:$0xff] %v1814
        %1943 = vst [vmem:[#allocation2 + $0x2f8] sm:$0xff] %v1815
        %1944 = vst [vmem:[#allocation2 + $0x300] sm:$0xff] %v1816
        %1945 = vst [vmem:[#allocation2 + $0x308] sm:$0xff] %v1817
        %1946 = vst [vmem:[#allocation2 + $0x310] sm:$0xff] %v1818
        %1947 = vst [vmem:[#allocation2 + $0x318] sm:$0xff] %v1819
        %1948 = vst [vmem:[#allocation2 + $0x320] sm:$0xff] %v1820
        %1949 = vst [vmem:[#allocation2 + $0x328] sm:$0xff] %v1821
        %1950 = vst [vmem:[#allocation2 + $0x330] sm:$0xff] %v1822
        %1951 = vst [vmem:[#allocation2 + $0x338] sm:$0xff] %v1823
        %1952 = vst [vmem:[#allocation2 + $0x340] sm:$0xff] %v1824
        %1953 = vst [vmem:[#allocation2 + $0x348] sm:$0xff] %v1825
        %1954 = vst [vmem:[#allocation2 + $0x350] sm:$0xff] %v1826
        %1955 = vst [vmem:[#allocation2 + $0x358] sm:$0xff] %v1827
        %1956 = vst [vmem:[#allocation2 + $0x360] sm:$0xff] %v1828
        %1957 = vst [vmem:[#allocation2 + $0x368] sm:$0xff] %v1829
        %1958 = vst [vmem:[#allocation2 + $0x370] sm:$0xff] %v1830
        %1959 = vst [vmem:[#allocation2 + $0x378] sm:$0xff] %v1831
        %1960 = vst [vmem:[#allocation2 + $0x380] sm:$0xff] %v1832
        %1961 = vst [vmem:[#allocation2 + $0x388] sm:$0xff] %v1833
        %1962 = vst [vmem:[#allocation2 + $0x390] sm:$0xff] %v1834
        %1963 = vst [vmem:[#allocation2 + $0x398] sm:$0xff] %v1835
        %1964 = vst [vmem:[#allocation2 + $0x3a0] sm:$0xff] %v1836
        %1965 = vst [vmem:[#allocation2 + $0x3a8] sm:$0xff] %v1837
        %1966 = vst [vmem:[#allocation2 + $0x3b0] sm:$0xff] %v1838
        %1967 = vst [vmem:[#allocation2 + $0x3b8] sm:$0xff] %v1839
        %1968 = vst [vmem:[#allocation2 + $0x3c0] sm:$0xff] %v1840
        %1969 = vst [vmem:[#allocation2 + $0x3c8] sm:$0xff] %v1841
        %1970 = vst [vmem:[#allocation2 + $0x3d0] sm:$0xff] %v1842
        %1971 = vst [vmem:[#allocation2 + $0x3d8] sm:$0xff] %v1843
        %1972 = vst [vmem:[#allocation2 + $0x3e0] sm:$0xff] %v1844
        %1973 = vst [vmem:[#allocation2 + $0x3e8] sm:$0xff] %v1845
        %1974 = vst [vmem:[#allocation2 + $0x3f0] sm:$0xff] %v1846
        %1975 = vst [vmem:[#allocation2 + $0x3f8] sm:$0xff] %v1847
        %p1976 = scmp.eq.s32.totalorder %s26, 3
        // Predicated region
        $region45: #{fused_linear_logsumexp.1} parent=31 // pred_check
          %p1977 = pneg %p1976
        $region46: #{fused_linear_logsumexp.1} parent=31 // pred_check_branch
          %1979 = sbr.rel (%p1977) target = $region48
        $region47: #{fused_linear_logsumexp.1} parent=31 // pred_region
          %v1980 = vld [vmem:[#allocation2] sm:$0xff]
          %v1981 = vld [vmem:[#allocation2 + $0x8] sm:$0xff]
          %v1982 = vld [vmem:[#allocation2 + $0x10] sm:$0xff]
          %v1983 = vld [vmem:[#allocation2 + $0x18] sm:$0xff]
          %v1984 = vld [vmem:[#allocation2 + $0x20] sm:$0xff]
          %v1985 = vld [vmem:[#allocation2 + $0x28] sm:$0xff]
          %v1986 = vld [vmem:[#allocation2 + $0x30] sm:$0xff]
          %v1987 = vld [vmem:[#allocation2 + $0x38] sm:$0xff]
          %v1988 = vld [vmem:[#allocation2 + $0x40] sm:$0xff]
          %v1989 = vld [vmem:[#allocation2 + $0x48] sm:$0xff]
          %v1990 = vld [vmem:[#allocation2 + $0x50] sm:$0xff]
          %v1991 = vld [vmem:[#allocation2 + $0x58] sm:$0xff]
          %v1992 = vld [vmem:[#allocation2 + $0x60] sm:$0xff]
          %v1993 = vld [vmem:[#allocation2 + $0x68] sm:$0xff]
          %v1994 = vld [vmem:[#allocation2 + $0x70] sm:$0xff]
          %v1995 = vld [vmem:[#allocation2 + $0x78] sm:$0xff]
          %v1996 = vld [vmem:[#allocation2 + $0x80] sm:$0xff]
          %v1997 = vld [vmem:[#allocation2 + $0x88] sm:$0xff]
          %v1998 = vld [vmem:[#allocation2 + $0x90] sm:$0xff]
          %v1999 = vld [vmem:[#allocation2 + $0x98] sm:$0xff]
          %v2000 = vld [vmem:[#allocation2 + $0xa0] sm:$0xff]
          %v2001 = vld [vmem:[#allocation2 + $0xa8] sm:$0xff]
          %v2002 = vld [vmem:[#allocation2 + $0xb0] sm:$0xff]
          %v2003 = vld [vmem:[#allocation2 + $0xb8] sm:$0xff]
          %v2004 = vld [vmem:[#allocation2 + $0xc0] sm:$0xff]
          %v2005 = vld [vmem:[#allocation2 + $0xc8] sm:$0xff]
          %v2006 = vld [vmem:[#allocation2 + $0xd0] sm:$0xff]
          %v2007 = vld [vmem:[#allocation2 + $0xd8] sm:$0xff]
          %v2008 = vld [vmem:[#allocation2 + $0xe0] sm:$0xff]
          %v2009 = vld [vmem:[#allocation2 + $0xe8] sm:$0xff]
          %v2010 = vld [vmem:[#allocation2 + $0xf0] sm:$0xff]
          %v2011 = vld [vmem:[#allocation2 + $0xf8] sm:$0xff]
          %v2012 = vmax.f32 %v1980, %v1984
          %v2013 = vmax.f32 %v1982, %v1986
          %v2014 = vmax.f32 %v2012, %v1988
          %v2015 = vmax.f32 %v2013, %v1990
          %v2016 = vmax.f32 %v2014, %v1992
          %v2017 = vmax.f32 %v2015, %v1994
          %v2018 = vmax.f32 %v2016, %v1996
          %v2019 = vmax.f32 %v2017, %v1998
          %v2020 = vmax.f32 %v2018, %v2000
          %v2021 = vmax.f32 %v2019, %v2002
          %v2022 = vmax.f32 %v2020, %v2004
          %v2023 = vmax.f32 %v2021, %v2006
          %v2024 = vmax.f32 %v2022, %v2008
          %v2025 = vmax.f32 %v2023, %v2010
          %v2026 = vmax.f32 %v2024, %v2025
          %v2027 = vrot.slane %v2026, 4
          %v2028 = vmax.f32 %v2026, %v2027
          %v2029 = vrot.slane %v2028, 2
          %v2030 = vmax.f32 %v2028, %v2029
          %v2031 = vrot.slane %v2030, 1
          %v2032 = vmax.f32 %v2030, %v2031
          %v2033 = vmax.f32 %v1981, %v1985
          %v2034 = vmax.f32 %v1983, %v1987
          %v2035 = vmax.f32 %v2033, %v1989
          %v2036 = vmax.f32 %v2034, %v1991
          %v2037 = vmax.f32 %v2035, %v1993
          %v2038 = vmax.f32 %v2036, %v1995
          %v2039 = vmax.f32 %v2037, %v1997
          %v2040 = vmax.f32 %v2038, %v1999
          %v2041 = vmax.f32 %v2039, %v2001
          %v2042 = vmax.f32 %v2040, %v2003
          %v2043 = vmax.f32 %v2041, %v2005
          %v2044 = vmax.f32 %v2042, %v2007
          %v2045 = vmax.f32 %v2043, %v2009
          %v2046 = vmax.f32 %v2044, %v2011
          %v2047 = vmax.f32 %v2045, %v2046
          %v2048 = vrot.slane %v2047, 4
          %v2049 = vmax.f32 %v2047, %v2048
          %v2050 = vrot.slane %v2049, 2
          %v2051 = vmax.f32 %v2049, %v2050
          %v2052 = vrot.slane %v2051, 1
          %v2053 = vmax.f32 %v2051, %v2052
          %v2054 = vld [vmem:[#allocation2 + $0x100] sm:$0xff]
          %v2055 = vld [vmem:[#allocation2 + $0x108] sm:$0xff]
          %v2056 = vld [vmem:[#allocation2 + $0x110] sm:$0xff]
          %v2057 = vld [vmem:[#allocation2 + $0x118] sm:$0xff]
          %v2058 = vld [vmem:[#allocation2 + $0x120] sm:$0xff]
          %v2059 = vld [vmem:[#allocation2 + $0x128] sm:$0xff]
          %v2060 = vld [vmem:[#allocation2 + $0x130] sm:$0xff]
          %v2061 = vld [vmem:[#allocation2 + $0x138] sm:$0xff]
          %v2062 = vld [vmem:[#allocation2 + $0x140] sm:$0xff]
          %v2063 = vld [vmem:[#allocation2 + $0x148] sm:$0xff]
          %v2064 = vld [vmem:[#allocation2 + $0x150] sm:$0xff]
          %v2065 = vld [vmem:[#allocation2 + $0x158] sm:$0xff]
          %v2066 = vld [vmem:[#allocation2 + $0x160] sm:$0xff]
          %v2067 = vld [vmem:[#allocation2 + $0x168] sm:$0xff]
          %v2068 = vld [vmem:[#allocation2 + $0x170] sm:$0xff]
          %v2069 = vld [vmem:[#allocation2 + $0x178] sm:$0xff]
          %v2070 = vld [vmem:[#allocation2 + $0x180] sm:$0xff]
          %v2071 = vld [vmem:[#allocation2 + $0x188] sm:$0xff]
          %v2072 = vld [vmem:[#allocation2 + $0x190] sm:$0xff]
          %v2073 = vld [vmem:[#allocation2 + $0x198] sm:$0xff]
          %v2074 = vld [vmem:[#allocation2 + $0x1a0] sm:$0xff]
          %v2075 = vld [vmem:[#allocation2 + $0x1a8] sm:$0xff]
          %v2076 = vld [vmem:[#allocation2 + $0x1b0] sm:$0xff]
          %v2077 = vld [vmem:[#allocation2 + $0x1b8] sm:$0xff]
          %v2078 = vld [vmem:[#allocation2 + $0x1c0] sm:$0xff]
          %v2079 = vld [vmem:[#allocation2 + $0x1c8] sm:$0xff]
          %v2080 = vld [vmem:[#allocation2 + $0x1d0] sm:$0xff]
          %v2081 = vld [vmem:[#allocation2 + $0x1d8] sm:$0xff]
          %v2082 = vld [vmem:[#allocation2 + $0x1e0] sm:$0xff]
          %v2083 = vld [vmem:[#allocation2 + $0x1e8] sm:$0xff]
          %v2084 = vld [vmem:[#allocation2 + $0x1f0] sm:$0xff]
          %v2085 = vld [vmem:[#allocation2 + $0x1f8] sm:$0xff]
          %v2086 = vmax.f32 %v2054, %v2058
          %v2087 = vmax.f32 %v2056, %v2060
          %v2088 = vmax.f32 %v2086, %v2062
          %v2089 = vmax.f32 %v2087, %v2064
          %v2090 = vmax.f32 %v2088, %v2066
          %v2091 = vmax.f32 %v2089, %v2068
          %v2092 = vmax.f32 %v2090, %v2070
          %v2093 = vmax.f32 %v2091, %v2072
          %v2094 = vmax.f32 %v2092, %v2074
          %v2095 = vmax.f32 %v2093, %v2076
          %v2096 = vmax.f32 %v2094, %v2078
          %v2097 = vmax.f32 %v2095, %v2080
          %v2098 = vmax.f32 %v2096, %v2082
          %v2099 = vmax.f32 %v2097, %v2084
          %v2100 = vmax.f32 %v2098, %v2099
          %v2101 = vrot.slane %v2100, 4
          %v2102 = vmax.f32 %v2100, %v2101
          %v2103 = vrot.slane %v2102, 2
          %v2104 = vmax.f32 %v2102, %v2103
          %v2105 = vrot.slane %v2104, 1
          %v2106 = vmax.f32 %v2104, %v2105
          %v2107 = vmax.f32 %v2055, %v2059
          %v2108 = vmax.f32 %v2057, %v2061
          %v2109 = vmax.f32 %v2107, %v2063
          %v2110 = vmax.f32 %v2108, %v2065
          %v2111 = vmax.f32 %v2109, %v2067
          %v2112 = vmax.f32 %v2110, %v2069
          %v2113 = vmax.f32 %v2111, %v2071
          %v2114 = vmax.f32 %v2112, %v2073
          %v2115 = vmax.f32 %v2113, %v2075
          %v2116 = vmax.f32 %v2114, %v2077
          %v2117 = vmax.f32 %v2115, %v2079
          %v2118 = vmax.f32 %v2116, %v2081
          %v2119 = vmax.f32 %v2117, %v2083
          %v2120 = vmax.f32 %v2118, %v2085
          %v2121 = vmax.f32 %v2119, %v2120
          %v2122 = vrot.slane %v2121, 4
          %v2123 = vmax.f32 %v2121, %v2122
          %v2124 = vrot.slane %v2123, 2
          %v2125 = vmax.f32 %v2123, %v2124
          %v2126 = vrot.slane %v2125, 1
          %v2127 = vmax.f32 %v2125, %v2126
          %v2128 = vmax.f32 %v2032, %v2106
          %v2129 = vmax.f32 %v2053, %v2127
          %v2130 = vld [vmem:[#allocation2 + $0x200] sm:$0xff]
          %v2131 = vld [vmem:[#allocation2 + $0x208] sm:$0xff]
          %v2132 = vld [vmem:[#allocation2 + $0x210] sm:$0xff]
          %v2133 = vld [vmem:[#allocation2 + $0x218] sm:$0xff]
          %v2134 = vld [vmem:[#allocation2 + $0x220] sm:$0xff]
          %v2135 = vld [vmem:[#allocation2 + $0x228] sm:$0xff]
          %v2136 = vld [vmem:[#allocation2 + $0x230] sm:$0xff]
          %v2137 = vld [vmem:[#allocation2 + $0x238] sm:$0xff]
          %v2138 = vld [vmem:[#allocation2 + $0x240] sm:$0xff]
          %v2139 = vld [vmem:[#allocation2 + $0x248] sm:$0xff]
          %v2140 = vld [vmem:[#allocation2 + $0x250] sm:$0xff]
          %v2141 = vld [vmem:[#allocation2 + $0x258] sm:$0xff]
          %v2142 = vld [vmem:[#allocation2 + $0x260] sm:$0xff]
          %v2143 = vld [vmem:[#allocation2 + $0x268] sm:$0xff]
          %v2144 = vld [vmem:[#allocation2 + $0x270] sm:$0xff]
          %v2145 = vld [vmem:[#allocation2 + $0x278] sm:$0xff]
          %v2146 = vld [vmem:[#allocation2 + $0x280] sm:$0xff]
          %v2147 = vld [vmem:[#allocation2 + $0x288] sm:$0xff]
          %v2148 = vld [vmem:[#allocation2 + $0x290] sm:$0xff]
          %v2149 = vld [vmem:[#allocation2 + $0x298] sm:$0xff]
          %v2150 = vld [vmem:[#allocation2 + $0x2a0] sm:$0xff]
          %v2151 = vld [vmem:[#allocation2 + $0x2a8] sm:$0xff]
          %v2152 = vld [vmem:[#allocation2 + $0x2b0] sm:$0xff]
          %v2153 = vld [vmem:[#allocation2 + $0x2b8] sm:$0xff]
          %v2154 = vld [vmem:[#allocation2 + $0x2c0] sm:$0xff]
          %v2155 = vld [vmem:[#allocation2 + $0x2c8] sm:$0xff]
          %v2156 = vld [vmem:[#allocation2 + $0x2d0] sm:$0xff]
          %v2157 = vld [vmem:[#allocation2 + $0x2d8] sm:$0xff]
          %v2158 = vld [vmem:[#allocation2 + $0x2e0] sm:$0xff]
          %v2159 = vld [vmem:[#allocation2 + $0x2e8] sm:$0xff]
          %v2160 = vld [vmem:[#allocation2 + $0x2f0] sm:$0xff]
          %v2161 = vld [vmem:[#allocation2 + $0x2f8] sm:$0xff]
          %v2162 = vmax.f32 %v2130, %v2134
          %v2163 = vmax.f32 %v2132, %v2136
          %v2164 = vmax.f32 %v2162, %v2138
          %v2165 = vmax.f32 %v2163, %v2140
          %v2166 = vmax.f32 %v2164, %v2142
          %v2167 = vmax.f32 %v2165, %v2144
          %v2168 = vmax.f32 %v2166, %v2146
          %v2169 = vmax.f32 %v2167, %v2148
          %v2170 = vmax.f32 %v2168, %v2150
          %v2171 = vmax.f32 %v2169, %v2152
          %v2172 = vmax.f32 %v2170, %v2154
          %v2173 = vmax.f32 %v2171, %v2156
          %v2174 = vmax.f32 %v2172, %v2158
          %v2175 = vmax.f32 %v2173, %v2160
          %v2176 = vmax.f32 %v2174, %v2175
          %v2177 = vrot.slane %v2176, 4
          %v2178 = vmax.f32 %v2176, %v2177
          %v2179 = vrot.slane %v2178, 2
          %v2180 = vmax.f32 %v2178, %v2179
          %v2181 = vrot.slane %v2180, 1
          %v2182 = vmax.f32 %v2180, %v2181
          %v2183 = vmax.f32 %v2131, %v2135
          %v2184 = vmax.f32 %v2133, %v2137
          %v2185 = vmax.f32 %v2183, %v2139
          %v2186 = vmax.f32 %v2184, %v2141
          %v2187 = vmax.f32 %v2185, %v2143
          %v2188 = vmax.f32 %v2186, %v2145
          %v2189 = vmax.f32 %v2187, %v2147
          %v2190 = vmax.f32 %v2188, %v2149
          %v2191 = vmax.f32 %v2189, %v2151
          %v2192 = vmax.f32 %v2190, %v2153
          %v2193 = vmax.f32 %v2191, %v2155
          %v2194 = vmax.f32 %v2192, %v2157
          %v2195 = vmax.f32 %v2193, %v2159
          %v2196 = vmax.f32 %v2194, %v2161
          %v2197 = vmax.f32 %v2195, %v2196
          %v2198 = vrot.slane %v2197, 4
          %v2199 = vmax.f32 %v2197, %v2198
          %v2200 = vrot.slane %v2199, 2
          %v2201 = vmax.f32 %v2199, %v2200
          %v2202 = vrot.slane %v2201, 1
          %v2203 = vmax.f32 %v2201, %v2202
          %v2204 = vmax.f32 %v2128, %v2182
          %v2205 = vmax.f32 %v2129, %v2203
          %v2206 = vld [vmem:[#allocation2 + $0x300] sm:$0xff]
          %v2207 = vld [vmem:[#allocation2 + $0x308] sm:$0xff]
          %v2208 = vld [vmem:[#allocation2 + $0x310] sm:$0xff]
          %v2209 = vld [vmem:[#allocation2 + $0x318] sm:$0xff]
          %v2210 = vld [vmem:[#allocation2 + $0x320] sm:$0xff]
          %v2211 = vld [vmem:[#allocation2 + $0x328] sm:$0xff]
          %v2212 = vld [vmem:[#allocation2 + $0x330] sm:$0xff]
          %v2213 = vld [vmem:[#allocation2 + $0x338] sm:$0xff]
          %v2214 = vld [vmem:[#allocation2 + $0x340] sm:$0xff]
          %v2215 = vld [vmem:[#allocation2 + $0x348] sm:$0xff]
          %v2216 = vld [vmem:[#allocation2 + $0x350] sm:$0xff]
          %v2217 = vld [vmem:[#allocation2 + $0x358] sm:$0xff]
          %v2218 = vld [vmem:[#allocation2 + $0x360] sm:$0xff]
          %v2219 = vld [vmem:[#allocation2 + $0x368] sm:$0xff]
          %v2220 = vld [vmem:[#allocation2 + $0x370] sm:$0xff]
          %v2221 = vld [vmem:[#allocation2 + $0x378] sm:$0xff]
          %v2222 = vld [vmem:[#allocation2 + $0x380] sm:$0xff]
          %v2223 = vld [vmem:[#allocation2 + $0x388] sm:$0xff]
          %v2224 = vld [vmem:[#allocation2 + $0x390] sm:$0xff]
          %v2225 = vld [vmem:[#allocation2 + $0x398] sm:$0xff]
          %v2226 = vld [vmem:[#allocation2 + $0x3a0] sm:$0xff]
          %v2227 = vld [vmem:[#allocation2 + $0x3a8] sm:$0xff]
          %v2228 = vld [vmem:[#allocation2 + $0x3b0] sm:$0xff]
          %v2229 = vld [vmem:[#allocation2 + $0x3b8] sm:$0xff]
          %v2230 = vld [vmem:[#allocation2 + $0x3c0] sm:$0xff]
          %v2231 = vld [vmem:[#allocation2 + $0x3c8] sm:$0xff]
          %v2232 = vld [vmem:[#allocation2 + $0x3d0] sm:$0xff]
          %v2233 = vld [vmem:[#allocation2 + $0x3d8] sm:$0xff]
          %v2234 = vld [vmem:[#allocation2 + $0x3e0] sm:$0xff]
          %v2235 = vld [vmem:[#allocation2 + $0x3e8] sm:$0xff]
          %v2236 = vld [vmem:[#allocation2 + $0x3f0] sm:$0xff]
          %v2237 = vld [vmem:[#allocation2 + $0x3f8] sm:$0xff]
          %v2238 = vmax.f32 %v2206, %v2210
          %v2239 = vmax.f32 %v2208, %v2212
          %v2240 = vmax.f32 %v2238, %v2214
          %v2241 = vmax.f32 %v2239, %v2216
          %v2242 = vmax.f32 %v2240, %v2218
          %v2243 = vmax.f32 %v2241, %v2220
          %v2244 = vmax.f32 %v2242, %v2222
          %v2245 = vmax.f32 %v2243, %v2224
          %v2246 = vmax.f32 %v2244, %v2226
          %v2247 = vmax.f32 %v2245, %v2228
          %v2248 = vmax.f32 %v2246, %v2230
          %v2249 = vmax.f32 %v2247, %v2232
          %v2250 = vmax.f32 %v2248, %v2234
          %v2251 = vmax.f32 %v2249, %v2236
          %v2252 = vmax.f32 %v2250, %v2251
          %v2253 = vrot.slane %v2252, 4
          %v2254 = vmax.f32 %v2252, %v2253
          %v2255 = vrot.slane %v2254, 2
          %v2256 = vmax.f32 %v2254, %v2255
          %v2257 = vrot.slane %v2256, 1
          %v2258 = vmax.f32 %v2256, %v2257
          %v2259 = vmax.f32 %v2207, %v2211
          %v2260 = vmax.f32 %v2209, %v2213
          %v2261 = vmax.f32 %v2259, %v2215
          %v2262 = vmax.f32 %v2260, %v2217
          %v2263 = vmax.f32 %v2261, %v2219
          %v2264 = vmax.f32 %v2262, %v2221
          %v2265 = vmax.f32 %v2263, %v2223
          %v2266 = vmax.f32 %v2264, %v2225
          %v2267 = vmax.f32 %v2265, %v2227
          %v2268 = vmax.f32 %v2266, %v2229
          %v2269 = vmax.f32 %v2267, %v2231
          %v2270 = vmax.f32 %v2268, %v2233
          %v2271 = vmax.f32 %v2269, %v2235
          %v2272 = vmax.f32 %v2270, %v2237
          %v2273 = vmax.f32 %v2271, %v2272
          %v2274 = vrot.slane %v2273, 4
          %v2275 = vmax.f32 %v2273, %v2274
          %v2276 = vrot.slane %v2275, 2
          %v2277 = vmax.f32 %v2275, %v2276
          %v2278 = vrot.slane %v2277, 1
          %v2279 = vmax.f32 %v2277, %v2278
          %v2280 = vmax.f32 %v2204, %v2258
          %v2281 = vmax.f32 %v2205, %v2279
          %v2282 = vsub.f32 %v1980, %v2280
          %v2283 = vsub.f32 %v1981, %v2281
          %v2284 = vsub.f32 %v1982, %v2280
          %v2285 = vsub.f32 %v1983, %v2281
          %v2286 = vsub.f32 %v1984, %v2280
          %v2287 = vsub.f32 %v1985, %v2281
          %v2288 = vsub.f32 %v1986, %v2280
          %v2289 = vsub.f32 %v1987, %v2281
          %v2290 = vsub.f32 %v1988, %v2280
          %v2291 = vsub.f32 %v1989, %v2281
          %v2292 = vsub.f32 %v1990, %v2280
          %v2293 = vsub.f32 %v1991, %v2281
          %v2294 = vsub.f32 %v1992, %v2280
          %v2295 = vsub.f32 %v1993, %v2281
          %v2296 = vsub.f32 %v1994, %v2280
          %v2297 = vsub.f32 %v1995, %v2281
          %v2298 = vsub.f32 %v1996, %v2280
          %v2299 = vsub.f32 %v1997, %v2281
          %v2300 = vsub.f32 %v1998, %v2280
          %v2301 = vsub.f32 %v1999, %v2281
          %v2302 = vsub.f32 %v2000, %v2280
          %v2303 = vsub.f32 %v2001, %v2281
          %v2304 = vsub.f32 %v2002, %v2280
          %v2305 = vsub.f32 %v2003, %v2281
          %v2306 = vsub.f32 %v2004, %v2280
          %v2307 = vsub.f32 %v2005, %v2281
          %v2308 = vsub.f32 %v2006, %v2280
          %v2309 = vsub.f32 %v2007, %v2281
          %v2310 = vsub.f32 %v2008, %v2280
          %v2311 = vsub.f32 %v2009, %v2281
          %v2312 = vsub.f32 %v2010, %v2280
          %v2313 = vsub.f32 %v2011, %v2281
          %v2314 = vmul.f32 %v2282, 1.442695
          %v2315 = vpow.pop %v2314
          %v2316 = vmul.f32 %v2283, 1.442695
          %v2317 = vpow.pop %v2316
          %v2318 = vmul.f32 %v2284, 1.442695
          %v2319 = vpow.pop %v2318
          %v2320 = vmul.f32 %v2285, 1.442695
          %v2321 = vpow.pop %v2320
          %v2322 = vmul.f32 %v2286, 1.442695
          %v2323 = vpow.pop %v2322
          %v2324 = vmul.f32 %v2287, 1.442695
          %v2325 = vpow.pop %v2324
          %v2326 = vmul.f32 %v2288, 1.442695
          %v2327 = vpow.pop %v2326
          %v2328 = vmul.f32 %v2289, 1.442695
          %v2329 = vpow.pop %v2328
          %v2330 = vmul.f32 %v2290, 1.442695
          %v2331 = vpow.pop %v2330
          %v2332 = vmul.f32 %v2291, 1.442695
          %v2333 = vpow.pop %v2332
          %v2334 = vmul.f32 %v2292, 1.442695
          %v2335 = vpow.pop %v2334
          %v2336 = vmul.f32 %v2293, 1.442695
          %v2337 = vpow.pop %v2336
          %v2338 = vmul.f32 %v2294, 1.442695
          %v2339 = vpow.pop %v2338
          %v2340 = vmul.f32 %v2295, 1.442695
          %v2341 = vpow.pop %v2340
          %v2342 = vmul.f32 %v2296, 1.442695
          %v2343 = vpow.pop %v2342
          %v2344 = vmul.f32 %v2297, 1.442695
          %v2345 = vpow.pop %v2344
          %v2346 = vmul.f32 %v2298, 1.442695
          %v2347 = vpow.pop %v2346
          %v2348 = vmul.f32 %v2299, 1.442695
          %v2349 = vpow.pop %v2348
          %v2350 = vmul.f32 %v2300, 1.442695
          %v2351 = vpow.pop %v2350
          %v2352 = vmul.f32 %v2301, 1.442695
          %v2353 = vpow.pop %v2352
          %v2354 = vmul.f32 %v2302, 1.442695
          %v2355 = vpow.pop %v2354
          %v2356 = vmul.f32 %v2303, 1.442695
          %v2357 = vpow.pop %v2356
          %v2358 = vmul.f32 %v2304, 1.442695
          %v2359 = vpow.pop %v2358
          %v2360 = vmul.f32 %v2305, 1.442695
          %v2361 = vpow.pop %v2360
          %v2362 = vmul.f32 %v2306, 1.442695
          %v2363 = vpow.pop %v2362
          %v2364 = vmul.f32 %v2307, 1.442695
          %v2365 = vpow.pop %v2364
          %v2366 = vmul.f32 %v2308, 1.442695
          %v2367 = vpow.pop %v2366
          %v2368 = vmul.f32 %v2309, 1.442695
          %v2369 = vpow.pop %v2368
          %v2370 = vmul.f32 %v2310, 1.442695
          %v2371 = vpow.pop %v2370
          %v2372 = vmul.f32 %v2311, 1.442695
          %v2373 = vpow.pop %v2372
          %v2374 = vmul.f32 %v2312, 1.442695
          %v2375 = vpow.pop %v2374
          %v2376 = vmul.f32 %v2313, 1.442695
          %v2377 = vpow.pop %v2376
          %v2378 = vadd.f32 %v2315, %v2319
          %v2379 = vadd.f32 %v2378, %v2323
          %v2380 = vadd.f32 %v2379, %v2327
          %v2381 = vadd.f32 %v2380, %v2331
          %v2382 = vadd.f32 %v2381, %v2335
          %v2383 = vadd.f32 %v2382, %v2339
          %v2384 = vadd.f32 %v2383, %v2343
          %v2385 = vadd.f32 %v2384, %v2347
          %v2386 = vadd.f32 %v2385, %v2351
          %v2387 = vadd.f32 %v2386, %v2355
          %v2388 = vadd.f32 %v2387, %v2359
          %v2389 = vadd.f32 %v2388, %v2363
          %v2390 = vadd.f32 %v2389, %v2367
          %v2391 = vadd.f32 %v2390, %v2371
          %v2392 = vadd.f32 %v2391, %v2375
          %v2393 = vrot.slane %v2392, 4
          %v2394 = vadd.f32 %v2392, %v2393
          %v2395 = vrot.slane %v2394, 2
          %v2396 = vadd.f32 %v2394, %v2395
          %v2397 = vrot.slane %v2396, 1
          %v2398 = vadd.f32 %v2396, %v2397
          %v2399 = vadd.f32 %v2317, %v2321
          %v2400 = vadd.f32 %v2399, %v2325
          %v2401 = vadd.f32 %v2400, %v2329
          %v2402 = vadd.f32 %v2401, %v2333
          %v2403 = vadd.f32 %v2402, %v2337
          %v2404 = vadd.f32 %v2403, %v2341
          %v2405 = vadd.f32 %v2404, %v2345
          %v2406 = vadd.f32 %v2405, %v2349
          %v2407 = vadd.f32 %v2406, %v2353
          %v2408 = vadd.f32 %v2407, %v2357
          %v2409 = vadd.f32 %v2408, %v2361
          %v2410 = vadd.f32 %v2409, %v2365
          %v2411 = vadd.f32 %v2410, %v2369
          %v2412 = vadd.f32 %v2411, %v2373
          %v2413 = vadd.f32 %v2412, %v2377
          %v2414 = vrot.slane %v2413, 4
          %v2415 = vadd.f32 %v2413, %v2414
          %v2416 = vrot.slane %v2415, 2
          %v2417 = vadd.f32 %v2415, %v2416
          %v2418 = vrot.slane %v2417, 1
          %v2419 = vadd.f32 %v2417, %v2418
          %v2420 = vadd.f32 %v2398, 0.0
          %v2421 = vadd.f32 %v2419, 0.0
          %v2422 = vsub.f32 %v2054, %v2280
          %v2423 = vsub.f32 %v2055, %v2281
          %v2424 = vsub.f32 %v2056, %v2280
          %v2425 = vsub.f32 %v2057, %v2281
          %v2426 = vsub.f32 %v2058, %v2280
          %v2427 = vsub.f32 %v2059, %v2281
          %v2428 = vsub.f32 %v2060, %v2280
          %v2429 = vsub.f32 %v2061, %v2281
          %v2430 = vsub.f32 %v2062, %v2280
          %v2431 = vsub.f32 %v2063, %v2281
          %v2432 = vsub.f32 %v2064, %v2280
          %v2433 = vsub.f32 %v2065, %v2281
          %v2434 = vsub.f32 %v2066, %v2280
          %v2435 = vsub.f32 %v2067, %v2281
          %v2436 = vsub.f32 %v2068, %v2280
          %v2437 = vsub.f32 %v2069, %v2281
          %v2438 = vsub.f32 %v2070, %v2280
          %v2439 = vsub.f32 %v2071, %v2281
          %v2440 = vsub.f32 %v2072, %v2280
          %v2441 = vsub.f32 %v2073, %v2281
          %v2442 = vsub.f32 %v2074, %v2280
          %v2443 = vsub.f32 %v2075, %v2281
          %v2444 = vsub.f32 %v2076, %v2280
          %v2445 = vsub.f32 %v2077, %v2281
          %v2446 = vsub.f32 %v2078, %v2280
          %v2447 = vsub.f32 %v2079, %v2281
          %v2448 = vsub.f32 %v2080, %v2280
          %v2449 = vsub.f32 %v2081, %v2281
          %v2450 = vsub.f32 %v2082, %v2280
          %v2451 = vsub.f32 %v2083, %v2281
          %v2452 = vsub.f32 %v2084, %v2280
          %v2453 = vsub.f32 %v2085, %v2281
          %v2454 = vmul.f32 %v2422, 1.442695
          %v2455 = vpow.pop %v2454
          %v2456 = vmul.f32 %v2423, 1.442695
          %v2457 = vpow.pop %v2456
          %v2458 = vmul.f32 %v2424, 1.442695
          %v2459 = vpow.pop %v2458
          %v2460 = vmul.f32 %v2425, 1.442695
          %v2461 = vpow.pop %v2460
          %v2462 = vmul.f32 %v2426, 1.442695
          %v2463 = vpow.pop %v2462
          %v2464 = vmul.f32 %v2427, 1.442695
          %v2465 = vpow.pop %v2464
          %v2466 = vmul.f32 %v2428, 1.442695
          %v2467 = vpow.pop %v2466
          %v2468 = vmul.f32 %v2429, 1.442695
          %v2469 = vpow.pop %v2468
          %v2470 = vmul.f32 %v2430, 1.442695
          %v2471 = vpow.pop %v2470
          %v2472 = vmul.f32 %v2431, 1.442695
          %v2473 = vpow.pop %v2472
          %v2474 = vmul.f32 %v2432, 1.442695
          %v2475 = vpow.pop %v2474
          %v2476 = vmul.f32 %v2433, 1.442695
          %v2477 = vpow.pop %v2476
          %v2478 = vmul.f32 %v2434, 1.442695
          %v2479 = vpow.pop %v2478
          %v2480 = vmul.f32 %v2435, 1.442695
          %v2481 = vpow.pop %v2480
          %v2482 = vmul.f32 %v2436, 1.442695
          %v2483 = vpow.pop %v2482
          %v2484 = vmul.f32 %v2437, 1.442695
          %v2485 = vpow.pop %v2484
          %v2486 = vmul.f32 %v2438, 1.442695
          %v2487 = vpow.pop %v2486
          %v2488 = vmul.f32 %v2439, 1.442695
          %v2489 = vpow.pop %v2488
          %v2490 = vmul.f32 %v2440, 1.442695
          %v2491 = vpow.pop %v2490
          %v2492 = vmul.f32 %v2441, 1.442695
          %v2493 = vpow.pop %v2492
          %v2494 = vmul.f32 %v2442, 1.442695
          %v2495 = vpow.pop %v2494
          %v2496 = vmul.f32 %v2443, 1.442695
          %v2497 = vpow.pop %v2496
          %v2498 = vmul.f32 %v2444, 1.442695
          %v2499 = vpow.pop %v2498
          %v2500 = vmul.f32 %v2445, 1.442695
          %v2501 = vpow.pop %v2500
          %v2502 = vmul.f32 %v2446, 1.442695
          %v2503 = vpow.pop %v2502
          %v2504 = vmul.f32 %v2447, 1.442695
          %v2505 = vpow.pop %v2504
          %v2506 = vmul.f32 %v2448, 1.442695
          %v2507 = vpow.pop %v2506
          %v2508 = vmul.f32 %v2449, 1.442695
          %v2509 = vpow.pop %v2508
          %v2510 = vmul.f32 %v2450, 1.442695
          %v2511 = vpow.pop %v2510
          %v2512 = vmul.f32 %v2451, 1.442695
          %v2513 = vpow.pop %v2512
          %v2514 = vmul.f32 %v2452, 1.442695
          %v2515 = vpow.pop %v2514
          %v2516 = vmul.f32 %v2453, 1.442695
          %v2517 = vpow.pop %v2516
          %v2518 = vadd.f32 %v2455, %v2459
          %v2519 = vadd.f32 %v2518, %v2463
          %v2520 = vadd.f32 %v2519, %v2467
          %v2521 = vadd.f32 %v2520, %v2471
          %v2522 = vadd.f32 %v2521, %v2475
          %v2523 = vadd.f32 %v2522, %v2479
          %v2524 = vadd.f32 %v2523, %v2483
          %v2525 = vadd.f32 %v2524, %v2487
          %v2526 = vadd.f32 %v2525, %v2491
          %v2527 = vadd.f32 %v2526, %v2495
          %v2528 = vadd.f32 %v2527, %v2499
          %v2529 = vadd.f32 %v2528, %v2503
          %v2530 = vadd.f32 %v2529, %v2507
          %v2531 = vadd.f32 %v2530, %v2511
          %v2532 = vadd.f32 %v2531, %v2515
          %v2533 = vrot.slane %v2532, 4
          %v2534 = vadd.f32 %v2532, %v2533
          %v2535 = vrot.slane %v2534, 2
          %v2536 = vadd.f32 %v2534, %v2535
          %v2537 = vrot.slane %v2536, 1
          %v2538 = vadd.f32 %v2536, %v2537
          %v2539 = vadd.f32 %v2457, %v2461
          %v2540 = vadd.f32 %v2539, %v2465
          %v2541 = vadd.f32 %v2540, %v2469
          %v2542 = vadd.f32 %v2541, %v2473
          %v2543 = vadd.f32 %v2542, %v2477
          %v2544 = vadd.f32 %v2543, %v2481
          %v2545 = vadd.f32 %v2544, %v2485
          %v2546 = vadd.f32 %v2545, %v2489
          %v2547 = vadd.f32 %v2546, %v2493
          %v2548 = vadd.f32 %v2547, %v2497
          %v2549 = vadd.f32 %v2548, %v2501
          %v2550 = vadd.f32 %v2549, %v2505
          %v2551 = vadd.f32 %v2550, %v2509
          %v2552 = vadd.f32 %v2551, %v2513
          %v2553 = vadd.f32 %v2552, %v2517
          %v2554 = vrot.slane %v2553, 4
          %v2555 = vadd.f32 %v2553, %v2554
          %v2556 = vrot.slane %v2555, 2
          %v2557 = vadd.f32 %v2555, %v2556
          %v2558 = vrot.slane %v2557, 1
          %v2559 = vadd.f32 %v2557, %v2558
          %v2560 = vadd.f32 %v2420, %v2538
          %v2561 = vadd.f32 %v2421, %v2559
          %v2562 = vsub.f32 %v2130, %v2280
          %v2563 = vsub.f32 %v2131, %v2281
          %v2564 = vsub.f32 %v2132, %v2280
          %v2565 = vsub.f32 %v2133, %v2281
          %v2566 = vsub.f32 %v2134, %v2280
          %v2567 = vsub.f32 %v2135, %v2281
          %v2568 = vsub.f32 %v2136, %v2280
          %v2569 = vsub.f32 %v2137, %v2281
          %v2570 = vsub.f32 %v2138, %v2280
          %v2571 = vsub.f32 %v2139, %v2281
          %v2572 = vsub.f32 %v2140, %v2280
          %v2573 = vsub.f32 %v2141, %v2281
          %v2574 = vsub.f32 %v2142, %v2280
          %v2575 = vsub.f32 %v2143, %v2281
          %v2576 = vsub.f32 %v2144, %v2280
          %v2577 = vsub.f32 %v2145, %v2281
          %v2578 = vsub.f32 %v2146, %v2280
          %v2579 = vsub.f32 %v2147, %v2281
          %v2580 = vsub.f32 %v2148, %v2280
          %v2581 = vsub.f32 %v2149, %v2281
          %v2582 = vsub.f32 %v2150, %v2280
          %v2583 = vsub.f32 %v2151, %v2281
          %v2584 = vsub.f32 %v2152, %v2280
          %v2585 = vsub.f32 %v2153, %v2281
          %v2586 = vsub.f32 %v2154, %v2280
          %v2587 = vsub.f32 %v2155, %v2281
          %v2588 = vsub.f32 %v2156, %v2280
          %v2589 = vsub.f32 %v2157, %v2281
          %v2590 = vsub.f32 %v2158, %v2280
          %v2591 = vsub.f32 %v2159, %v2281
          %v2592 = vsub.f32 %v2160, %v2280
          %v2593 = vsub.f32 %v2161, %v2281
          %v2594 = vmul.f32 %v2562, 1.442695
          %v2595 = vpow.pop %v2594
          %v2596 = vmul.f32 %v2563, 1.442695
          %v2597 = vpow.pop %v2596
          %v2598 = vmul.f32 %v2564, 1.442695
          %v2599 = vpow.pop %v2598
          %v2600 = vmul.f32 %v2565, 1.442695
          %v2601 = vpow.pop %v2600
          %v2602 = vmul.f32 %v2566, 1.442695
          %v2603 = vpow.pop %v2602
          %v2604 = vmul.f32 %v2567, 1.442695
          %v2605 = vpow.pop %v2604
          %v2606 = vmul.f32 %v2568, 1.442695
          %v2607 = vpow.pop %v2606
          %v2608 = vmul.f32 %v2569, 1.442695
          %v2609 = vpow.pop %v2608
          %v2610 = vmul.f32 %v2570, 1.442695
          %v2611 = vpow.pop %v2610
          %v2612 = vmul.f32 %v2571, 1.442695
          %v2613 = vpow.pop %v2612
          %v2614 = vmul.f32 %v2572, 1.442695
          %v2615 = vpow.pop %v2614
          %v2616 = vmul.f32 %v2573, 1.442695
          %v2617 = vpow.pop %v2616
          %v2618 = vmul.f32 %v2574, 1.442695
          %v2619 = vpow.pop %v2618
          %v2620 = vmul.f32 %v2575, 1.442695
          %v2621 = vpow.pop %v2620
          %v2622 = vmul.f32 %v2576, 1.442695
          %v2623 = vpow.pop %v2622
          %v2624 = vmul.f32 %v2577, 1.442695
          %v2625 = vpow.pop %v2624
          %v2626 = vmul.f32 %v2578, 1.442695
          %v2627 = vpow.pop %v2626
          %v2628 = vmul.f32 %v2579, 1.442695
          %v2629 = vpow.pop %v2628
          %v2630 = vmul.f32 %v2580, 1.442695
          %v2631 = vpow.pop %v2630
          %v2632 = vmul.f32 %v2581, 1.442695
          %v2633 = vpow.pop %v2632
          %v2634 = vmul.f32 %v2582, 1.442695
          %v2635 = vpow.pop %v2634
          %v2636 = vmul.f32 %v2583, 1.442695
          %v2637 = vpow.pop %v2636
          %v2638 = vmul.f32 %v2584, 1.442695
          %v2639 = vpow.pop %v2638
          %v2640 = vmul.f32 %v2585, 1.442695
          %v2641 = vpow.pop %v2640
          %v2642 = vmul.f32 %v2586, 1.442695
          %v2643 = vpow.pop %v2642
          %v2644 = vmul.f32 %v2587, 1.442695
          %v2645 = vpow.pop %v2644
          %v2646 = vmul.f32 %v2588, 1.442695
          %v2647 = vpow.pop %v2646
          %v2648 = vmul.f32 %v2589, 1.442695
          %v2649 = vpow.pop %v2648
          %v2650 = vmul.f32 %v2590, 1.442695
          %v2651 = vpow.pop %v2650
          %v2652 = vmul.f32 %v2591, 1.442695
          %v2653 = vpow.pop %v2652
          %v2654 = vmul.f32 %v2592, 1.442695
          %v2655 = vpow.pop %v2654
          %v2656 = vmul.f32 %v2593, 1.442695
          %v2657 = vpow.pop %v2656
          %v2658 = vadd.f32 %v2595, %v2599
          %v2659 = vadd.f32 %v2658, %v2603
          %v2660 = vadd.f32 %v2659, %v2607
          %v2661 = vadd.f32 %v2660, %v2611
          %v2662 = vadd.f32 %v2661, %v2615
          %v2663 = vadd.f32 %v2662, %v2619
          %v2664 = vadd.f32 %v2663, %v2623
          %v2665 = vadd.f32 %v2664, %v2627
          %v2666 = vadd.f32 %v2665, %v2631
          %v2667 = vadd.f32 %v2666, %v2635
          %v2668 = vadd.f32 %v2667, %v2639
          %v2669 = vadd.f32 %v2668, %v2643
          %v2670 = vadd.f32 %v2669, %v2647
          %v2671 = vadd.f32 %v2670, %v2651
          %v2672 = vadd.f32 %v2671, %v2655
          %v2673 = vrot.slane %v2672, 4
          %v2674 = vadd.f32 %v2672, %v2673
          %v2675 = vrot.slane %v2674, 2
          %v2676 = vadd.f32 %v2674, %v2675
          %v2677 = vrot.slane %v2676, 1
          %v2678 = vadd.f32 %v2676, %v2677
          %v2679 = vadd.f32 %v2597, %v2601
          %v2680 = vadd.f32 %v2679, %v2605
          %v2681 = vadd.f32 %v2680, %v2609
          %v2682 = vadd.f32 %v2681, %v2613
          %v2683 = vadd.f32 %v2682, %v2617
          %v2684 = vadd.f32 %v2683, %v2621
          %v2685 = vadd.f32 %v2684, %v2625
          %v2686 = vadd.f32 %v2685, %v2629
          %v2687 = vadd.f32 %v2686, %v2633
          %v2688 = vadd.f32 %v2687, %v2637
          %v2689 = vadd.f32 %v2688, %v2641
          %v2690 = vadd.f32 %v2689, %v2645
          %v2691 = vadd.f32 %v2690, %v2649
          %v2692 = vadd.f32 %v2691, %v2653
          %v2693 = vadd.f32 %v2692, %v2657
          %v2694 = vrot.slane %v2693, 4
          %v2695 = vadd.f32 %v2693, %v2694
          %v2696 = vrot.slane %v2695, 2
          %v2697 = vadd.f32 %v2695, %v2696
          %v2698 = vrot.slane %v2697, 1
          %v2699 = vadd.f32 %v2697, %v2698
          %v2700 = vadd.f32 %v2560, %v2678
          %v2701 = vadd.f32 %v2561, %v2699
          %v2702 = vsub.f32 %v2206, %v2280
          %v2703 = vsub.f32 %v2207, %v2281
          %v2704 = vsub.f32 %v2208, %v2280
          %v2705 = vsub.f32 %v2209, %v2281
          %v2706 = vsub.f32 %v2210, %v2280
          %v2707 = vsub.f32 %v2211, %v2281
          %v2708 = vsub.f32 %v2212, %v2280
          %v2709 = vsub.f32 %v2213, %v2281
          %v2710 = vsub.f32 %v2214, %v2280
          %v2711 = vsub.f32 %v2215, %v2281
          %v2712 = vsub.f32 %v2216, %v2280
          %v2713 = vsub.f32 %v2217, %v2281
          %v2714 = vsub.f32 %v2218, %v2280
          %v2715 = vsub.f32 %v2219, %v2281
          %v2716 = vsub.f32 %v2220, %v2280
          %v2717 = vsub.f32 %v2221, %v2281
          %v2718 = vsub.f32 %v2222, %v2280
          %v2719 = vsub.f32 %v2223, %v2281
          %v2720 = vsub.f32 %v2224, %v2280
          %v2721 = vsub.f32 %v2225, %v2281
          %v2722 = vsub.f32 %v2226, %v2280
          %v2723 = vsub.f32 %v2227, %v2281
          %v2724 = vsub.f32 %v2228, %v2280
          %v2725 = vsub.f32 %v2229, %v2281
          %v2726 = vsub.f32 %v2230, %v2280
          %v2727 = vsub.f32 %v2231, %v2281
          %v2728 = vsub.f32 %v2232, %v2280
          %v2729 = vsub.f32 %v2233, %v2281
          %v2730 = vsub.f32 %v2234, %v2280
          %v2731 = vsub.f32 %v2235, %v2281
          %v2732 = vsub.f32 %v2236, %v2280
          %v2733 = vsub.f32 %v2237, %v2281
          %v2734 = vmul.f32 %v2702, 1.442695
          %v2735 = vpow.pop %v2734
          %v2736 = vmul.f32 %v2703, 1.442695
          %v2737 = vpow.pop %v2736
          %v2738 = vmul.f32 %v2704, 1.442695
          %v2739 = vpow.pop %v2738
          %v2740 = vmul.f32 %v2705, 1.442695
          %v2741 = vpow.pop %v2740
          %v2742 = vmul.f32 %v2706, 1.442695
          %v2743 = vpow.pop %v2742
          %v2744 = vmul.f32 %v2707, 1.442695
          %v2745 = vpow.pop %v2744
          %v2746 = vmul.f32 %v2708, 1.442695
          %v2747 = vpow.pop %v2746
          %v2748 = vmul.f32 %v2709, 1.442695
          %v2749 = vpow.pop %v2748
          %v2750 = vmul.f32 %v2710, 1.442695
          %v2751 = vpow.pop %v2750
          %v2752 = vmul.f32 %v2711, 1.442695
          %v2753 = vpow.pop %v2752
          %v2754 = vmul.f32 %v2712, 1.442695
          %v2755 = vpow.pop %v2754
          %v2756 = vmul.f32 %v2713, 1.442695
          %v2757 = vpow.pop %v2756
          %v2758 = vmul.f32 %v2714, 1.442695
          %v2759 = vpow.pop %v2758
          %v2760 = vmul.f32 %v2715, 1.442695
          %v2761 = vpow.pop %v2760
          %v2762 = vmul.f32 %v2716, 1.442695
          %v2763 = vpow.pop %v2762
          %v2764 = vmul.f32 %v2717, 1.442695
          %v2765 = vpow.pop %v2764
          %v2766 = vmul.f32 %v2718, 1.442695
          %v2767 = vpow.pop %v2766
          %v2768 = vmul.f32 %v2719, 1.442695
          %v2769 = vpow.pop %v2768
          %v2770 = vmul.f32 %v2720, 1.442695
          %v2771 = vpow.pop %v2770
          %v2772 = vmul.f32 %v2721, 1.442695
          %v2773 = vpow.pop %v2772
          %v2774 = vmul.f32 %v2722, 1.442695
          %v2775 = vpow.pop %v2774
          %v2776 = vmul.f32 %v2723, 1.442695
          %v2777 = vpow.pop %v2776
          %v2778 = vmul.f32 %v2724, 1.442695
          %v2779 = vpow.pop %v2778
          %v2780 = vmul.f32 %v2725, 1.442695
          %v2781 = vpow.pop %v2780
          %v2782 = vmul.f32 %v2726, 1.442695
          %v2783 = vpow.pop %v2782
          %v2784 = vmul.f32 %v2727, 1.442695
          %v2785 = vpow.pop %v2784
          %v2786 = vmul.f32 %v2728, 1.442695
          %v2787 = vpow.pop %v2786
          %v2788 = vmul.f32 %v2729, 1.442695
          %v2789 = vpow.pop %v2788
          %v2790 = vmul.f32 %v2730, 1.442695
          %v2791 = vpow.pop %v2790
          %v2792 = vmul.f32 %v2731, 1.442695
          %v2793 = vpow.pop %v2792
          %v2794 = vmul.f32 %v2732, 1.442695
          %v2795 = vpow.pop %v2794
          %v2796 = vmul.f32 %v2733, 1.442695
          %v2797 = vpow.pop %v2796
          %v2798 = vadd.f32 %v2735, %v2739
          %v2799 = vadd.f32 %v2798, %v2743
          %v2800 = vadd.f32 %v2799, %v2747
          %v2801 = vadd.f32 %v2800, %v2751
          %v2802 = vadd.f32 %v2801, %v2755
          %v2803 = vadd.f32 %v2802, %v2759
          %v2804 = vadd.f32 %v2803, %v2763
          %v2805 = vadd.f32 %v2804, %v2767
          %v2806 = vadd.f32 %v2805, %v2771
          %v2807 = vadd.f32 %v2806, %v2775
          %v2808 = vadd.f32 %v2807, %v2779
          %v2809 = vadd.f32 %v2808, %v2783
          %v2810 = vadd.f32 %v2809, %v2787
          %v2811 = vadd.f32 %v2810, %v2791
          %v2812 = vadd.f32 %v2811, %v2795
          %v2813 = vrot.slane %v2812, 4
          %v2814 = vadd.f32 %v2812, %v2813
          %v2815 = vrot.slane %v2814, 2
          %v2816 = vadd.f32 %v2814, %v2815
          %v2817 = vrot.slane %v2816, 1
          %v2818 = vadd.f32 %v2816, %v2817
          %v2819 = vadd.f32 %v2737, %v2741
          %v2820 = vadd.f32 %v2819, %v2745
          %v2821 = vadd.f32 %v2820, %v2749
          %v2822 = vadd.f32 %v2821, %v2753
          %v2823 = vadd.f32 %v2822, %v2757
          %v2824 = vadd.f32 %v2823, %v2761
          %v2825 = vadd.f32 %v2824, %v2765
          %v2826 = vadd.f32 %v2825, %v2769
          %v2827 = vadd.f32 %v2826, %v2773
          %v2828 = vadd.f32 %v2827, %v2777
          %v2829 = vadd.f32 %v2828, %v2781
          %v2830 = vadd.f32 %v2829, %v2785
          %v2831 = vadd.f32 %v2830, %v2789
          %v2832 = vadd.f32 %v2831, %v2793
          %v2833 = vadd.f32 %v2832, %v2797
          %v2834 = vrot.slane %v2833, 4
          %v2835 = vadd.f32 %v2833, %v2834
          %v2836 = vrot.slane %v2835, 2
          %v2837 = vadd.f32 %v2835, %v2836
          %v2838 = vrot.slane %v2837, 1
          %v2839 = vadd.f32 %v2837, %v2838
          %v2840 = vadd.f32 %v2700, %v2818
          %v2841 = vadd.f32 %v2701, %v2839
          %v2842 = vlog2.pop %v2840
          %v2843 = vmul.f32 %v2842, 0.6931472
          %v2844 = vlog2.pop %v2841
          %v2845 = vmul.f32 %v2844, 0.6931472
          %v2846 = vadd.f32 %v2280, %v2843
          %v2847 = vadd.f32 %v2281, %v2845
          %vm2848 = vcmp.ge.f32.partialorder %v2846, 0.0
          %vm2849 = vcmp.ge.f32.partialorder %v2847, 0.0
          %v2850 = vmul.f32 %v2846, 0.0001
          %v2851 = vmul.f32 %v2847, 0.0001
          %v2852 = vsel %vm2848, %v2846, %v2850
          %v2853 = vsel %vm2849, %v2847, %v2851
          %v2854 = vmul.f32 %v2852, 0.5
          %v2855 = vmul.f32 %v2853, 0.5
          %v2856 = vmul.f32 %v2852, 0.70710677
          %v2857 = vmul.f32 %v2853, 0.70710677
          %v2858 = vand.u32 2147483647, %v2856
          %v2859 = vand.u32 2147483647, %v2857
          %v2860 = vmul.f32 %v2858, 0.3275911
          %v2861 = vmul.f32 %v2859, 0.3275911
          %v2862 = vadd.f32 %v2860, 1.0
          %v2863 = vadd.f32 %v2861, 1.0
          %v2864 = vrcp.pop %v2862
          %v2865 = vmul.f32 1.0, %v2864
          %v2866 = vrcp.pop %v2863
          %v2867 = vmul.f32 1.0, %v2866
          %v2868 = vmul.f32 %v2865, 1.0614054
          %v2869 = vmul.f32 %v2867, 1.0614054
          %v2870 = vadd.f32 %v2868, -1.4531521
          %v2871 = vadd.f32 %v2869, -1.4531521
          %v2872 = vmul.f32 %v2865, %v2870
          %v2873 = vmul.f32 %v2867, %v2871
          %v2874 = vadd.f32 %v2872, 1.4214138
          %v2875 = vadd.f32 %v2873, 1.4214138
          %v2876 = vmul.f32 %v2865, %v2874
          %v2877 = vmul.f32 %v2867, %v2875
          %v2878 = vadd.f32 %v2876, -0.28449672
          %v2879 = vadd.f32 %v2877, -0.28449672
          %v2880 = vmul.f32 %v2865, %v2878
          %v2881 = vmul.f32 %v2867, %v2879
          %v2882 = vadd.f32 %v2880, 0.2548296
          %v2883 = vadd.f32 %v2881, 0.2548296
          %v2884 = vmul.f32 %v2865, %v2882
          %v2885 = vmul.f32 %v2867, %v2883
          %v2886 = vsub.f32 0.0, %v2858
          %v2887 = vsub.f32 0.0, %v2859
          %v2888 = vmul.f32 %v2886, %v2858
          %v2889 = vmul.f32 %v2887, %v2859
          %v2890 = vmul.f32 %v2888, 1.442695
          %v2891 = vpow.pop %v2890
          %v2892 = vmul.f32 %v2889, 1.442695
          %v2893 = vpow.pop %v2892
          %v2894 = vmul.f32 %v2884, %v2891
          %v2895 = vmul.f32 %v2885, %v2893
          %v2896 = vsub.f32 1.0, %v2894
          %v2897 = vsub.f32 1.0, %v2895
          %vm2898 = vcmp.ge.f32.partialorder %v2856, 0.0
          %vm2899 = vcmp.ge.f32.partialorder %v2857, 0.0
          %v2900 = vsub.f32 0.0, %v2896
          %v2901 = vsub.f32 0.0, %v2897
          %v2902 = vsel %vm2898, %v2896, %v2900
          %v2903 = vsel %vm2899, %v2897, %v2901
          %v2904 = vadd.f32 %v2902, 1.0
          %v2905 = vadd.f32 %v2903, 1.0
          %v2906 = vmul.f32 %v2854, %v2904
          %v2907 = vmul.f32 %v2855, %v2905
          %v2908 = vmul.f32 %v2906, 0.5
          %v2909 = vmul.f32 %v2907, 0.5
          %v2910 = vmul.f32 %v2906, 0.70710677
          %v2911 = vmul.f32 %v2907, 0.70710677
          %v2912 = vand.u32 2147483647, %v2910
          %v2913 = vand.u32 2147483647, %v2911
          %v2914 = vmul.f32 %v2912, 0.3275911
          %v2915 = vmul.f32 %v2913, 0.3275911
          %v2916 = vadd.f32 %v2914, 1.0
          %v2917 = vadd.f32 %v2915, 1.0
          %v2918 = vrcp.pop %v2916
          %v2919 = vmul.f32 1.0, %v2918
          %v2920 = vrcp.pop %v2917
          %v2921 = vmul.f32 1.0, %v2920
          %v2922 = vmul.f32 %v2919, 1.0614054
          %v2923 = vmul.f32 %v2921, 1.0614054
          %v2924 = vadd.f32 %v2922, -1.4531521
          %v2925 = vadd.f32 %v2923, -1.4531521
          %v2926 = vmul.f32 %v2919, %v2924
          %v2927 = vmul.f32 %v2921, %v2925
          %v2928 = vadd.f32 %v2926, 1.4214138
          %v2929 = vadd.f32 %v2927, 1.4214138
          %v2930 = vmul.f32 %v2919, %v2928
          %v2931 = vmul.f32 %v2921, %v2929
          %v2932 = vadd.f32 %v2930, -0.28449672
          %v2933 = vadd.f32 %v2931, -0.28449672
          %v2934 = vmul.f32 %v2919, %v2932
          %v2935 = vmul.f32 %v2921, %v2933
          %v2936 = vadd.f32 %v2934, 0.2548296
          %v2937 = vadd.f32 %v2935, 0.2548296
          %v2938 = vmul.f32 %v2919, %v2936
          %v2939 = vmul.f32 %v2921, %v2937
          %v2940 = vsub.f32 0.0, %v2912
          %v2941 = vsub.f32 0.0, %v2913
          %v2942 = vmul.f32 %v2940, %v2912
          %v2943 = vmul.f32 %v2941, %v2913
          %v2944 = vmul.f32 %v2942, 1.442695
          %v2945 = vpow.pop %v2944
          %v2946 = vmul.f32 %v2943, 1.442695
          %v2947 = vpow.pop %v2946
          %v2948 = vmul.f32 %v2938, %v2945
          %v2949 = vmul.f32 %v2939, %v2947
          %v2950 = vsub.f32 1.0, %v2948
          %v2951 = vsub.f32 1.0, %v2949
          %vm2952 = vcmp.ge.f32.partialorder %v2910, 0.0
          %vm2953 = vcmp.ge.f32.partialorder %v2911, 0.0
          %v2954 = vsub.f32 0.0, %v2950
          %v2955 = vsub.f32 0.0, %v2951
          %v2956 = vsel %vm2952, %v2950, %v2954
          %v2957 = vsel %vm2953, %v2951, %v2955
          %v2958 = vadd.f32 %v2956, 1.0
          %v2959 = vadd.f32 %v2957, 1.0
          %v2960 = vmul.f32 %v2908, %v2958
          %v2961 = vmul.f32 %v2909, %v2959
          %v2964 = vcombine.low %v2960, %v2961
          %v2966 = vunpack.c.l.s4 1966171168
          %v2967 = vunpack.c.0.s8 %v2966
          %v2968 = vlaneseq
          %v2969 = vshrl.u32 %v2968, 7
          %v2970 = vsub.s32 %v2967, %v2969
          %v2971 = vrot.slane %v2964, %v2970
          %v2973 = vunpack.c.l.s4 1966171168
          %v2974 = vunpack.c.0.s8 %v2973
          %v2975 = vlaneseq
          %v2976 = vshrl.u32 %v2975, 7
          %v2977 = vsub.s32 %v2974, %v2976
          %v2978 = vrot.slane %v2971, %v2977
          %v2980 = vlaneseq
          %vm2981 = vcmp.ge.s32.totalorder %v2980, 0
          %vm2982 = vcmp.lt.s32.totalorder %v2980, 256
          %vm2983 = vmand %vm2981, %vm2982
          %2984 = vst.msk [vmem:[#allocation8] sm:$0x3] %vm2983, %v2978
        $region48: #{fused_linear_logsumexp.1} parent=31 // pred_fallthru
          _
        // Predicated region
        $region49: #{fused_linear_logsumexp.1} parent=31 // pred_check
          %p2985 = pneg %p126
        $region50: #{fused_linear_logsumexp.1} parent=31 // pred_check_branch
          %2987 = sbr.rel (%p2985) target = $region52
        $region51: #{fused_linear_logsumexp.1} parent=31 // pred_region
          %s2988 = smul.u32 2, %s25
          %s2990 = ssub.s32 32, 32
          %2991 = vsyncadd [#allocation5], %s2990
          %s2992 = smul.addr %s2988, 16
          %s2993 = scalar_lea.hbm %s3, %s2992
          %s2995 = sshll.u32 [#allocation8], 4
          %s2996 = int_to_ptr.vmem [resolvable:$true] %s2995
          %2998 = dma.vmem_to_hbm [thread:$0]  %s2996, 32, %s2993, [#allocation5]
        $region52: #{fused_linear_logsumexp.1} parent=31 // pred_fallthru
          _
        // Predicated region
        $region53: #{fused_linear_logsumexp.1} parent=31 // pred_check
          %p2999 = pneg %p126
        $region54: #{fused_linear_logsumexp.1} parent=31 // pred_check_branch
          %3001 = sbr.rel (%p2999) target = $region56
        $region55: #{fused_linear_logsumexp.1} parent=31 // pred_region
          %3002 = dma.done [#allocation5], 32
        $region56: #{fused_linear_logsumexp.1} parent=31 // pred_fallthru
          _
      $region32: #{fused_linear_logsumexp.1} parent=5 // pred_fallthru
        _
      %p3003 = scmp.le.s32.totalorder 2, %s16
      // Predicated region
      $region57: #{fused_linear_logsumexp.1} parent=5 // pred_check
        %p3004 = pneg %p3003
      $region58: #{fused_linear_logsumexp.1} parent=5 // pred_check_branch
        %3006 = sbr.rel (%p3004) target = $region60
      $region59: #{fused_linear_logsumexp.1} parent=5 // pred_region
        %s3007 = ssub.s32 %s16, 2
      $region60: #{fused_linear_logsumexp.1} parent=5 // pred_fallthru
        _
    $region6: #{fused_linear_logsumexp.1} parent=1 // loop_footer
      %s20 = sadd.s32 1, %s16
    $region7: #{fused_linear_logsumexp.1} parent=1 // loop_footer_branch
      %15 = sbr.rel target = $region3
    $region8: #{fused_linear_logsumexp.1} parent=1 // loop_exit
      _
    %3008 = vsyncpa [#allocation4], 1
    %s3009 = scalar_lea.sflag [#allocation4], 1
    %3010 = vsyncpa %s3009, 1
    %3011 = vsyncpa [#allocation7], 1
    %s3012 = scalar_lea.sflag [#allocation7], 1
    %3013 = vsyncpa %s3012, 1
    %3014 = vsyncpa [#allocation5], 1
    %s3015 = scalar_lea.sflag [#allocation5], 1
    %3016 = vsyncpa %s3015, 1

</llo_original>
